<compile_context>
chip_gen: v5e
topology: v5e:2x2
jax: 0.10.0
libtpu: 0.0.40
codegen_flags: <defaults>
</compile_context>

<pallas_src>
import functools
import math

import jax
import jax.numpy as jnp
import numpy as np
from jax.experimental import pallas as pl
from jax.experimental.pallas import tpu as pltpu


def _round_up(x, m):
    return ((x + m - 1) // m) * m


@functools.lru_cache(maxsize=None)
def _vmem_limit_bytes():
    """Generation-aware VMEM budget: ~75% of physical, capped at 100 MiB."""
    cap = 64 * 1024 * 1024  # conservative fallback (v7x per-TC VMEM)
    try:
        info = pltpu.get_tpu_info()
        cap = int(getattr(info, "vmem_capacity_bytes", cap))
    except Exception:
        pass
    return min(cap * 3 // 4, 100 * 1024 * 1024)


def _choose_row_tile(ho, wo, cout):
    """Largest divisor of `ho` whose f32 accumulator tile fits ~8 MiB."""
    budget = 8 * 1024 * 1024
    per_row = wo * max(cout, 128) * 4  # f32 acc, lanes padded to >=128
    max_th = max(1, budget // max(per_row, 1))
    th = 1
    for d in range(1, ho + 1):
        if ho % d == 0 and d <= max_th:
            th = d
    return th


# ----------------------------------------------------------------------------
# Pallas kernel: fused 3x3 conv (9 shifted matmuls) + bias + LeakyReLU
# ----------------------------------------------------------------------------
def _conv_tap_kernel(x_ref, w_ref, b_ref, o_ref, *, plan, th, wo, apply_lrelu):
    # x_ref: (P, Hph, Wph, Cin)  whole padded / phase-split image, bf16
    # w_ref: (9, Cin, Cout)      scale-folded weights, bf16 (resident)
    # b_ref: (1, Cout)           fused bias, f32 (resident)
    # o_ref: (1, th, wo, Cout)   output row-tile, bf16
    r = pl.program_id(1)
    row0 = r * th
    if th % 8 == 0:
        row0 = pl.multiple_of(row0, th)

    acc = None
    for t, (p, qy, qx) in enumerate(plan):
        slab = x_ref[p, pl.ds(row0 + qy, th), pl.ds(qx, wo), :]   # (th, wo, Cin)
        a = slab.reshape(th * wo, slab.shape[-1])
        c = jnp.dot(a, w_ref[t], preferred_element_type=jnp.float32)
        acc = c if acc is None else acc + c

    y = acc + b_ref[...]                      # epilogue stays f32
    if apply_lrelu:
        y = jnp.where(y > 0, y, 0.2 * y)
    o_ref[...] = y.reshape(1, th, wo, y.shape[-1]).astype(o_ref.dtype)


def conv3x3_affine_lrelu_pallas(x, w, scale, bias, stride, apply_lrelu):
    """x: (N,H,W,Cin) bf16; w: (9,Cin,Cout) f32 tap-major (tap=dy*3+dx)."""
    N, H, W, Cin = x.shape
    Cout = w.shape[-1]
    assert H % stride == 0 and W % stride == 0  # TODO(synk): odd spatial sizes

    # Pad Cin to a multiple of 8 (only matters for the 3-channel first layer).
    cin_p = _round_up(Cin, 8)
    xp = jnp.pad(x.astype(jnp.bfloat16),
                 ((0, 0), (1, 1), (1, 1), (0, cin_p - Cin)))
    if cin_p != Cin:
        w = jnp.pad(w, ((0, 0), (0, cin_p - Cin), (0, 0)))

    if stride == 1:
        Ho, Wo = H, W
        P, Hph, Wph = 1, H + 2, W + 2
        ph = xp.reshape(N * P, Hph, Wph, cin_p)
        plan = tuple((0, dy, dx) for dy in range(3) for dx in range(3))
    else:  # stride == 2: 4-phase space-to-depth -> stride-1 taps
        Ho, Wo = H // 2, W // 2
        P, Hph, Wph = 4, Ho + 1, Wo + 1
        phases = [xp[:, py::2, px::2, :] for py in (0, 1) for px in (0, 1)]
        ph = jnp.stack(phases, axis=1).reshape(N * P, Hph, Wph, cin_p)
        plan = tuple(((dy % 2) * 2 + (dx % 2), dy // 2, dx // 2)
                     for dy in range(3) for dx in range(3))

    # Fold eval-mode BN scale into the bf16 weights; keep bias in f32 epilogue.
    wf = (w * scale[None, None, :]).astype(jnp.bfloat16)     # (9, cin_p, Cout)
    bf = bias.reshape(1, Cout).astype(jnp.float32)

    TH = _choose_row_tile(Ho, Wo, Cout)
    grid = (N, Ho // TH)

    kernel = functools.partial(_conv_tap_kernel, plan=plan, th=TH, wo=Wo,
                               apply_lrelu=apply_lrelu)
    return pl.pallas_call(
        kernel,
        out_shape=jax.ShapeDtypeStruct((N, Ho, Wo, Cout), jnp.bfloat16),
        grid_spec=pltpu.PrefetchScalarGridSpec(
            num_scalar_prefetch=0,
            grid=grid,
            in_specs=[
                pl.BlockSpec((P, Hph, Wph, cin_p), lambda n, r: (n, 0, 0, 0)),
                pl.BlockSpec((9, cin_p, Cout), lambda n, r: (0, 0, 0)),
                pl.BlockSpec((1, Cout), lambda n, r: (0, 0)),
            ],
            out_specs=pl.BlockSpec((1, TH, Wo, Cout), lambda n, r: (n, r, 0, 0)),
        ),
        compiler_params=pltpu.CompilerParams(
            dimension_semantics=("parallel", "arbitrary"),
            vmem_limit_bytes=_vmem_limit_bytes(),
        ),
    )(ph, wf, bf)


# ----------------------------------------------------------------------------
# Plain-XLA path for the final 512->1 head (trivial matvec; a Pallas launch
# with Cout padded to 128 lanes would waste MXU columns + a kernel launch).
# ----------------------------------------------------------------------------
def conv3x3_plain_nhwc(x, w, scale, bias, stride, apply_lrelu):
    Cin, Cout = x.shape[-1], w.shape[-1]
    wk = w.reshape(3, 3, Cin, Cout).astype(jnp.bfloat16)
    y = jax.lax.conv_general_dilated(
        x.astype(jnp.bfloat16), wk, window_strides=(stride, stride),
        padding=((1, 1), (1, 1)), dimension_numbers=("NHWC", "HWIO", "NHWC"),
        preferred_element_type=jnp.float32)
    y = y * scale[None, None, None, :] + bias[None, None, None, :]
    if apply_lrelu:
        y = jnp.where(y > 0, y, 0.2 * y)
    return y.astype(jnp.bfloat16)


# ----------------------------------------------------------------------------
# Parameter construction (deterministic, mirrors Discriminator.__init__)
# ----------------------------------------------------------------------------
def init_discriminator_params(key, in_channels=3):
    cfgs = []
    in_f = in_channels
    for i, out_f in enumerate([64, 128, 256, 512]):
        cfgs.append(dict(cin=in_f, cout=out_f, stride=1, bn=(i != 0), lrelu=True))
        cfgs.append(dict(cin=out_f, cout=out_f, stride=2, bn=True, lrelu=True))
        in_f = out_f
    cfgs.append(dict(cin=in_f, cout=1, stride=1, bn=False, lrelu=False))

    params = []
    eps = 1e-5
    for cfg in cfgs:
        key, kw, kb = jax.random.split(key, 3)
        fan_in = 9 * cfg["cin"]
        # weight stored tap-major: (9, Cin, Cout), tap index = dy*3 + dx
        w = jax.random.normal(kw, (9, cfg["cin"], cfg["cout"]),
                              jnp.float32) / math.sqrt(fan_in)
        conv_b = 0.01 * jax.random.normal(kb, (cfg["cout"],), jnp.float32)
        if cfg["bn"]:
            gamma = jnp.ones((cfg["cout"],), jnp.float32)
            beta = jnp.zeros((cfg["cout"],), jnp.float32)
            running_mean = jnp.zeros((cfg["cout"],), jnp.float32)
            running_var = jnp.ones((cfg["cout"],), jnp.float32)
            scale = gamma / jnp.sqrt(running_var + eps)
            bias = beta + scale * (conv_b - running_mean)
        else:
            scale = jnp.ones((cfg["cout"],), jnp.float32)
            bias = conv_b
        params.append((w, scale, bias, cfg))
    return params


# ----------------------------------------------------------------------------
# Forward passes
# ----------------------------------------------------------------------------
def discriminator_forward_pallas(x_nchw, params):
    # NCHW -> NHWC, bf16 activations between layers.
    x = jnp.transpose(x_nchw, (0, 2, 3, 1)).astype(jnp.bfloat16)
    for (w, scale, bias, cfg) in params:
        if cfg["cout"] < 8:
            x = conv3x3_plain_nhwc(x, w, scale, bias, cfg["stride"], cfg["lrelu"])
        else:
            x = conv3x3_affine_lrelu_pallas(x, w, scale, bias,
                                            cfg["stride"], cfg["lrelu"])
    return jnp.transpose(x, (0, 3, 1, 2)).astype(jnp.float32)  # NHWC -> NCHW


def discriminator_forward_reference(x_nchw, params):
    # Matches the Pallas numerics: bf16 conv inputs, f32 accumulation/epilogue,
    # bf16 inter-layer activations.
    x = x_nchw.astype(jnp.bfloat16)
    for (w, scale, bias, cfg) in params:
        wk = w.reshape(3, 3, cfg["cin"], cfg["cout"]).astype(jnp.bfloat16)  # HWIO
        y = jax.lax.conv_general_dilated(
            x, wk, window_strides=(cfg["stride"], cfg["stride"]),
            padding=((1, 1), (1, 1)),
            dimension_numbers=("NCHW", "HWIO", "NCHW"),
            preferred_element_type=jnp.float32)
        y = y * scale[None, :, None, None] + bias[None, :, None, None]
        if cfg["lrelu"]:
            y = jnp.where(y > 0, y, 0.2 * y)
        x = y.astype(jnp.bfloat16)
    return x.astype(jnp.float32)


if __name__ == "__main__":
    key = jax.random.PRNGKey(0)
    k_x, k_p = jax.random.split(key)

    # Small, module-consistent shapes: hr_shape=(16,16), in_channels=3,
    # batch=2 -> output patch shape (1, 16/2^4, 16/2^4) = (1, 1, 1).
    x = jax.random.normal(k_x, (2, 3, 16, 16), jnp.float32)
    params = init_discriminator_params(k_p, in_channels=3)

    out = discriminator_forward_pallas(x, params)
    out = jax.block_until_ready(out)
    assert out.shape == (2, 1, 1, 1), out.shape

    ref = jax.block_until_ready(discriminator_forward_reference(x, params))
    np.testing.assert_allclose(np.asarray(out), np.asarray(ref),
                               rtol=2e-2, atol=2e-2)

    print("KERNEL_OK")
</pallas_src>

<mosaic_0001>
module attributes {stable_mosaic.version = 11 : i64} {
  func.func @_conv_tap_kernel(%arg0: i32, %arg1: i32, %arg2: memref<1x18x18x8xbf16, #tpu.memory_space<vmem>>, %arg3: memref<9x8x64xbf16, #tpu.memory_space<vmem>>, %arg4: memref<1x64xf32, #tpu.memory_space<vmem>>, %arg5: memref<1x16x16x64xbf16, #tpu.memory_space<vmem>>) attributes {dimension_semantics = [#tpu.dimension_semantics<parallel>, #tpu.dimension_semantics<arbitrary>], iteration_bounds = array<i64: 2, 1>, scalar_prefetch = 0 : i64, scratch_operands = 0 : i64, tpu.core_type = #tpu.core_type<tc>, window_params = [{transform_indices = @transform_0, window_bounds = array<i64: 1, 18, 18, 8>}, {pipeline_mode = #tpu.pipeline_mode<synchronous>, transform_indices = @transform_1, window_bounds = array<i64: 9, 8, 64>}, {pipeline_mode = #tpu.pipeline_mode<synchronous>, transform_indices = @transform_2, window_bounds = array<i64: 1, 64>}, {transform_indices = @transform_3, window_bounds = array<i64: 1, 16, 16, 64>}]} {
    %c16_i32 = arith.constant 16 : i32
    %0 = arith.muli %arg1, %c16_i32 : i32
    %1 = tpu.assume_multiple %0, 16 : i32
    %c0_i32 = arith.constant 0 : i32
    %2 = arith.addi %1, %c0_i32 : i32
    %c0 = arith.constant 0 : index
    %3 = arith.index_cast %2 : i32 to index
    %c0_0 = arith.constant 0 : index
    %c0_1 = arith.constant 0 : index
    %4 = vector.load %arg2[%c0, %3, %c0_0, %c0_1] : memref<1x18x18x8xbf16, #tpu.memory_space<vmem>>, vector<1x16x16x8xbf16>
    %5 = vector.shape_cast %4 : vector<1x16x16x8xbf16> to vector<16x16x8xbf16>
    %6 = vector.shape_cast %5 : vector<16x16x8xbf16> to vector<256x8xbf16>
    %c0_2 = arith.constant 0 : index
    %c0_3 = arith.constant 0 : index
    %c0_4 = arith.constant 0 : index
    %7 = vector.load %arg3[%c0_2, %c0_3, %c0_4] : memref<9x8x64xbf16, #tpu.memory_space<vmem>>, vector<1x8x64xbf16>
    %8 = vector.shape_cast %7 : vector<1x8x64xbf16> to vector<8x64xbf16>
    %cst = arith.constant dense<0.000000e+00> : vector<256x64xf32>
    %9 = tpu.matmul %6, %8, %cst {dimension_numbers = #tpu.dot_dimension_numbers<[1], [0], [0], [1], [0, 0, 1, 1], [], []>} : vector<256x8xbf16>, vector<8x64xbf16>, vector<256x64xf32> -> vector<256x64xf32>
    %c0_i32_5 = arith.constant 0 : i32
    %10 = arith.addi %1, %c0_i32_5 : i32
    %c0_6 = arith.constant 0 : index
    %11 = arith.index_cast %10 : i32 to index
    %c1 = arith.constant 1 : index
    %c0_7 = arith.constant 0 : index
    %12 = vector.load %arg2[%c0_6, %11, %c1, %c0_7] : memref<1x18x18x8xbf16, #tpu.memory_space<vmem>>, vector<1x16x16x8xbf16>
    %13 = vector.shape_cast %12 : vector<1x16x16x8xbf16> to vector<16x16x8xbf16>
    %14 = vector.shape_cast %13 : vector<16x16x8xbf16> to vector<256x8xbf16>
    %c1_8 = arith.constant 1 : index
    %c0_9 = arith.constant 0 : index
    %c0_10 = arith.constant 0 : index
    %15 = vector.load %arg3[%c1_8, %c0_9, %c0_10] : memref<9x8x64xbf16, #tpu.memory_space<vmem>>, vector<1x8x64xbf16>
    %16 = vector.shape_cast %15 : vector<1x8x64xbf16> to vector<8x64xbf16>
    %cst_11 = arith.constant dense<0.000000e+00> : vector<256x64xf32>
    %17 = tpu.matmul %14, %16, %cst_11 {dimension_numbers = #tpu.dot_dimension_numbers<[1], [0], [0], [1], [0, 0, 1, 1], [], []>} : vector<256x8xbf16>, vector<8x64xbf16>, vector<256x64xf32> -> vector<256x64xf32>
    %18 = arith.addf %9, %17 : vector<256x64xf32>
    %c0_i32_12 = arith.constant 0 : i32
    %19 = arith.addi %1, %c0_i32_12 : i32
    %c0_13 = arith.constant 0 : index
    %20 = arith.index_cast %19 : i32 to index
    %c2 = arith.constant 2 : index
    %c0_14 = arith.constant 0 : index
    %21 = vector.load %arg2[%c0_13, %20, %c2, %c0_14] : memref<1x18x18x8xbf16, #tpu.memory_space<vmem>>, vector<1x16x16x8xbf16>
    %22 = vector.shape_cast %21 : vector<1x16x16x8xbf16> to vector<16x16x8xbf16>
    %23 = vector.shape_cast %22 : vector<16x16x8xbf16> to vector<256x8xbf16>
    %c2_15 = arith.constant 2 : index
    %c0_16 = arith.constant 0 : index
    %c0_17 = arith.constant 0 : index
    %24 = vector.load %arg3[%c2_15, %c0_16, %c0_17] : memref<9x8x64xbf16, #tpu.memory_space<vmem>>, vector<1x8x64xbf16>
    %25 = vector.shape_cast %24 : vector<1x8x64xbf16> to vector<8x64xbf16>
    %cst_18 = arith.constant dense<0.000000e+00> : vector<256x64xf32>
    %26 = tpu.matmul %23, %25, %cst_18 {dimension_numbers = #tpu.dot_dimension_numbers<[1], [0], [0], [1], [0, 0, 1, 1], [], []>} : vector<256x8xbf16>, vector<8x64xbf16>, vector<256x64xf32> -> vector<256x64xf32>
    %27 = arith.addf %18, %26 : vector<256x64xf32>
    %c1_i32 = arith.constant 1 : i32
    %28 = arith.addi %1, %c1_i32 : i32
    %c0_19 = arith.constant 0 : index
    %29 = arith.index_cast %28 : i32 to index
    %c0_20 = arith.constant 0 : index
    %c0_21 = arith.constant 0 : index
    %30 = vector.load %arg2[%c0_19, %29, %c0_20, %c0_21] : memref<1x18x18x8xbf16, #tpu.memory_space<vmem>>, vector<1x16x16x8xbf16>
    %31 = vector.shape_cast %30 : vector<1x16x16x8xbf16> to vector<16x16x8xbf16>
    %32 = vector.shape_cast %31 : vector<16x16x8xbf16> to vector<256x8xbf16>
    %c3 = arith.constant 3 : index
    %c0_22 = arith.constant 0 : index
    %c0_23 = arith.constant 0 : index
    %33 = vector.load %arg3[%c3, %c0_22, %c0_23] : memref<9x8x64xbf16, #tpu.memory_space<vmem>>, vector<1x8x64xbf16>
    %34 = vector.shape_cast %33 : vector<1x8x64xbf16> to vector<8x64xbf16>
    %cst_24 = arith.constant dense<0.000000e+00> : vector<256x64xf32>
    %35 = tpu.matmul %32, %34, %cst_24 {dimension_numbers = #tpu.dot_dimension_numbers<[1], [0], [0], [1], [0, 0, 1, 1], [], []>} : vector<256x8xbf16>, vector<8x64xbf16>, vector<256x64xf32> -> vector<256x64xf32>
    %36 = arith.addf %27, %35 : vector<256x64xf32>
    %c1_i32_25 = arith.constant 1 : i32
    %37 = arith.addi %1, %c1_i32_25 : i32
    %c0_26 = arith.constant 0 : index
    %38 = arith.index_cast %37 : i32 to index
    %c1_27 = arith.constant 1 : index
    %c0_28 = arith.constant 0 : index
    %39 = vector.load %arg2[%c0_26, %38, %c1_27, %c0_28] : memref<1x18x18x8xbf16, #tpu.memory_space<vmem>>, vector<1x16x16x8xbf16>
    %40 = vector.shape_cast %39 : vector<1x16x16x8xbf16> to vector<16x16x8xbf16>
    %41 = vector.shape_cast %40 : vector<16x16x8xbf16> to vector<256x8xbf16>
    %c4 = arith.constant 4 : index
    %c0_29 = arith.constant 0 : index
    %c0_30 = arith.constant 0 : index
    %42 = vector.load %arg3[%c4, %c0_29, %c0_30] : memref<9x8x64xbf16, #tpu.memory_space<vmem>>, vector<1x8x64xbf16>
    %43 = vector.shape_cast %42 : vector<1x8x64xbf16> to vector<8x64xbf16>
    %cst_31 = arith.constant dense<0.000000e+00> : vector<256x64xf32>
    %44 = tpu.matmul %41, %43, %cst_31 {dimension_numbers = #tpu.dot_dimension_numbers<[1], [0], [0], [1], [0, 0, 1, 1], [], []>} : vector<256x8xbf16>, vector<8x64xbf16>, vector<256x64xf32> -> vector<256x64xf32>
    %45 = arith.addf %36, %44 : vector<256x64xf32>
    %c1_i32_32 = arith.constant 1 : i32
    %46 = arith.addi %1, %c1_i32_32 : i32
    %c0_33 = arith.constant 0 : index
    %47 = arith.index_cast %46 : i32 to index
    %c2_34 = arith.constant 2 : index
    %c0_35 = arith.constant 0 : index
    %48 = vector.load %arg2[%c0_33, %47, %c2_34, %c0_35] : memref<1x18x18x8xbf16, #tpu.memory_space<vmem>>, vector<1x16x16x8xbf16>
    %49 = vector.shape_cast %48 : vector<1x16x16x8xbf16> to vector<16x16x8xbf16>
    %50 = vector.shape_cast %49 : vector<16x16x8xbf16> to vector<256x8xbf16>
    %c5 = arith.constant 5 : index
    %c0_36 = arith.constant 0 : index
    %c0_37 = arith.constant 0 : index
    %51 = vector.load %arg3[%c5, %c0_36, %c0_37] : memref<9x8x64xbf16, #tpu.memory_space<vmem>>, vector<1x8x64xbf16>
    %52 = vector.shape_cast %51 : vector<1x8x64xbf16> to vector<8x64xbf16>
    %cst_38 = arith.constant dense<0.000000e+00> : vector<256x64xf32>
    %53 = tpu.matmul %50, %52, %cst_38 {dimension_numbers = #tpu.dot_dimension_numbers<[1], [0], [0], [1], [0, 0, 1, 1], [], []>} : vector<256x8xbf16>, vector<8x64xbf16>, vector<256x64xf32> -> vector<256x64xf32>
    %54 = arith.addf %45, %53 : vector<256x64xf32>
    %c2_i32 = arith.constant 2 : i32
    %55 = arith.addi %1, %c2_i32 : i32
    %c0_39 = arith.constant 0 : index
    %56 = arith.index_cast %55 : i32 to index
    %c0_40 = arith.constant 0 : index
    %c0_41 = arith.constant 0 : index
    %57 = vector.load %arg2[%c0_39, %56, %c0_40, %c0_41] : memref<1x18x18x8xbf16, #tpu.memory_space<vmem>>, vector<1x16x16x8xbf16>
    %58 = vector.shape_cast %57 : vector<1x16x16x8xbf16> to vector<16x16x8xbf16>
    %59 = vector.shape_cast %58 : vector<16x16x8xbf16> to vector<256x8xbf16>
    %c6 = arith.constant 6 : index
    %c0_42 = arith.constant 0 : index
    %c0_43 = arith.constant 0 : index
    %60 = vector.load %arg3[%c6, %c0_42, %c0_43] : memref<9x8x64xbf16, #tpu.memory_space<vmem>>, vector<1x8x64xbf16>
    %61 = vector.shape_cast %60 : vector<1x8x64xbf16> to vector<8x64xbf16>
    %cst_44 = arith.constant dense<0.000000e+00> : vector<256x64xf32>
    %62 = tpu.matmul %59, %61, %cst_44 {dimension_numbers = #tpu.dot_dimension_numbers<[1], [0], [0], [1], [0, 0, 1, 1], [], []>} : vector<256x8xbf16>, vector<8x64xbf16>, vector<256x64xf32> -> vector<256x64xf32>
    %63 = arith.addf %54, %62 : vector<256x64xf32>
    %c2_i32_45 = arith.constant 2 : i32
    %64 = arith.addi %1, %c2_i32_45 : i32
    %c0_46 = arith.constant 0 : index
    %65 = arith.index_cast %64 : i32 to index
    %c1_47 = arith.constant 1 : index
    %c0_48 = arith.constant 0 : index
    %66 = vector.load %arg2[%c0_46, %65, %c1_47, %c0_48] : memref<1x18x18x8xbf16, #tpu.memory_space<vmem>>, vector<1x16x16x8xbf16>
    %67 = vector.shape_cast %66 : vector<1x16x16x8xbf16> to vector<16x16x8xbf16>
    %68 = vector.shape_cast %67 : vector<16x16x8xbf16> to vector<256x8xbf16>
    %c7 = arith.constant 7 : index
    %c0_49 = arith.constant 0 : index
    %c0_50 = arith.constant 0 : index
    %69 = vector.load %arg3[%c7, %c0_49, %c0_50] : memref<9x8x64xbf16, #tpu.memory_space<vmem>>, vector<1x8x64xbf16>
    %70 = vector.shape_cast %69 : vector<1x8x64xbf16> to vector<8x64xbf16>
    %cst_51 = arith.constant dense<0.000000e+00> : vector<256x64xf32>
    %71 = tpu.matmul %68, %70, %cst_51 {dimension_numbers = #tpu.dot_dimension_numbers<[1], [0], [0], [1], [0, 0, 1, 1], [], []>} : vector<256x8xbf16>, vector<8x64xbf16>, vector<256x64xf32> -> vector<256x64xf32>
    %72 = arith.addf %63, %71 : vector<256x64xf32>
    %c2_i32_52 = arith.constant 2 : i32
    %73 = arith.addi %1, %c2_i32_52 : i32
    %c0_53 = arith.constant 0 : index
    %74 = arith.index_cast %73 : i32 to index
    %c2_54 = arith.constant 2 : index
    %c0_55 = arith.constant 0 : index
    %75 = vector.load %arg2[%c0_53, %74, %c2_54, %c0_55] : memref<1x18x18x8xbf16, #tpu.memory_space<vmem>>, vector<1x16x16x8xbf16>
    %76 = vector.shape_cast %75 : vector<1x16x16x8xbf16> to vector<16x16x8xbf16>
    %77 = vector.shape_cast %76 : vector<16x16x8xbf16> to vector<256x8xbf16>
    %c8 = arith.constant 8 : index
    %c0_56 = arith.constant 0 : index
    %c0_57 = arith.constant 0 : index
    %78 = vector.load %arg3[%c8, %c0_56, %c0_57] : memref<9x8x64xbf16, #tpu.memory_space<vmem>>, vector<1x8x64xbf16>
    %79 = vector.shape_cast %78 : vector<1x8x64xbf16> to vector<8x64xbf16>
    %cst_58 = arith.constant dense<0.000000e+00> : vector<256x64xf32>
    %80 = tpu.matmul %77, %79, %cst_58 {dimension_numbers = #tpu.dot_dimension_numbers<[1], [0], [0], [1], [0, 0, 1, 1], [], []>} : vector<256x8xbf16>, vector<8x64xbf16>, vector<256x64xf32> -> vector<256x64xf32>
    %81 = arith.addf %72, %80 : vector<256x64xf32>
    %c0_59 = arith.constant 0 : index
    %c0_60 = arith.constant 0 : index
    %82 = vector.load %arg4[%c0_59, %c0_60] : memref<1x64xf32, #tpu.memory_space<vmem>>, vector<1x64xf32>
    %83 = vector.broadcast %82 : vector<1x64xf32> to vector<256x64xf32>
    %84 = arith.addf %81, %83 : vector<256x64xf32>
    %cst_61 = arith.constant 0.000000e+00 : f32
    %85 = vector.broadcast %cst_61 : f32 to vector<256x64xf32>
    %86 = arith.cmpf ogt, %84, %85 : vector<256x64xf32>
    %cst_62 = arith.constant 2.000000e-01 : f32
    %87 = vector.broadcast %cst_62 : f32 to vector<256x64xf32>
    %88 = arith.mulf %87, %84 : vector<256x64xf32>
    %89 = arith.select %86, %84, %88 : vector<256x64xi1>, vector<256x64xf32>
    %90 = vector.shape_cast %89 : vector<256x64xf32> to vector<1x16x16x64xf32>
    %91 = arith.truncf %90 : vector<1x16x16x64xf32> to vector<1x16x16x64xbf16>
    %c0_63 = arith.constant 0 : index
    %c0_64 = arith.constant 0 : index
    %c0_65 = arith.constant 0 : index
    %c0_66 = arith.constant 0 : index
    %92 = vector.load %arg5[%c0_63, %c0_64, %c0_65, %c0_66] : memref<1x16x16x64xbf16, #tpu.memory_space<vmem>>, vector<1x16x16x64xbf16>
    tpu.vector_store %arg5[%c0_63, %c0_64, %c0_65, %c0_66], %91 {strides = array<i32>} : memref<1x16x16x64xbf16, #tpu.memory_space<vmem>>, vector<1x16x16x64xbf16>,
    return
  }
  func.func @transform_0(%arg0: i32, %arg1: i32) -> (i32, i32, i32, i32) {
    %c0_i32 = arith.constant 0 : i32
    %c0_i32_0 = arith.constant 0 : i32
    %c0_i32_1 = arith.constant 0 : i32
    %c0_i32_2 = arith.constant 0 : i32
    return %arg0, %c0_i32, %c0_i32_0, %c0_i32_1 : i32, i32, i32, i32
  }
  func.func @transform_1(%arg0: i32, %arg1: i32) -> (i32, i32, i32) {
    %c0_i32 = arith.constant 0 : i32
    %c0_i32_0 = arith.constant 0 : i32
    %c0_i32_1 = arith.constant 0 : i32
    %c0_i32_2 = arith.constant 0 : i32
    return %c0_i32, %c0_i32_0, %c0_i32_1 : i32, i32, i32
  }
  func.func @transform_2(%arg0: i32, %arg1: i32) -> (i32, i32) {
    %c0_i32 = arith.constant 0 : i32
    %c0_i32_0 = arith.constant 0 : i32
    %c0_i32_1 = arith.constant 0 : i32
    return %c0_i32, %c0_i32_0 : i32, i32
  }
  func.func @transform_3(%arg0: i32, %arg1: i32) -> (i32, i32, i32, i32) {
    %c0_i32 = arith.constant 0 : i32
    %c0_i32_0 = arith.constant 0 : i32
    %c0_i32_1 = arith.constant 0 : i32
    return %arg0, %arg1, %c0_i32, %c0_i32_0 : i32, i32, i32, i32
  }
}

</mosaic_0001>

<llo_original>
// kernel: tpu_custom_call.1
$region0: #{tpu_custom_call.1}
  #allocation0 [shape = 'u32[]', space=smem, size = 0x4, offset = 0x4, fixed_abs, tag = 'smem constant byte address 0x4 - core index']
  #allocation1 [shape = 'u32[72,128]{1,0:T(1,128)}', space=vmem, size = 0x9000, scoped, tag = 'internal scratch']
  %s0 = inlined_call_operand.vmem [shape: bf16[2,18,18,8], index: 0, kind: input, shape index: {}]
  %s1 = inlined_call_operand.vmem [shape: bf16[9,8,64], index: 1, kind: input, shape index: {}]
  %s2 = inlined_call_operand.vmem [shape: f32[1,64], index: 2, kind: input, shape index: {}]
  %s3 = inlined_call_operand.hbm [shape: bf16[2,16,16,64], index: 3, kind: output, shape index: {}]
  %s4 = sld [smem:[#allocation0]]
  $region45: #{tpu_custom_call.1} parent=0
    _
  %s6 = ssub.s32 1, %s4
  %s7 = scalar_select 0, %s6, %s4
  $region1: #{tpu_custom_call.1} parent=0
    #allocation2 [shape = 'u8[131072]{0}', space=vmem, size = 0x20000, scoped, tag = 'output window, operand 0']
    #allocation3 [shape = 's32[2]{0}', space=sflag, size = 0x8, scoped, tag = 'scoped memory for tpu_custom_call.1']
    %8 = vsyncpa [#allocation3], 0
    %s9 = scalar_lea.sflag [#allocation3], 1
    %10 = vsyncpa %s9, 0
    loop: start=0, step=1, limit=4
    $region2: #{tpu_custom_call.1} parent=1 // loop_pre_header
      _
    $region3: #{tpu_custom_call.1} parent=1 // loop_header
      %s12 = sphi 0, %s16
      %p13 = scmp.ge.s32.totalorder %s12, 4
      %s19 = sphi 0, %s31
      %s20 = sphi 0, %s27
      %s21 = sphi 0, %s19
      %s22 = sphi 0, %s20
      %s23 = sphi 0, %s21
      %s24 = sphi 0, %s22
      %s34 = sphi 0, %s36
      %s37 = sphi 0, %s34
      %s38 = sphi 0, %s37
      %s54 = sphi 0, %s38
      %s58 = sphi 0, %s58
      %s60 = sphi 0, %s58
      %s61 = sphi 0, %s60
      %s75 = sphi 0, %s61
      %s79 = sphi 0, %s79
      %s81 = sphi 0, %s79
      %s82 = sphi 0, %s81
      %s96 = sphi 0, %s82
      %s104 = sphi 0, %s106
      %s107 = sphi 0, %s104
      %s108 = sphi 0, %s107
      %s124 = sphi 0, %s108
    $region4: #{tpu_custom_call.1} parent=1 // loop_header_branch
      %15 = sbr.rel (%p13) target = $region8
    $region5: #{tpu_custom_call.1} parent=1 // loop_body
      %s17 = ssub.s32 %s12, 1
      %s18 = ssub.s32 %s12, 2
      %s25 = sadd.s32 1, %s20
      %p26 = scmp.ge.s32.totalorder %s25, 1
      %s27 = scalar_select %p26, 0, %s25
      %s28 = sadd.s32 1, %s19
      %s29 = scalar_select %p26, %s28, %s19
      %p30 = scmp.ge.s32.totalorder %s29, 2
      %s31 = scalar_select %p30, 0, %s29
      %s32 = ssub.s32 %s19, %s31
      %p33 = scmp.eq.s32.totalorder %s32, 0
      %s35 = sadd.s32 %s34, 1
      %s36 = scalar_select %p33, %s34, %s35
      %p39 = pneg %p33
      %p40 = scmp.eq.s32.totalorder %s12, 1
      %p41 = por %p39, %p40
      %p42 = scmp.ne.s32.totalorder %s34, %s37
      %p43 = scmp.eq.s32.totalorder %s12, 0
      %p44 = por %p42, %p43
      %p45 = scmp.ne.s32.totalorder %s34, %s37
      %p46 = scmp.eq.s32.totalorder %s17, 1
      %p47 = por %p45, %p46
      %p48 = scmp.ne.s32.totalorder %s37, %s38
      %p49 = scmp.eq.s32.totalorder %s17, 0
      %p50 = por %p48, %p49
      %p51 = scmp.ne.s32.totalorder %s37, %s38
      %p52 = scmp.eq.s32.totalorder %s18, 1
      %p53 = por %p51, %p52
      %p55 = scmp.ne.s32.totalorder %s38, %s54
      %p56 = scmp.eq.s32.totalorder %s18, 0
      %p57 = por %p55, %p56
      %s59 = sadd.s32 %s58, 1
      %p62 = scmp.eq.s32.totalorder %s12, 1
      %p63 = scmp.ne.s32.totalorder %s58, %s60
      %p64 = scmp.eq.s32.totalorder %s12, 0
      %p65 = por %p63, %p64
      %p66 = scmp.ne.s32.totalorder %s58, %s60
      %p67 = scmp.eq.s32.totalorder %s17, 1
      %p68 = por %p66, %p67
      %p69 = scmp.ne.s32.totalorder %s60, %s61
      %p70 = scmp.eq.s32.totalorder %s17, 0
      %p71 = por %p69, %p70
      %p72 = scmp.ne.s32.totalorder %s60, %s61
      %p73 = scmp.eq.s32.totalorder %s18, 1
      %p74 = por %p72, %p73
      %p76 = scmp.ne.s32.totalorder %s61, %s75
      %p77 = scmp.eq.s32.totalorder %s18, 0
      %p78 = por %p76, %p77
      %s80 = sadd.s32 %s79, 1
      %p83 = scmp.eq.s32.totalorder %s12, 1
      %p84 = scmp.ne.s32.totalorder %s79, %s81
      %p85 = scmp.eq.s32.totalorder %s12, 0
      %p86 = por %p84, %p85
      %p87 = scmp.ne.s32.totalorder %s79, %s81
      %p88 = scmp.eq.s32.totalorder %s17, 1
      %p89 = por %p87, %p88
      %p90 = scmp.ne.s32.totalorder %s81, %s82
      %p91 = scmp.eq.s32.totalorder %s17, 0
      %p92 = por %p90, %p91
      %p93 = scmp.ne.s32.totalorder %s81, %s82
      %p94 = scmp.eq.s32.totalorder %s18, 1
      %p95 = por %p93, %p94
      %p97 = scmp.ne.s32.totalorder %s82, %s96
      %p98 = scmp.eq.s32.totalorder %s18, 0
      %p99 = por %p97, %p98
      %s100 = ssub.s32 %s19, %s31
      %s101 = ssub.s32 %s20, %s27
      %s102 = sor.u32 %s100, %s101
      %p103 = scmp.eq.s32.totalorder %s102, 0
      %s105 = sadd.s32 %s104, 1
      %s106 = scalar_select %p103, %s104, %s105
      %p109 = pneg %p103
      %p110 = scmp.eq.s32.totalorder %s12, 1
      %p111 = por %p109, %p110
      %p112 = scmp.ne.s32.totalorder %s104, %s107
      %p113 = scmp.eq.s32.totalorder %s12, 0
      %p114 = por %p112, %p113
      %p115 = scmp.ne.s32.totalorder %s104, %s107
      %p116 = scmp.eq.s32.totalorder %s17, 1
      %p117 = por %p115, %p116
      %p118 = scmp.ne.s32.totalorder %s107, %s108
      %p119 = scmp.eq.s32.totalorder %s17, 0
      %p120 = por %p118, %p119
      %p121 = scmp.ne.s32.totalorder %s107, %s108
      %p122 = scmp.eq.s32.totalorder %s18, 1
      %p123 = por %p121, %p122
      %p125 = scmp.ne.s32.totalorder %s108, %s124
      %p126 = scmp.eq.s32.totalorder %s18, 0
      %p127 = por %p125, %p126
      %p128 = scmp.le.s32.totalorder 1, %s12
      %p129 = scmp.lt.s32.totalorder %s12, 3
      %p130 = pnand %p128, %p129
      %p131 = pneg %p130
      // Predicated region
      $region9: #{tpu_custom_call.1} parent=5 // pred_check
        _
      $region10: #{tpu_custom_call.1} parent=5 // pred_check_branch
        %133 = sbr.rel (%p130) target = $region12
      $region11: #{tpu_custom_call.1} parent=5 // pred_region
        %s134 = ssub.s32 %s12, 1
        // Predicated region
        $region13: #{tpu_custom_call.1} parent=11 // pred_check
          %p135 = pneg %p71
        $region14: #{tpu_custom_call.1} parent=11 // pred_check_branch
          %137 = sbr.rel (%p135) target = $region16
        $region15: #{tpu_custom_call.1} parent=11 // pred_region
          _
        $region16: #{tpu_custom_call.1} parent=11 // pred_fallthru
          _
        // Predicated region
        $region17: #{tpu_custom_call.1} parent=11 // pred_check
          %p138 = pneg %p92
        $region18: #{tpu_custom_call.1} parent=11 // pred_check_branch
          %140 = sbr.rel (%p138) target = $region20
        $region19: #{tpu_custom_call.1} parent=11 // pred_region
          _
        $region20: #{tpu_custom_call.1} parent=11 // pred_fallthru
          _
      $region12: #{tpu_custom_call.1} parent=5 // pred_fallthru
        _
      %p141 = scmp.lt.s32.totalorder %s12, 2
      // Predicated region
      $region21: #{tpu_custom_call.1} parent=5 // pred_check
        %p142 = pneg %p141
      $region22: #{tpu_custom_call.1} parent=5 // pred_check_branch
        %144 = sbr.rel (%p142) target = $region24
      $region23: #{tpu_custom_call.1} parent=5 // pred_region
        // Predicated region
        $region25: #{tpu_custom_call.1} parent=23 // pred_check
          %p145 = pneg %p44
        $region26: #{tpu_custom_call.1} parent=23 // pred_check_branch
          %147 = sbr.rel (%p145) target = $region28
        $region27: #{tpu_custom_call.1} parent=23 // pred_region
          %p148 = scmp.lt.s32.totalorder %s19, 1
          %s149 = scalar_select %p148, %s19, 1
          %s150 = smul.addr %s149, 54
          %s151 = smul.addr %s150, 4
          %s152 = scalar_lea.vmem %s0, %s151
        $region28: #{tpu_custom_call.1} parent=23 // pred_fallthru
          _
      $region24: #{tpu_custom_call.1} parent=5 // pred_fallthru
        _
      %p153 = scmp.le.s32.totalorder 1, %s12
      %p154 = scmp.lt.s32.totalorder %s12, 3
      %p155 = pnand %p153, %p154
      %p156 = pneg %p155
      // Predicated region
      $region29: #{tpu_custom_call.1} parent=5 // pred_check
        _
      $region30: #{tpu_custom_call.1} parent=5 // pred_check_branch
        %158 = sbr.rel (%p155) target = $region32
      $region31: #{tpu_custom_call.1} parent=5 // pred_region
        %s159 = ssub.s32 %s12, 1
        %p160 = scmp.lt.s32.totalorder %s21, 1
        %s161 = scalar_select %p160, %s21, 1
        %s162 = smul.addr %s161, 54
        %s163 = smul.addr %s162, 4
        %s164 = scalar_lea.vmem %s0, %s163
        %p165 = pneg %p50
        %p166 = pneg %p47
        %p167 = pneg %p71
        %p168 = pneg %p68
        %p169 = pneg %p92
        %p170 = pneg %p89
        %p171 = pneg %p120
        %p172 = pneg %p117
        %s173 = sand.u32 %s107, 1
        %s174 = scalar_lea.sflag [#allocation3], %s173
        %s175 = sand.u32 %s107, 1
        %s176 = smul.addr %s175, 128
        %s177 = scalar_lea.vmem [#allocation2], %s176
        %p178 = scmp.lt.s32.totalorder %s21, 1
        %s179 = scalar_select %p178, %s21, 1
        %s180 = smul.addr %s179, 54
        %s181 = smul.addr %s180, 4
        %s182 = scalar_lea.vmem %s0, %s181
        %s183 = smul.u32 16, %s22
        %s185 = smul.u32 %s22, 16
        %s186 = smul.u32 %s185, 3
        %s187 = smul.addr %s186, 4
        %s188 = scalar_lea.vmem %s182, %s187
        %v189 = vld [vmem:[%s188] sm:$0xf]
        %v190 = vld [vmem:[%s188 + $0x4] sm:$0xf]
        %v191 = vld [vmem:[%s188 + $0xc] sm:$0xf]
        %v192 = vld [vmem:[%s188 + $0x10] sm:$0xf]
        %v193 = vld [vmem:[%s188 + $0x18] sm:$0xf]
        %v194 = vld [vmem:[%s188 + $0x1c] sm:$0xf]
        %v195 = vld [vmem:[%s188 + $0x24] sm:$0xf]
        %v196 = vld [vmem:[%s188 + $0x28] sm:$0xf]
        %v197 = vld [vmem:[%s188 + $0x30] sm:$0xf]
        %v198 = vld [vmem:[%s188 + $0x34] sm:$0xf]
        %v199 = vld [vmem:[%s188 + $0x3c] sm:$0xf]
        %v200 = vld [vmem:[%s188 + $0x40] sm:$0xf]
        %v201 = vld [vmem:[%s188 + $0x48] sm:$0xf]
        %v202 = vld [vmem:[%s188 + $0x4c] sm:$0xf]
        %v203 = vld [vmem:[%s188 + $0x54] sm:$0xf]
        %v204 = vld [vmem:[%s188 + $0x58] sm:$0xf]
        %v205 = vld [vmem:[%s188 + $0x60] sm:$0xf]
        %v206 = vld [vmem:[%s188 + $0x64] sm:$0xf]
        %v207 = vld [vmem:[%s188 + $0x6c] sm:$0xf]
        %v208 = vld [vmem:[%s188 + $0x70] sm:$0xf]
        %v209 = vld [vmem:[%s188 + $0x78] sm:$0xf]
        %v210 = vld [vmem:[%s188 + $0x7c] sm:$0xf]
        %v211 = vld [vmem:[%s188 + $0x84] sm:$0xf]
        %v212 = vld [vmem:[%s188 + $0x88] sm:$0xf]
        %v213 = vld [vmem:[%s188 + $0x90] sm:$0xf]
        %v214 = vld [vmem:[%s188 + $0x94] sm:$0xf]
        %v215 = vld [vmem:[%s188 + $0x9c] sm:$0xf]
        %v216 = vld [vmem:[%s188 + $0xa0] sm:$0xf]
        %v217 = vld [vmem:[%s188 + $0xa8] sm:$0xf]
        %v218 = vld [vmem:[%s188 + $0xac] sm:$0xf]
        %v219 = vld [vmem:[%s188 + $0xb4] sm:$0xf]
        %v220 = vld [vmem:[%s188 + $0xb8] sm:$0xf]
        %v221 = vld [vmem:[%s1] sm:$0xf]
        %v222 = vld [vmem:[%s188 + $0x8] sm:$0x1]
        %v223 = vld [vmem:[%s188 + $0x14] sm:$0x1]
        %v224 = vld [vmem:[%s188 + $0x20] sm:$0x1]
        %v225 = vld [vmem:[%s188 + $0x2c] sm:$0x1]
        %v226 = vld [vmem:[%s188 + $0x38] sm:$0x1]
        %v227 = vld [vmem:[%s188 + $0x44] sm:$0x1]
        %v228 = vld [vmem:[%s188 + $0x50] sm:$0x1]
        %v229 = vld [vmem:[%s188 + $0x5c] sm:$0x1]
        %v230 = vld [vmem:[%s188 + $0x68] sm:$0x1]
        %v231 = vld [vmem:[%s188 + $0x74] sm:$0x1]
        %v232 = vld [vmem:[%s188 + $0x80] sm:$0x1]
        %v233 = vld [vmem:[%s188 + $0x8c] sm:$0x1]
        %v234 = vld [vmem:[%s188 + $0x98] sm:$0x1]
        %v235 = vld [vmem:[%s188 + $0xa4] sm:$0x1]
        %v236 = vld [vmem:[%s188 + $0xb0] sm:$0x1]
        %v237 = vld [vmem:[%s188 + $0xbc] sm:$0x1]
        %vm238 = vsmask.f32 3328
        %vm239 = vsmask.f32 7440
        %vm240 = vmor %vm238, %vm239
        %v242 = vshrl.u32 %v189, 16
        %v244 = vrot.slane %v242, 4
        %v245 = vshll.u32 %v189, 16
        %v247 = vrot.slane %v245, 5
        %v248 = vor.u32 %v244, %v247
        %v249 = vrot.slane %v248, 4
        %v251 = vshll.u32 %v190, 16
        %v253 = vrot.slane %v251, 5
        %v254 = vsel %vm240, %v249, %v253
        %v255 = vshrl.u32 %v190, 16
        %v257 = vrot.slane %v255, 4
        %v258 = vor.u32 %v257, %v253
        %v259 = vrot.slane %v258, 4
        %v261 = vshll.u32 %v222, 16
        %v263 = vrot.slane %v261, 5
        %v264 = vsel %vm240, %v259, %v263
        %v266 = vshrl.u32 %v191, 16
        %v268 = vrot.slane %v266, 4
        %v269 = vshll.u32 %v191, 16
        %v271 = vrot.slane %v269, 5
        %v272 = vor.u32 %v268, %v271
        %v273 = vrot.slane %v272, 4
        %v275 = vshll.u32 %v192, 16
        %v277 = vrot.slane %v275, 5
        %v278 = vsel %vm240, %v273, %v277
        %v279 = vshrl.u32 %v192, 16
        %v281 = vrot.slane %v279, 4
        %v282 = vor.u32 %v281, %v277
        %v283 = vrot.slane %v282, 4
        %v285 = vshll.u32 %v223, 16
        %v287 = vrot.slane %v285, 5
        %v288 = vsel %vm240, %v283, %v287
        %v290 = vshrl.u32 %v193, 16
        %v292 = vrot.slane %v290, 4
        %v293 = vshll.u32 %v193, 16
        %v295 = vrot.slane %v293, 5
        %v296 = vor.u32 %v292, %v295
        %v297 = vrot.slane %v296, 4
        %v299 = vshll.u32 %v194, 16
        %v301 = vrot.slane %v299, 5
        %v302 = vsel %vm240, %v297, %v301
        %v303 = vshrl.u32 %v194, 16
        %v305 = vrot.slane %v303, 4
        %v306 = vor.u32 %v305, %v301
        %v307 = vrot.slane %v306, 4
        %v309 = vshll.u32 %v224, 16
        %v311 = vrot.slane %v309, 5
        %v312 = vsel %vm240, %v307, %v311
        %v314 = vshrl.u32 %v195, 16
        %v316 = vrot.slane %v314, 4
        %v317 = vshll.u32 %v195, 16
        %v319 = vrot.slane %v317, 5
        %v320 = vor.u32 %v316, %v319
        %v321 = vrot.slane %v320, 4
        %v323 = vshll.u32 %v196, 16
        %v325 = vrot.slane %v323, 5
        %v326 = vsel %vm240, %v321, %v325
        %v327 = vshrl.u32 %v196, 16
        %v329 = vrot.slane %v327, 4
        %v330 = vor.u32 %v329, %v325
        %v331 = vrot.slane %v330, 4
        %v333 = vshll.u32 %v225, 16
        %v335 = vrot.slane %v333, 5
        %v336 = vsel %vm240, %v331, %v335
        %v338 = vshrl.u32 %v197, 16
        %v340 = vrot.slane %v338, 4
        %v341 = vshll.u32 %v197, 16
        %v343 = vrot.slane %v341, 5
        %v344 = vor.u32 %v340, %v343
        %v345 = vrot.slane %v344, 4
        %v347 = vshll.u32 %v198, 16
        %v349 = vrot.slane %v347, 5
        %v350 = vsel %vm240, %v345, %v349
        %v351 = vshrl.u32 %v198, 16
        %v353 = vrot.slane %v351, 4
        %v354 = vor.u32 %v353, %v349
        %v355 = vrot.slane %v354, 4
        %v357 = vshll.u32 %v226, 16
        %v359 = vrot.slane %v357, 5
        %v360 = vsel %vm240, %v355, %v359
        %v362 = vshrl.u32 %v199, 16
        %v364 = vrot.slane %v362, 4
        %v365 = vshll.u32 %v199, 16
        %v367 = vrot.slane %v365, 5
        %v368 = vor.u32 %v364, %v367
        %v369 = vrot.slane %v368, 4
        %v371 = vshll.u32 %v200, 16
        %v373 = vrot.slane %v371, 5
        %v374 = vsel %vm240, %v369, %v373
        %v375 = vshrl.u32 %v200, 16
        %v377 = vrot.slane %v375, 4
        %v378 = vor.u32 %v377, %v373
        %v379 = vrot.slane %v378, 4
        %v381 = vshll.u32 %v227, 16
        %v383 = vrot.slane %v381, 5
        %v384 = vsel %vm240, %v379, %v383
        %v386 = vshrl.u32 %v201, 16
        %v388 = vrot.slane %v386, 4
        %v389 = vshll.u32 %v201, 16
        %v391 = vrot.slane %v389, 5
        %v392 = vor.u32 %v388, %v391
        %v393 = vrot.slane %v392, 4
        %v395 = vshll.u32 %v202, 16
        %v397 = vrot.slane %v395, 5
        %v398 = vsel %vm240, %v393, %v397
        %v399 = vshrl.u32 %v202, 16
        %v401 = vrot.slane %v399, 4
        %v402 = vor.u32 %v401, %v397
        %v403 = vrot.slane %v402, 4
        %v405 = vshll.u32 %v228, 16
        %v407 = vrot.slane %v405, 5
        %v408 = vsel %vm240, %v403, %v407
        %v410 = vshrl.u32 %v203, 16
        %v412 = vrot.slane %v410, 4
        %v413 = vshll.u32 %v203, 16
        %v415 = vrot.slane %v413, 5
        %v416 = vor.u32 %v412, %v415
        %v417 = vrot.slane %v416, 4
        %v419 = vshll.u32 %v204, 16
        %v421 = vrot.slane %v419, 5
        %v422 = vsel %vm240, %v417, %v421
        %v423 = vshrl.u32 %v204, 16
        %v425 = vrot.slane %v423, 4
        %v426 = vor.u32 %v425, %v421
        %v427 = vrot.slane %v426, 4
        %v429 = vshll.u32 %v229, 16
        %v431 = vrot.slane %v429, 5
        %v432 = vsel %vm240, %v427, %v431
        %v434 = vshrl.u32 %v205, 16
        %v436 = vrot.slane %v434, 4
        %v437 = vshll.u32 %v205, 16
        %v439 = vrot.slane %v437, 5
        %v440 = vor.u32 %v436, %v439
        %v441 = vrot.slane %v440, 4
        %v443 = vshll.u32 %v206, 16
        %v445 = vrot.slane %v443, 5
        %v446 = vsel %vm240, %v441, %v445
        %v447 = vshrl.u32 %v206, 16
        %v449 = vrot.slane %v447, 4
        %v450 = vor.u32 %v449, %v445
        %v451 = vrot.slane %v450, 4
        %v453 = vshll.u32 %v230, 16
        %v455 = vrot.slane %v453, 5
        %v456 = vsel %vm240, %v451, %v455
        %v458 = vshrl.u32 %v207, 16
        %v460 = vrot.slane %v458, 4
        %v461 = vshll.u32 %v207, 16
        %v463 = vrot.slane %v461, 5
        %v464 = vor.u32 %v460, %v463
        %v465 = vrot.slane %v464, 4
        %v467 = vshll.u32 %v208, 16
        %v469 = vrot.slane %v467, 5
        %v470 = vsel %vm240, %v465, %v469
        %v471 = vshrl.u32 %v208, 16
        %v473 = vrot.slane %v471, 4
        %v474 = vor.u32 %v473, %v469
        %v475 = vrot.slane %v474, 4
        %v477 = vshll.u32 %v231, 16
        %v479 = vrot.slane %v477, 5
        %v480 = vsel %vm240, %v475, %v479
        %v482 = vshrl.u32 %v209, 16
        %v484 = vrot.slane %v482, 4
        %v485 = vshll.u32 %v209, 16
        %v487 = vrot.slane %v485, 5
        %v488 = vor.u32 %v484, %v487
        %v489 = vrot.slane %v488, 4
        %v491 = vshll.u32 %v210, 16
        %v493 = vrot.slane %v491, 5
        %v494 = vsel %vm240, %v489, %v493
        %v495 = vshrl.u32 %v210, 16
        %v497 = vrot.slane %v495, 4
        %v498 = vor.u32 %v497, %v493
        %v499 = vrot.slane %v498, 4
        %v501 = vshll.u32 %v232, 16
        %v503 = vrot.slane %v501, 5
        %v504 = vsel %vm240, %v499, %v503
        %v506 = vshrl.u32 %v211, 16
        %v508 = vrot.slane %v506, 4
        %v509 = vshll.u32 %v211, 16
        %v511 = vrot.slane %v509, 5
        %v512 = vor.u32 %v508, %v511
        %v513 = vrot.slane %v512, 4
        %v515 = vshll.u32 %v212, 16
        %v517 = vrot.slane %v515, 5
        %v518 = vsel %vm240, %v513, %v517
        %v519 = vshrl.u32 %v212, 16
        %v521 = vrot.slane %v519, 4
        %v522 = vor.u32 %v521, %v517
        %v523 = vrot.slane %v522, 4
        %v525 = vshll.u32 %v233, 16
        %v527 = vrot.slane %v525, 5
        %v528 = vsel %vm240, %v523, %v527
        %v530 = vshrl.u32 %v213, 16
        %v532 = vrot.slane %v530, 4
        %v533 = vshll.u32 %v213, 16
        %v535 = vrot.slane %v533, 5
        %v536 = vor.u32 %v532, %v535
        %v537 = vrot.slane %v536, 4
        %v539 = vshll.u32 %v214, 16
        %v541 = vrot.slane %v539, 5
        %v542 = vsel %vm240, %v537, %v541
        %v543 = vshrl.u32 %v214, 16
        %v545 = vrot.slane %v543, 4
        %v546 = vor.u32 %v545, %v541
        %v547 = vrot.slane %v546, 4
        %v549 = vshll.u32 %v234, 16
        %v551 = vrot.slane %v549, 5
        %v552 = vsel %vm240, %v547, %v551
        %v554 = vshrl.u32 %v215, 16
        %v556 = vrot.slane %v554, 4
        %v557 = vshll.u32 %v215, 16
        %v559 = vrot.slane %v557, 5
        %v560 = vor.u32 %v556, %v559
        %v561 = vrot.slane %v560, 4
        %v563 = vshll.u32 %v216, 16
        %v565 = vrot.slane %v563, 5
        %v566 = vsel %vm240, %v561, %v565
        %v567 = vshrl.u32 %v216, 16
        %v569 = vrot.slane %v567, 4
        %v570 = vor.u32 %v569, %v565
        %v571 = vrot.slane %v570, 4
        %v573 = vshll.u32 %v235, 16
        %v575 = vrot.slane %v573, 5
        %v576 = vsel %vm240, %v571, %v575
        %v578 = vshrl.u32 %v217, 16
        %v580 = vrot.slane %v578, 4
        %v581 = vshll.u32 %v217, 16
        %v583 = vrot.slane %v581, 5
        %v584 = vor.u32 %v580, %v583
        %v585 = vrot.slane %v584, 4
        %v587 = vshll.u32 %v218, 16
        %v589 = vrot.slane %v587, 5
        %v590 = vsel %vm240, %v585, %v589
        %v591 = vshrl.u32 %v218, 16
        %v593 = vrot.slane %v591, 4
        %v594 = vor.u32 %v593, %v589
        %v595 = vrot.slane %v594, 4
        %v597 = vshll.u32 %v236, 16
        %v599 = vrot.slane %v597, 5
        %v600 = vsel %vm240, %v595, %v599
        %v602 = vshrl.u32 %v219, 16
        %v604 = vrot.slane %v602, 4
        %v605 = vshll.u32 %v219, 16
        %v607 = vrot.slane %v605, 5
        %v608 = vor.u32 %v604, %v607
        %v609 = vrot.slane %v608, 4
        %v611 = vshll.u32 %v220, 16
        %v613 = vrot.slane %v611, 5
        %v614 = vsel %vm240, %v609, %v613
        %v615 = vshrl.u32 %v220, 16
        %v617 = vrot.slane %v615, 4
        %v618 = vor.u32 %v617, %v613
        %v619 = vrot.slane %v618, 4
        %v621 = vshll.u32 %v237, 16
        %v623 = vrot.slane %v621, 5
        %v624 = vsel %vm240, %v619, %v623
        %s625 = scalar_lea.vmem %s1, 4
        %v626 = vld [vmem:[%s625] sm:$0xf]
        %v627 = vunpack.c.l.b16 %v254
        %v628 = vunpack.c.l.b16 %v264
        %v629 = vunpack.c.l.b16 %v278
        %v630 = vunpack.c.l.b16 %v288
        %v631 = vunpack.c.l.b16 %v302
        %v632 = vunpack.c.l.b16 %v312
        %v633 = vunpack.c.l.b16 %v326
        %v634 = vunpack.c.l.b16 %v336
        %v635 = vunpack.c.l.b16 %v350
        %v636 = vunpack.c.l.b16 %v360
        %v637 = vunpack.c.l.b16 %v374
        %v638 = vunpack.c.l.b16 %v384
        %v639 = vunpack.c.l.b16 %v398
        %v640 = vunpack.c.l.b16 %v408
        %v641 = vunpack.c.l.b16 %v422
        %v642 = vunpack.c.l.b16 %v432
        %v643 = vunpack.c.l.b16 %v446
        %v644 = vunpack.c.l.b16 %v456
        %v645 = vunpack.c.l.b16 %v470
        %v646 = vunpack.c.l.b16 %v480
        %v647 = vunpack.c.l.b16 %v494
        %v648 = vunpack.c.l.b16 %v504
        %v649 = vunpack.c.l.b16 %v518
        %v650 = vunpack.c.l.b16 %v528
        %v651 = vunpack.c.l.b16 %v542
        %v652 = vunpack.c.l.b16 %v552
        %v653 = vunpack.c.l.b16 %v566
        %v654 = vunpack.c.l.b16 %v576
        %v655 = vunpack.c.l.b16 %v590
        %v656 = vunpack.c.l.b16 %v600
        %v657 = vunpack.c.l.b16 %v614
        %v658 = vunpack.c.l.b16 %v624
        %v659 = vpack.c.b16 %v628, %v627
        %v660 = vpack.c.b16 %v630, %v629
        %v661 = vpack.c.b16 %v632, %v631
        %v662 = vpack.c.b16 %v634, %v633
        %v663 = vpack.c.b16 %v636, %v635
        %v664 = vpack.c.b16 %v638, %v637
        %v665 = vpack.c.b16 %v640, %v639
        %v666 = vpack.c.b16 %v642, %v641
        %v667 = vpack.c.b16 %v644, %v643
        %v668 = vpack.c.b16 %v646, %v645
        %v669 = vpack.c.b16 %v648, %v647
        %v670 = vpack.c.b16 %v650, %v649
        %v671 = vpack.c.b16 %v652, %v651
        %v672 = vpack.c.b16 %v654, %v653
        %v673 = vpack.c.b16 %v656, %v655
        %v674 = vpack.c.b16 %v658, %v657
        %vm675 = vcmask 64512
        %v677 = vsel %vm675, %v659, 0
        %v680 = vsel %vm675, %v660, 0
        %v683 = vsel %vm675, %v661, 0
        %v686 = vsel %vm675, %v662, 0
        %v689 = vsel %vm675, %v663, 0
        %v692 = vsel %vm675, %v664, 0
        %v695 = vsel %vm675, %v665, 0
        %v698 = vsel %vm675, %v666, 0
        %v701 = vsel %vm675, %v667, 0
        %v704 = vsel %vm675, %v668, 0
        %v707 = vsel %vm675, %v669, 0
        %v710 = vsel %vm675, %v670, 0
        %v713 = vsel %vm675, %v671, 0
        %v716 = vsel %vm675, %v672, 0
        %v719 = vsel %vm675, %v673, 0
        %v722 = vsel %vm675, %v674, 0
        %vm724 = vcmask 1043456
        %v726 = vsel %vm724, %v626, 0
        %728 = vmatpush.bf16.msra.mxu0 0
        %729 = vmatpush.bf16.msra.mxu0 0
        %730 = vmatpush.bf16.msra.mxu0 0
        %731 = vmatpush.bf16.msra.mxu0 0
        %732 = vmatpush.bf16.msra.mxu0 0
        %733 = vmatpush.bf16.msra.mxu0 0
        %734 = vmatpush.bf16.msra.mxu0 0
        %735 = vmatpush.bf16.msra.mxu0 %v726
        %736 = vmatmul.bf16.gmra.mxu0 %v677
        %v737 = vpop.f32.mrf.mxu0
        %v738 = vadd.f32 0.0, %v737
        %v739 = vpop.f32.mrf.mxu0
        %v740 = vadd.f32 0.0, %v739
        %741 = vmatmul.bf16.gmra.mxu0 %v680
        %v742 = vpop.f32.mrf.mxu0
        %v743 = vadd.f32 0.0, %v742
        %v744 = vpop.f32.mrf.mxu0
        %v745 = vadd.f32 0.0, %v744
        %746 = vmatmul.bf16.gmra.mxu0 %v683
        %v747 = vpop.f32.mrf.mxu0
        %v748 = vadd.f32 0.0, %v747
        %v749 = vpop.f32.mrf.mxu0
        %v750 = vadd.f32 0.0, %v749
        %751 = vmatmul.bf16.gmra.mxu0 %v686
        %v752 = vpop.f32.mrf.mxu0
        %v753 = vadd.f32 0.0, %v752
        %v754 = vpop.f32.mrf.mxu0
        %v755 = vadd.f32 0.0, %v754
        %756 = vmatmul.bf16.gmra.mxu0 %v689
        %v757 = vpop.f32.mrf.mxu0
        %v758 = vadd.f32 0.0, %v757
        %v759 = vpop.f32.mrf.mxu0
        %v760 = vadd.f32 0.0, %v759
        %761 = vmatmul.bf16.gmra.mxu0 %v692
        %v762 = vpop.f32.mrf.mxu0
        %v763 = vadd.f32 0.0, %v762
        %v764 = vpop.f32.mrf.mxu0
        %v765 = vadd.f32 0.0, %v764
        %766 = vmatmul.bf16.gmra.mxu0 %v695
        %v767 = vpop.f32.mrf.mxu0
        %v768 = vadd.f32 0.0, %v767
        %v769 = vpop.f32.mrf.mxu0
        %v770 = vadd.f32 0.0, %v769
        %771 = vmatmul.bf16.gmra.mxu0 %v698
        %v772 = vpop.f32.mrf.mxu0
        %v773 = vadd.f32 0.0, %v772
        %v774 = vpop.f32.mrf.mxu0
        %v775 = vadd.f32 0.0, %v774
        %776 = vmatmul.bf16.gmra.mxu0 %v701
        %v777 = vpop.f32.mrf.mxu0
        %v778 = vadd.f32 0.0, %v777
        %v779 = vpop.f32.mrf.mxu0
        %v780 = vadd.f32 0.0, %v779
        %781 = vmatmul.bf16.gmra.mxu0 %v704
        %v782 = vpop.f32.mrf.mxu0
        %v783 = vadd.f32 0.0, %v782
        %v784 = vpop.f32.mrf.mxu0
        %v785 = vadd.f32 0.0, %v784
        %786 = vmatmul.bf16.gmra.mxu0 %v707
        %v787 = vpop.f32.mrf.mxu0
        %v788 = vadd.f32 0.0, %v787
        %v789 = vpop.f32.mrf.mxu0
        %v790 = vadd.f32 0.0, %v789
        %791 = vmatmul.bf16.gmra.mxu0 %v710
        %v792 = vpop.f32.mrf.mxu0
        %v793 = vadd.f32 0.0, %v792
        %v794 = vpop.f32.mrf.mxu0
        %v795 = vadd.f32 0.0, %v794
        %796 = vmatmul.bf16.gmra.mxu0 %v713
        %v797 = vpop.f32.mrf.mxu0
        %v798 = vadd.f32 0.0, %v797
        %v799 = vpop.f32.mrf.mxu0
        %v800 = vadd.f32 0.0, %v799
        %801 = vmatmul.bf16.gmra.mxu0 %v716
        %v802 = vpop.f32.mrf.mxu0
        %v803 = vadd.f32 0.0, %v802
        %v804 = vpop.f32.mrf.mxu0
        %v805 = vadd.f32 0.0, %v804
        %806 = vmatmul.bf16.gmra.mxu0 %v719
        %v807 = vpop.f32.mrf.mxu0
        %v808 = vadd.f32 0.0, %v807
        %v809 = vpop.f32.mrf.mxu0
        %v810 = vadd.f32 0.0, %v809
        %811 = vmatmul.bf16.gmra.mxu0 %v722
        %v812 = vpop.f32.mrf.mxu0
        %v813 = vadd.f32 0.0, %v812
        %v814 = vpop.f32.mrf.mxu0
        %v815 = vadd.f32 0.0, %v814
        %816 = vdwg.mxu0
        %v849 = vunpack.c.l.b16 %v189
        %v850 = vunpack.c.l.b16 %v190
        %v851 = vunpack.c.l.b16 %v191
        %v852 = vunpack.c.l.b16 %v192
        %v853 = vunpack.c.l.b16 %v193
        %v854 = vunpack.c.l.b16 %v194
        %v855 = vunpack.c.l.b16 %v195
        %v856 = vunpack.c.l.b16 %v196
        %v857 = vunpack.c.l.b16 %v197
        %v858 = vunpack.c.l.b16 %v198
        %v859 = vunpack.c.l.b16 %v199
        %v860 = vunpack.c.l.b16 %v200
        %v861 = vunpack.c.l.b16 %v201
        %v862 = vunpack.c.l.b16 %v202
        %v863 = vunpack.c.l.b16 %v203
        %v864 = vunpack.c.l.b16 %v204
        %v865 = vunpack.c.l.b16 %v205
        %v866 = vunpack.c.l.b16 %v206
        %v867 = vunpack.c.l.b16 %v207
        %v868 = vunpack.c.l.b16 %v208
        %v869 = vunpack.c.l.b16 %v209
        %v870 = vunpack.c.l.b16 %v210
        %v871 = vunpack.c.l.b16 %v211
        %v872 = vunpack.c.l.b16 %v212
        %v873 = vunpack.c.l.b16 %v213
        %v874 = vunpack.c.l.b16 %v214
        %v875 = vunpack.c.l.b16 %v215
        %v876 = vunpack.c.l.b16 %v216
        %v877 = vunpack.c.l.b16 %v217
        %v878 = vunpack.c.l.b16 %v218
        %v879 = vunpack.c.l.b16 %v219
        %v880 = vunpack.c.l.b16 %v220
        %v881 = vpack.c.b16 %v850, %v849
        %v882 = vpack.c.b16 %v852, %v851
        %v883 = vpack.c.b16 %v854, %v853
        %v884 = vpack.c.b16 %v856, %v855
        %v885 = vpack.c.b16 %v858, %v857
        %v886 = vpack.c.b16 %v860, %v859
        %v887 = vpack.c.b16 %v862, %v861
        %v888 = vpack.c.b16 %v864, %v863
        %v889 = vpack.c.b16 %v866, %v865
        %v890 = vpack.c.b16 %v868, %v867
        %v891 = vpack.c.b16 %v870, %v869
        %v892 = vpack.c.b16 %v872, %v871
        %v893 = vpack.c.b16 %v874, %v873
        %v894 = vpack.c.b16 %v876, %v875
        %v895 = vpack.c.b16 %v878, %v877
        %v896 = vpack.c.b16 %v880, %v879
        %v898 = vsel %vm675, %v881, 0
        %v901 = vsel %vm675, %v882, 0
        %v904 = vsel %vm675, %v883, 0
        %v907 = vsel %vm675, %v884, 0
        %v910 = vsel %vm675, %v885, 0
        %v913 = vsel %vm675, %v886, 0
        %v916 = vsel %vm675, %v887, 0
        %v919 = vsel %vm675, %v888, 0
        %v922 = vsel %vm675, %v889, 0
        %v925 = vsel %vm675, %v890, 0
        %v928 = vsel %vm675, %v891, 0
        %v931 = vsel %vm675, %v892, 0
        %v934 = vsel %vm675, %v893, 0
        %v937 = vsel %vm675, %v894, 0
        %v940 = vsel %vm675, %v895, 0
        %v943 = vsel %vm675, %v896, 0
        %v946 = vsel %vm724, %v221, 0
        %948 = vmatpush.bf16.msra.mxu0 0
        %949 = vmatpush.bf16.msra.mxu0 0
        %950 = vmatpush.bf16.msra.mxu0 0
        %951 = vmatpush.bf16.msra.mxu0 0
        %952 = vmatpush.bf16.msra.mxu0 0
        %953 = vmatpush.bf16.msra.mxu0 0
        %954 = vmatpush.bf16.msra.mxu0 0
        %955 = vmatpush.bf16.msra.mxu0 %v946
        %956 = vmatmul.bf16.gmra.mxu0 %v898
        %v957 = vpop.f32.mrf.mxu0
        %v958 = vadd.f32 %v738, %v957
        %v959 = vpop.f32.mrf.mxu0
        %v960 = vadd.f32 %v740, %v959
        %961 = vmatmul.bf16.gmra.mxu0 %v901
        %v962 = vpop.f32.mrf.mxu0
        %v963 = vadd.f32 %v743, %v962
        %v964 = vpop.f32.mrf.mxu0
        %v965 = vadd.f32 %v745, %v964
        %966 = vmatmul.bf16.gmra.mxu0 %v904
        %v967 = vpop.f32.mrf.mxu0
        %v968 = vadd.f32 %v748, %v967
        %v969 = vpop.f32.mrf.mxu0
        %v970 = vadd.f32 %v750, %v969
        %971 = vmatmul.bf16.gmra.mxu0 %v907
        %v972 = vpop.f32.mrf.mxu0
        %v973 = vadd.f32 %v753, %v972
        %v974 = vpop.f32.mrf.mxu0
        %v975 = vadd.f32 %v755, %v974
        %976 = vmatmul.bf16.gmra.mxu0 %v910
        %v977 = vpop.f32.mrf.mxu0
        %v978 = vadd.f32 %v758, %v977
        %v979 = vpop.f32.mrf.mxu0
        %v980 = vadd.f32 %v760, %v979
        %981 = vmatmul.bf16.gmra.mxu0 %v913
        %v982 = vpop.f32.mrf.mxu0
        %v983 = vadd.f32 %v763, %v982
        %v984 = vpop.f32.mrf.mxu0
        %v985 = vadd.f32 %v765, %v984
        %986 = vmatmul.bf16.gmra.mxu0 %v916
        %v987 = vpop.f32.mrf.mxu0
        %v988 = vadd.f32 %v768, %v987
        %v989 = vpop.f32.mrf.mxu0
        %v990 = vadd.f32 %v770, %v989
        %991 = vmatmul.bf16.gmra.mxu0 %v919
        %v992 = vpop.f32.mrf.mxu0
        %v993 = vadd.f32 %v773, %v992
        %v994 = vpop.f32.mrf.mxu0
        %v995 = vadd.f32 %v775, %v994
        %996 = vmatmul.bf16.gmra.mxu0 %v922
        %v997 = vpop.f32.mrf.mxu0
        %v998 = vadd.f32 %v778, %v997
        %v999 = vpop.f32.mrf.mxu0
        %v1000 = vadd.f32 %v780, %v999
        %1001 = vmatmul.bf16.gmra.mxu0 %v925
        %v1002 = vpop.f32.mrf.mxu0
        %v1003 = vadd.f32 %v783, %v1002
        %v1004 = vpop.f32.mrf.mxu0
        %v1005 = vadd.f32 %v785, %v1004
        %1006 = vmatmul.bf16.gmra.mxu0 %v928
        %v1007 = vpop.f32.mrf.mxu0
        %v1008 = vadd.f32 %v788, %v1007
        %v1009 = vpop.f32.mrf.mxu0
        %v1010 = vadd.f32 %v790, %v1009
        %1011 = vmatmul.bf16.gmra.mxu0 %v931
        %v1012 = vpop.f32.mrf.mxu0
        %v1013 = vadd.f32 %v793, %v1012
        %v1014 = vpop.f32.mrf.mxu0
        %v1015 = vadd.f32 %v795, %v1014
        %1016 = vmatmul.bf16.gmra.mxu0 %v934
        %v1017 = vpop.f32.mrf.mxu0
        %v1018 = vadd.f32 %v798, %v1017
        %v1019 = vpop.f32.mrf.mxu0
        %v1020 = vadd.f32 %v800, %v1019
        %1021 = vmatmul.bf16.gmra.mxu0 %v937
        %v1022 = vpop.f32.mrf.mxu0
        %v1023 = vadd.f32 %v803, %v1022
        %v1024 = vpop.f32.mrf.mxu0
        %v1025 = vadd.f32 %v805, %v1024
        %1026 = vmatmul.bf16.gmra.mxu0 %v940
        %v1027 = vpop.f32.mrf.mxu0
        %v1028 = vadd.f32 %v808, %v1027
        %v1029 = vpop.f32.mrf.mxu0
        %v1030 = vadd.f32 %v810, %v1029
        %1031 = vmatmul.bf16.gmra.mxu0 %v943
        %v1032 = vpop.f32.mrf.mxu0
        %v1033 = vadd.f32 %v813, %v1032
        %v1034 = vpop.f32.mrf.mxu0
        %v1035 = vadd.f32 %v815, %v1034
        %1036 = vdwg.mxu0
        %v1037 = vld [vmem:[%s188] sm:$0xe]
        %v1038 = vld [vmem:[%s188 + $0xc] sm:$0xe]
        %v1039 = vld [vmem:[%s188 + $0x18] sm:$0xe]
        %v1040 = vld [vmem:[%s188 + $0x24] sm:$0xe]
        %v1041 = vld [vmem:[%s188 + $0x30] sm:$0xe]
        %v1042 = vld [vmem:[%s188 + $0x3c] sm:$0xe]
        %v1043 = vld [vmem:[%s188 + $0x48] sm:$0xe]
        %v1044 = vld [vmem:[%s188 + $0x54] sm:$0xe]
        %v1045 = vld [vmem:[%s188 + $0x60] sm:$0xe]
        %v1046 = vld [vmem:[%s188 + $0x6c] sm:$0xe]
        %v1047 = vld [vmem:[%s188 + $0x78] sm:$0xe]
        %v1048 = vld [vmem:[%s188 + $0x84] sm:$0xe]
        %v1049 = vld [vmem:[%s188 + $0x90] sm:$0xe]
        %v1050 = vld [vmem:[%s188 + $0x9c] sm:$0xe]
        %v1051 = vld [vmem:[%s188 + $0xa8] sm:$0xe]
        %v1052 = vld [vmem:[%s188 + $0xb4] sm:$0xe]
        %vm1085 = vcmask 1042432
        %vm1086 = vcmask 1046532
        %vm1087 = vmor %vm1085, %vm1086
        %v1088 = vrot.slane %v1037, 5
        %v1089 = vrot.slane %v1088, 4
        %v1090 = vrot.slane %v190, 5
        %v1091 = vsel %vm1087, %v1089, %v1090
        %v1092 = vrot.slane %v1090, 4
        %v1093 = vrot.slane %v222, 5
        %v1094 = vsel %vm1087, %v1092, %v1093
        %v1095 = vrot.slane %v1038, 5
        %v1096 = vrot.slane %v1095, 4
        %v1097 = vrot.slane %v192, 5
        %v1098 = vsel %vm1087, %v1096, %v1097
        %v1099 = vrot.slane %v1097, 4
        %v1100 = vrot.slane %v223, 5
        %v1101 = vsel %vm1087, %v1099, %v1100
        %v1102 = vrot.slane %v1039, 5
        %v1103 = vrot.slane %v1102, 4
        %v1104 = vrot.slane %v194, 5
        %v1105 = vsel %vm1087, %v1103, %v1104
        %v1106 = vrot.slane %v1104, 4
        %v1107 = vrot.slane %v224, 5
        %v1108 = vsel %vm1087, %v1106, %v1107
        %v1109 = vrot.slane %v1040, 5
        %v1110 = vrot.slane %v1109, 4
        %v1111 = vrot.slane %v196, 5
        %v1112 = vsel %vm1087, %v1110, %v1111
        %v1113 = vrot.slane %v1111, 4
        %v1114 = vrot.slane %v225, 5
        %v1115 = vsel %vm1087, %v1113, %v1114
        %v1116 = vrot.slane %v1041, 5
        %v1117 = vrot.slane %v1116, 4
        %v1118 = vrot.slane %v198, 5
        %v1119 = vsel %vm1087, %v1117, %v1118
        %v1120 = vrot.slane %v1118, 4
        %v1121 = vrot.slane %v226, 5
        %v1122 = vsel %vm1087, %v1120, %v1121
        %v1123 = vrot.slane %v1042, 5
        %v1124 = vrot.slane %v1123, 4
        %v1125 = vrot.slane %v200, 5
        %v1126 = vsel %vm1087, %v1124, %v1125
        %v1127 = vrot.slane %v1125, 4
        %v1128 = vrot.slane %v227, 5
        %v1129 = vsel %vm1087, %v1127, %v1128
        %v1130 = vrot.slane %v1043, 5
        %v1131 = vrot.slane %v1130, 4
        %v1132 = vrot.slane %v202, 5
        %v1133 = vsel %vm1087, %v1131, %v1132
        %v1134 = vrot.slane %v1132, 4
        %v1135 = vrot.slane %v228, 5
        %v1136 = vsel %vm1087, %v1134, %v1135
        %v1137 = vrot.slane %v1044, 5
        %v1138 = vrot.slane %v1137, 4
        %v1139 = vrot.slane %v204, 5
        %v1140 = vsel %vm1087, %v1138, %v1139
        %v1141 = vrot.slane %v1139, 4
        %v1142 = vrot.slane %v229, 5
        %v1143 = vsel %vm1087, %v1141, %v1142
        %v1144 = vrot.slane %v1045, 5
        %v1145 = vrot.slane %v1144, 4
        %v1146 = vrot.slane %v206, 5
        %v1147 = vsel %vm1087, %v1145, %v1146
        %v1148 = vrot.slane %v1146, 4
        %v1149 = vrot.slane %v230, 5
        %v1150 = vsel %vm1087, %v1148, %v1149
        %v1151 = vrot.slane %v1046, 5
        %v1152 = vrot.slane %v1151, 4
        %v1153 = vrot.slane %v208, 5
        %v1154 = vsel %vm1087, %v1152, %v1153
        %v1155 = vrot.slane %v1153, 4
        %v1156 = vrot.slane %v231, 5
        %v1157 = vsel %vm1087, %v1155, %v1156
        %v1158 = vrot.slane %v1047, 5
        %v1159 = vrot.slane %v1158, 4
        %v1160 = vrot.slane %v210, 5
        %v1161 = vsel %vm1087, %v1159, %v1160
        %v1162 = vrot.slane %v1160, 4
        %v1163 = vrot.slane %v232, 5
        %v1164 = vsel %vm1087, %v1162, %v1163
        %v1165 = vrot.slane %v1048, 5
        %v1166 = vrot.slane %v1165, 4
        %v1167 = vrot.slane %v212, 5
        %v1168 = vsel %vm1087, %v1166, %v1167
        %v1169 = vrot.slane %v1167, 4
        %v1170 = vrot.slane %v233, 5
        %v1171 = vsel %vm1087, %v1169, %v1170
        %v1172 = vrot.slane %v1049, 5
        %v1173 = vrot.slane %v1172, 4
        %v1174 = vrot.slane %v214, 5
        %v1175 = vsel %vm1087, %v1173, %v1174
        %v1176 = vrot.slane %v1174, 4
        %v1177 = vrot.slane %v234, 5
        %v1178 = vsel %vm1087, %v1176, %v1177
        %v1179 = vrot.slane %v1050, 5
        %v1180 = vrot.slane %v1179, 4
        %v1181 = vrot.slane %v216, 5
        %v1182 = vsel %vm1087, %v1180, %v1181
        %v1183 = vrot.slane %v1181, 4
        %v1184 = vrot.slane %v235, 5
        %v1185 = vsel %vm1087, %v1183, %v1184
        %v1186 = vrot.slane %v1051, 5
        %v1187 = vrot.slane %v1186, 4
        %v1188 = vrot.slane %v218, 5
        %v1189 = vsel %vm1087, %v1187, %v1188
        %v1190 = vrot.slane %v1188, 4
        %v1191 = vrot.slane %v236, 5
        %v1192 = vsel %vm1087, %v1190, %v1191
        %v1193 = vrot.slane %v1052, 5
        %v1194 = vrot.slane %v1193, 4
        %v1195 = vrot.slane %v220, 5
        %v1196 = vsel %vm1087, %v1194, %v1195
        %v1197 = vrot.slane %v1195, 4
        %v1198 = vrot.slane %v237, 5
        %v1199 = vsel %vm1087, %v1197, %v1198
        %s1200 = scalar_lea.vmem %s1, 8
        %v1201 = vld [vmem:[%s1200] sm:$0xf]
        %v1202 = vunpack.c.l.b16 %v1091
        %v1203 = vunpack.c.l.b16 %v1094
        %v1204 = vunpack.c.l.b16 %v1098
        %v1205 = vunpack.c.l.b16 %v1101
        %v1206 = vunpack.c.l.b16 %v1105
        %v1207 = vunpack.c.l.b16 %v1108
        %v1208 = vunpack.c.l.b16 %v1112
        %v1209 = vunpack.c.l.b16 %v1115
        %v1210 = vunpack.c.l.b16 %v1119
        %v1211 = vunpack.c.l.b16 %v1122
        %v1212 = vunpack.c.l.b16 %v1126
        %v1213 = vunpack.c.l.b16 %v1129
        %v1214 = vunpack.c.l.b16 %v1133
        %v1215 = vunpack.c.l.b16 %v1136
        %v1216 = vunpack.c.l.b16 %v1140
        %v1217 = vunpack.c.l.b16 %v1143
        %v1218 = vunpack.c.l.b16 %v1147
        %v1219 = vunpack.c.l.b16 %v1150
        %v1220 = vunpack.c.l.b16 %v1154
        %v1221 = vunpack.c.l.b16 %v1157
        %v1222 = vunpack.c.l.b16 %v1161
        %v1223 = vunpack.c.l.b16 %v1164
        %v1224 = vunpack.c.l.b16 %v1168
        %v1225 = vunpack.c.l.b16 %v1171
        %v1226 = vunpack.c.l.b16 %v1175
        %v1227 = vunpack.c.l.b16 %v1178
        %v1228 = vunpack.c.l.b16 %v1182
        %v1229 = vunpack.c.l.b16 %v1185
        %v1230 = vunpack.c.l.b16 %v1189
        %v1231 = vunpack.c.l.b16 %v1192
        %v1232 = vunpack.c.l.b16 %v1196
        %v1233 = vunpack.c.l.b16 %v1199
        %v1234 = vpack.c.b16 %v1203, %v1202
        %v1235 = vpack.c.b16 %v1205, %v1204
        %v1236 = vpack.c.b16 %v1207, %v1206
        %v1237 = vpack.c.b16 %v1209, %v1208
        %v1238 = vpack.c.b16 %v1211, %v1210
        %v1239 = vpack.c.b16 %v1213, %v1212
        %v1240 = vpack.c.b16 %v1215, %v1214
        %v1241 = vpack.c.b16 %v1217, %v1216
        %v1242 = vpack.c.b16 %v1219, %v1218
        %v1243 = vpack.c.b16 %v1221, %v1220
        %v1244 = vpack.c.b16 %v1223, %v1222
        %v1245 = vpack.c.b16 %v1225, %v1224
        %v1246 = vpack.c.b16 %v1227, %v1226
        %v1247 = vpack.c.b16 %v1229, %v1228
        %v1248 = vpack.c.b16 %v1231, %v1230
        %v1249 = vpack.c.b16 %v1233, %v1232
        %v1251 = vsel %vm675, %v1234, 0
        %v1254 = vsel %vm675, %v1235, 0
        %v1257 = vsel %vm675, %v1236, 0
        %v1260 = vsel %vm675, %v1237, 0
        %v1263 = vsel %vm675, %v1238, 0
        %v1266 = vsel %vm675, %v1239, 0
        %v1269 = vsel %vm675, %v1240, 0
        %v1272 = vsel %vm675, %v1241, 0
        %v1275 = vsel %vm675, %v1242, 0
        %v1278 = vsel %vm675, %v1243, 0
        %v1281 = vsel %vm675, %v1244, 0
        %v1284 = vsel %vm675, %v1245, 0
        %v1287 = vsel %vm675, %v1246, 0
        %v1290 = vsel %vm675, %v1247, 0
        %v1293 = vsel %vm675, %v1248, 0
        %v1296 = vsel %vm675, %v1249, 0
        %v1299 = vsel %vm724, %v1201, 0
        %1301 = vmatpush.bf16.msra.mxu0 0
        %1302 = vmatpush.bf16.msra.mxu0 0
        %1303 = vmatpush.bf16.msra.mxu0 0
        %1304 = vmatpush.bf16.msra.mxu0 0
        %1305 = vmatpush.bf16.msra.mxu0 0
        %1306 = vmatpush.bf16.msra.mxu0 0
        %1307 = vmatpush.bf16.msra.mxu0 0
        %1308 = vmatpush.bf16.msra.mxu0 %v1299
        %1309 = vmatmul.bf16.gmra.mxu0 %v1251
        %v1310 = vpop.f32.mrf.mxu0
        %v1311 = vadd.f32 0.0, %v1310
        %v1312 = vpop.f32.mrf.mxu0
        %v1313 = vadd.f32 0.0, %v1312
        %1314 = vmatmul.bf16.gmra.mxu0 %v1254
        %v1315 = vpop.f32.mrf.mxu0
        %v1316 = vadd.f32 0.0, %v1315
        %v1317 = vpop.f32.mrf.mxu0
        %v1318 = vadd.f32 0.0, %v1317
        %1319 = vmatmul.bf16.gmra.mxu0 %v1257
        %v1320 = vpop.f32.mrf.mxu0
        %v1321 = vadd.f32 0.0, %v1320
        %v1322 = vpop.f32.mrf.mxu0
        %v1323 = vadd.f32 0.0, %v1322
        %1324 = vmatmul.bf16.gmra.mxu0 %v1260
        %v1325 = vpop.f32.mrf.mxu0
        %v1326 = vadd.f32 0.0, %v1325
        %v1327 = vpop.f32.mrf.mxu0
        %v1328 = vadd.f32 0.0, %v1327
        %1329 = vmatmul.bf16.gmra.mxu0 %v1263
        %v1330 = vpop.f32.mrf.mxu0
        %v1331 = vadd.f32 0.0, %v1330
        %v1332 = vpop.f32.mrf.mxu0
        %v1333 = vadd.f32 0.0, %v1332
        %1334 = vmatmul.bf16.gmra.mxu0 %v1266
        %v1335 = vpop.f32.mrf.mxu0
        %v1336 = vadd.f32 0.0, %v1335
        %v1337 = vpop.f32.mrf.mxu0
        %v1338 = vadd.f32 0.0, %v1337
        %1339 = vmatmul.bf16.gmra.mxu0 %v1269
        %v1340 = vpop.f32.mrf.mxu0
        %v1341 = vadd.f32 0.0, %v1340
        %v1342 = vpop.f32.mrf.mxu0
        %v1343 = vadd.f32 0.0, %v1342
        %1344 = vmatmul.bf16.gmra.mxu0 %v1272
        %v1345 = vpop.f32.mrf.mxu0
        %v1346 = vadd.f32 0.0, %v1345
        %v1347 = vpop.f32.mrf.mxu0
        %v1348 = vadd.f32 0.0, %v1347
        %1349 = vmatmul.bf16.gmra.mxu0 %v1275
        %v1350 = vpop.f32.mrf.mxu0
        %v1351 = vadd.f32 0.0, %v1350
        %v1352 = vpop.f32.mrf.mxu0
        %v1353 = vadd.f32 0.0, %v1352
        %1354 = vmatmul.bf16.gmra.mxu0 %v1278
        %v1355 = vpop.f32.mrf.mxu0
        %v1356 = vadd.f32 0.0, %v1355
        %v1357 = vpop.f32.mrf.mxu0
        %v1358 = vadd.f32 0.0, %v1357
        %1359 = vmatmul.bf16.gmra.mxu0 %v1281
        %v1360 = vpop.f32.mrf.mxu0
        %v1361 = vadd.f32 0.0, %v1360
        %v1362 = vpop.f32.mrf.mxu0
        %v1363 = vadd.f32 0.0, %v1362
        %1364 = vmatmul.bf16.gmra.mxu0 %v1284
        %v1365 = vpop.f32.mrf.mxu0
        %v1366 = vadd.f32 0.0, %v1365
        %v1367 = vpop.f32.mrf.mxu0
        %v1368 = vadd.f32 0.0, %v1367
        %1369 = vmatmul.bf16.gmra.mxu0 %v1287
        %v1370 = vpop.f32.mrf.mxu0
        %v1371 = vadd.f32 0.0, %v1370
        %v1372 = vpop.f32.mrf.mxu0
        %v1373 = vadd.f32 0.0, %v1372
        %1374 = vmatmul.bf16.gmra.mxu0 %v1290
        %v1375 = vpop.f32.mrf.mxu0
        %v1376 = vadd.f32 0.0, %v1375
        %v1377 = vpop.f32.mrf.mxu0
        %v1378 = vadd.f32 0.0, %v1377
        %1379 = vmatmul.bf16.gmra.mxu0 %v1293
        %v1380 = vpop.f32.mrf.mxu0
        %v1381 = vadd.f32 0.0, %v1380
        %v1382 = vpop.f32.mrf.mxu0
        %v1383 = vadd.f32 0.0, %v1382
        %1384 = vmatmul.bf16.gmra.mxu0 %v1296
        %v1385 = vpop.f32.mrf.mxu0
        %v1386 = vadd.f32 0.0, %v1385
        %v1387 = vpop.f32.mrf.mxu0
        %v1388 = vadd.f32 0.0, %v1387
        %1389 = vdwg.mxu0
        %v1390 = vadd.f32 %v958, %v1311
        %v1391 = vadd.f32 %v960, %v1313
        %v1392 = vadd.f32 %v963, %v1316
        %v1393 = vadd.f32 %v965, %v1318
        %v1394 = vadd.f32 %v968, %v1321
        %v1395 = vadd.f32 %v970, %v1323
        %v1396 = vadd.f32 %v973, %v1326
        %v1397 = vadd.f32 %v975, %v1328
        %v1398 = vadd.f32 %v978, %v1331
        %v1399 = vadd.f32 %v980, %v1333
        %v1400 = vadd.f32 %v983, %v1336
        %v1401 = vadd.f32 %v985, %v1338
        %v1402 = vadd.f32 %v988, %v1341
        %v1403 = vadd.f32 %v990, %v1343
        %v1404 = vadd.f32 %v993, %v1346
        %v1405 = vadd.f32 %v995, %v1348
        %v1406 = vadd.f32 %v998, %v1351
        %v1407 = vadd.f32 %v1000, %v1353
        %v1408 = vadd.f32 %v1003, %v1356
        %v1409 = vadd.f32 %v1005, %v1358
        %v1410 = vadd.f32 %v1008, %v1361
        %v1411 = vadd.f32 %v1010, %v1363
        %v1412 = vadd.f32 %v1013, %v1366
        %v1413 = vadd.f32 %v1015, %v1368
        %v1414 = vadd.f32 %v1018, %v1371
        %v1415 = vadd.f32 %v1020, %v1373
        %v1416 = vadd.f32 %v1023, %v1376
        %v1417 = vadd.f32 %v1025, %v1378
        %v1418 = vadd.f32 %v1028, %v1381
        %v1419 = vadd.f32 %v1030, %v1383
        %v1420 = vadd.f32 %v1033, %v1386
        %v1421 = vadd.f32 %v1035, %v1388
        %s1422 = sadd.s32 %s185, 1
        %s1423 = smul.u32 %s1422, 3
        %s1424 = smul.addr %s1423, 4
        %s1425 = scalar_lea.vmem %s182, %s1424
        %v1426 = vld [vmem:[%s1425] sm:$0xf]
        %v1427 = vld [vmem:[%s1425 + $0x4] sm:$0xf]
        %v1428 = vld [vmem:[%s1425 + $0xc] sm:$0xf]
        %v1429 = vld [vmem:[%s1425 + $0x10] sm:$0xf]
        %v1430 = vld [vmem:[%s1425 + $0x18] sm:$0xf]
        %v1431 = vld [vmem:[%s1425 + $0x1c] sm:$0xf]
        %v1432 = vld [vmem:[%s1425 + $0x24] sm:$0xf]
        %v1433 = vld [vmem:[%s1425 + $0x28] sm:$0xf]
        %v1434 = vld [vmem:[%s1425 + $0x30] sm:$0xf]
        %v1435 = vld [vmem:[%s1425 + $0x34] sm:$0xf]
        %v1436 = vld [vmem:[%s1425 + $0x3c] sm:$0xf]
        %v1437 = vld [vmem:[%s1425 + $0x40] sm:$0xf]
        %v1438 = vld [vmem:[%s1425 + $0x48] sm:$0xf]
        %v1439 = vld [vmem:[%s1425 + $0x4c] sm:$0xf]
        %v1440 = vld [vmem:[%s1425 + $0x54] sm:$0xf]
        %v1441 = vld [vmem:[%s1425 + $0x58] sm:$0xf]
        %v1442 = vld [vmem:[%s1425 + $0x60] sm:$0xf]
        %v1443 = vld [vmem:[%s1425 + $0x64] sm:$0xf]
        %v1444 = vld [vmem:[%s1425 + $0x6c] sm:$0xf]
        %v1445 = vld [vmem:[%s1425 + $0x70] sm:$0xf]
        %v1446 = vld [vmem:[%s1425 + $0x78] sm:$0xf]
        %v1447 = vld [vmem:[%s1425 + $0x7c] sm:$0xf]
        %v1448 = vld [vmem:[%s1425 + $0x84] sm:$0xf]
        %v1449 = vld [vmem:[%s1425 + $0x88] sm:$0xf]
        %v1450 = vld [vmem:[%s1425 + $0x90] sm:$0xf]
        %v1451 = vld [vmem:[%s1425 + $0x94] sm:$0xf]
        %v1452 = vld [vmem:[%s1425 + $0x9c] sm:$0xf]
        %v1453 = vld [vmem:[%s1425 + $0xa0] sm:$0xf]
        %v1454 = vld [vmem:[%s1425 + $0xa8] sm:$0xf]
        %v1455 = vld [vmem:[%s1425 + $0xac] sm:$0xf]
        %v1456 = vld [vmem:[%s1425 + $0xb4] sm:$0xf]
        %v1457 = vld [vmem:[%s1425 + $0xb8] sm:$0xf]
        %s1458 = scalar_lea.vmem %s1, 12
        %v1459 = vld [vmem:[%s1458] sm:$0xf]
        %v1492 = vunpack.c.l.b16 %v1426
        %v1493 = vunpack.c.l.b16 %v1427
        %v1494 = vunpack.c.l.b16 %v1428
        %v1495 = vunpack.c.l.b16 %v1429
        %v1496 = vunpack.c.l.b16 %v1430
        %v1497 = vunpack.c.l.b16 %v1431
        %v1498 = vunpack.c.l.b16 %v1432
        %v1499 = vunpack.c.l.b16 %v1433
        %v1500 = vunpack.c.l.b16 %v1434
        %v1501 = vunpack.c.l.b16 %v1435
        %v1502 = vunpack.c.l.b16 %v1436
        %v1503 = vunpack.c.l.b16 %v1437
        %v1504 = vunpack.c.l.b16 %v1438
        %v1505 = vunpack.c.l.b16 %v1439
        %v1506 = vunpack.c.l.b16 %v1440
        %v1507 = vunpack.c.l.b16 %v1441
        %v1508 = vunpack.c.l.b16 %v1442
        %v1509 = vunpack.c.l.b16 %v1443
        %v1510 = vunpack.c.l.b16 %v1444
        %v1511 = vunpack.c.l.b16 %v1445
        %v1512 = vunpack.c.l.b16 %v1446
        %v1513 = vunpack.c.l.b16 %v1447
        %v1514 = vunpack.c.l.b16 %v1448
        %v1515 = vunpack.c.l.b16 %v1449
        %v1516 = vunpack.c.l.b16 %v1450
        %v1517 = vunpack.c.l.b16 %v1451
        %v1518 = vunpack.c.l.b16 %v1452
        %v1519 = vunpack.c.l.b16 %v1453
        %v1520 = vunpack.c.l.b16 %v1454
        %v1521 = vunpack.c.l.b16 %v1455
        %v1522 = vunpack.c.l.b16 %v1456
        %v1523 = vunpack.c.l.b16 %v1457
        %v1524 = vpack.c.b16 %v1493, %v1492
        %v1525 = vpack.c.b16 %v1495, %v1494
        %v1526 = vpack.c.b16 %v1497, %v1496
        %v1527 = vpack.c.b16 %v1499, %v1498
        %v1528 = vpack.c.b16 %v1501, %v1500
        %v1529 = vpack.c.b16 %v1503, %v1502
        %v1530 = vpack.c.b16 %v1505, %v1504
        %v1531 = vpack.c.b16 %v1507, %v1506
        %v1532 = vpack.c.b16 %v1509, %v1508
        %v1533 = vpack.c.b16 %v1511, %v1510
        %v1534 = vpack.c.b16 %v1513, %v1512
        %v1535 = vpack.c.b16 %v1515, %v1514
        %v1536 = vpack.c.b16 %v1517, %v1516
        %v1537 = vpack.c.b16 %v1519, %v1518
        %v1538 = vpack.c.b16 %v1521, %v1520
        %v1539 = vpack.c.b16 %v1523, %v1522
        %v1541 = vsel %vm675, %v1524, 0
        %v1544 = vsel %vm675, %v1525, 0
        %v1547 = vsel %vm675, %v1526, 0
        %v1550 = vsel %vm675, %v1527, 0
        %v1553 = vsel %vm675, %v1528, 0
        %v1556 = vsel %vm675, %v1529, 0
        %v1559 = vsel %vm675, %v1530, 0
        %v1562 = vsel %vm675, %v1531, 0
        %v1565 = vsel %vm675, %v1532, 0
        %v1568 = vsel %vm675, %v1533, 0
        %v1571 = vsel %vm675, %v1534, 0
        %v1574 = vsel %vm675, %v1535, 0
        %v1577 = vsel %vm675, %v1536, 0
        %v1580 = vsel %vm675, %v1537, 0
        %v1583 = vsel %vm675, %v1538, 0
        %v1586 = vsel %vm675, %v1539, 0
        %v1589 = vsel %vm724, %v1459, 0
        %1591 = vmatpush.bf16.msra.mxu0 0
        %1592 = vmatpush.bf16.msra.mxu0 0
        %1593 = vmatpush.bf16.msra.mxu0 0
        %1594 = vmatpush.bf16.msra.mxu0 0
        %1595 = vmatpush.bf16.msra.mxu0 0
        %1596 = vmatpush.bf16.msra.mxu0 0
        %1597 = vmatpush.bf16.msra.mxu0 0
        %1598 = vmatpush.bf16.msra.mxu0 %v1589
        %1599 = vmatmul.bf16.gmra.mxu0 %v1541
        %v1600 = vpop.f32.mrf.mxu0
        %v1601 = vadd.f32 0.0, %v1600
        %v1602 = vpop.f32.mrf.mxu0
        %v1603 = vadd.f32 0.0, %v1602
        %1604 = vmatmul.bf16.gmra.mxu0 %v1544
        %v1605 = vpop.f32.mrf.mxu0
        %v1606 = vadd.f32 0.0, %v1605
        %v1607 = vpop.f32.mrf.mxu0
        %v1608 = vadd.f32 0.0, %v1607
        %1609 = vmatmul.bf16.gmra.mxu0 %v1547
        %v1610 = vpop.f32.mrf.mxu0
        %v1611 = vadd.f32 0.0, %v1610
        %v1612 = vpop.f32.mrf.mxu0
        %v1613 = vadd.f32 0.0, %v1612
        %1614 = vmatmul.bf16.gmra.mxu0 %v1550
        %v1615 = vpop.f32.mrf.mxu0
        %v1616 = vadd.f32 0.0, %v1615
        %v1617 = vpop.f32.mrf.mxu0
        %v1618 = vadd.f32 0.0, %v1617
        %1619 = vmatmul.bf16.gmra.mxu0 %v1553
        %v1620 = vpop.f32.mrf.mxu0
        %v1621 = vadd.f32 0.0, %v1620
        %v1622 = vpop.f32.mrf.mxu0
        %v1623 = vadd.f32 0.0, %v1622
        %1624 = vmatmul.bf16.gmra.mxu0 %v1556
        %v1625 = vpop.f32.mrf.mxu0
        %v1626 = vadd.f32 0.0, %v1625
        %v1627 = vpop.f32.mrf.mxu0
        %v1628 = vadd.f32 0.0, %v1627
        %1629 = vmatmul.bf16.gmra.mxu0 %v1559
        %v1630 = vpop.f32.mrf.mxu0
        %v1631 = vadd.f32 0.0, %v1630
        %v1632 = vpop.f32.mrf.mxu0
        %v1633 = vadd.f32 0.0, %v1632
        %1634 = vmatmul.bf16.gmra.mxu0 %v1562
        %v1635 = vpop.f32.mrf.mxu0
        %v1636 = vadd.f32 0.0, %v1635
        %v1637 = vpop.f32.mrf.mxu0
        %v1638 = vadd.f32 0.0, %v1637
        %1639 = vmatmul.bf16.gmra.mxu0 %v1565
        %v1640 = vpop.f32.mrf.mxu0
        %v1641 = vadd.f32 0.0, %v1640
        %v1642 = vpop.f32.mrf.mxu0
        %v1643 = vadd.f32 0.0, %v1642
        %1644 = vmatmul.bf16.gmra.mxu0 %v1568
        %v1645 = vpop.f32.mrf.mxu0
        %v1646 = vadd.f32 0.0, %v1645
        %v1647 = vpop.f32.mrf.mxu0
        %v1648 = vadd.f32 0.0, %v1647
        %1649 = vmatmul.bf16.gmra.mxu0 %v1571
        %v1650 = vpop.f32.mrf.mxu0
        %v1651 = vadd.f32 0.0, %v1650
        %v1652 = vpop.f32.mrf.mxu0
        %v1653 = vadd.f32 0.0, %v1652
        %1654 = vmatmul.bf16.gmra.mxu0 %v1574
        %v1655 = vpop.f32.mrf.mxu0
        %v1656 = vadd.f32 0.0, %v1655
        %v1657 = vpop.f32.mrf.mxu0
        %v1658 = vadd.f32 0.0, %v1657
        %1659 = vmatmul.bf16.gmra.mxu0 %v1577
        %v1660 = vpop.f32.mrf.mxu0
        %v1661 = vadd.f32 0.0, %v1660
        %v1662 = vpop.f32.mrf.mxu0
        %v1663 = vadd.f32 0.0, %v1662
        %1664 = vmatmul.bf16.gmra.mxu0 %v1580
        %v1665 = vpop.f32.mrf.mxu0
        %v1666 = vadd.f32 0.0, %v1665
        %v1667 = vpop.f32.mrf.mxu0
        %v1668 = vadd.f32 0.0, %v1667
        %1669 = vmatmul.bf16.gmra.mxu0 %v1583
        %v1670 = vpop.f32.mrf.mxu0
        %v1671 = vadd.f32 0.0, %v1670
        %v1672 = vpop.f32.mrf.mxu0
        %v1673 = vadd.f32 0.0, %v1672
        %1674 = vmatmul.bf16.gmra.mxu0 %v1586
        %v1675 = vpop.f32.mrf.mxu0
        %v1676 = vadd.f32 0.0, %v1675
        %v1677 = vpop.f32.mrf.mxu0
        %v1678 = vadd.f32 0.0, %v1677
        %1679 = vdwg.mxu0
        %v1680 = vadd.f32 %v1390, %v1601
        %v1681 = vadd.f32 %v1391, %v1603
        %v1682 = vadd.f32 %v1392, %v1606
        %v1683 = vadd.f32 %v1393, %v1608
        %v1684 = vadd.f32 %v1394, %v1611
        %v1685 = vadd.f32 %v1395, %v1613
        %v1686 = vadd.f32 %v1396, %v1616
        %v1687 = vadd.f32 %v1397, %v1618
        %v1688 = vadd.f32 %v1398, %v1621
        %v1689 = vadd.f32 %v1399, %v1623
        %v1690 = vadd.f32 %v1400, %v1626
        %v1691 = vadd.f32 %v1401, %v1628
        %v1692 = vadd.f32 %v1402, %v1631
        %v1693 = vadd.f32 %v1403, %v1633
        %v1694 = vadd.f32 %v1404, %v1636
        %v1695 = vadd.f32 %v1405, %v1638
        %v1696 = vadd.f32 %v1406, %v1641
        %v1697 = vadd.f32 %v1407, %v1643
        %v1698 = vadd.f32 %v1408, %v1646
        %v1699 = vadd.f32 %v1409, %v1648
        %v1700 = vadd.f32 %v1410, %v1651
        %v1701 = vadd.f32 %v1411, %v1653
        %v1702 = vadd.f32 %v1412, %v1656
        %v1703 = vadd.f32 %v1413, %v1658
        %v1704 = vadd.f32 %v1414, %v1661
        %v1705 = vadd.f32 %v1415, %v1663
        %v1706 = vadd.f32 %v1416, %v1666
        %v1707 = vadd.f32 %v1417, %v1668
        %v1708 = vadd.f32 %v1418, %v1671
        %v1709 = vadd.f32 %v1419, %v1673
        %v1710 = vadd.f32 %v1420, %v1676
        %v1711 = vadd.f32 %v1421, %v1678
        %v1712 = vld [vmem:[%s1425] sm:$0xf]
        %v1713 = vld [vmem:[%s1425 + $0x4] sm:$0xf]
        %v1714 = vld [vmem:[%s1425 + $0x8] sm:$0x1]
        %v1715 = vld [vmem:[%s1425 + $0xc] sm:$0xf]
        %v1716 = vld [vmem:[%s1425 + $0x10] sm:$0xf]
        %v1717 = vld [vmem:[%s1425 + $0x14] sm:$0x1]
        %v1718 = vld [vmem:[%s1425 + $0x18] sm:$0xf]
        %v1719 = vld [vmem:[%s1425 + $0x1c] sm:$0xf]
        %v1720 = vld [vmem:[%s1425 + $0x20] sm:$0x1]
        %v1721 = vld [vmem:[%s1425 + $0x24] sm:$0xf]
        %v1722 = vld [vmem:[%s1425 + $0x28] sm:$0xf]
        %v1723 = vld [vmem:[%s1425 + $0x2c] sm:$0x1]
        %v1724 = vld [vmem:[%s1425 + $0x30] sm:$0xf]
        %v1725 = vld [vmem:[%s1425 + $0x34] sm:$0xf]
        %v1726 = vld [vmem:[%s1425 + $0x38] sm:$0x1]
        %v1727 = vld [vmem:[%s1425 + $0x3c] sm:$0xf]
        %v1728 = vld [vmem:[%s1425 + $0x40] sm:$0xf]
        %v1729 = vld [vmem:[%s1425 + $0x44] sm:$0x1]
        %v1730 = vld [vmem:[%s1425 + $0x48] sm:$0xf]
        %v1731 = vld [vmem:[%s1425 + $0x4c] sm:$0xf]
        %v1732 = vld [vmem:[%s1425 + $0x50] sm:$0x1]
        %v1733 = vld [vmem:[%s1425 + $0x54] sm:$0xf]
        %v1734 = vld [vmem:[%s1425 + $0x58] sm:$0xf]
        %v1735 = vld [vmem:[%s1425 + $0x5c] sm:$0x1]
        %v1736 = vld [vmem:[%s1425 + $0x60] sm:$0xf]
        %v1737 = vld [vmem:[%s1425 + $0x64] sm:$0xf]
        %v1738 = vld [vmem:[%s1425 + $0x68] sm:$0x1]
        %v1739 = vld [vmem:[%s1425 + $0x6c] sm:$0xf]
        %v1740 = vld [vmem:[%s1425 + $0x70] sm:$0xf]
        %v1741 = vld [vmem:[%s1425 + $0x74] sm:$0x1]
        %v1742 = vld [vmem:[%s1425 + $0x78] sm:$0xf]
        %v1743 = vld [vmem:[%s1425 + $0x7c] sm:$0xf]
        %v1744 = vld [vmem:[%s1425 + $0x80] sm:$0x1]
        %v1745 = vld [vmem:[%s1425 + $0x84] sm:$0xf]
        %v1746 = vld [vmem:[%s1425 + $0x88] sm:$0xf]
        %v1747 = vld [vmem:[%s1425 + $0x8c] sm:$0x1]
        %v1748 = vld [vmem:[%s1425 + $0x90] sm:$0xf]
        %v1749 = vld [vmem:[%s1425 + $0x94] sm:$0xf]
        %v1750 = vld [vmem:[%s1425 + $0x98] sm:$0x1]
        %v1751 = vld [vmem:[%s1425 + $0x9c] sm:$0xf]
        %v1752 = vld [vmem:[%s1425 + $0xa0] sm:$0xf]
        %v1753 = vld [vmem:[%s1425 + $0xa4] sm:$0x1]
        %v1754 = vld [vmem:[%s1425 + $0xa8] sm:$0xf]
        %v1755 = vld [vmem:[%s1425 + $0xac] sm:$0xf]
        %v1756 = vld [vmem:[%s1425 + $0xb0] sm:$0x1]
        %v1757 = vld [vmem:[%s1425 + $0xb4] sm:$0xf]
        %v1758 = vld [vmem:[%s1425 + $0xb8] sm:$0xf]
        %v1759 = vld [vmem:[%s1425 + $0xbc] sm:$0x1]
        %v1761 = vshrl.u32 %v1712, 16
        %v1763 = vrot.slane %v1761, 4
        %v1764 = vshll.u32 %v1712, 16
        %v1766 = vrot.slane %v1764, 5
        %v1767 = vor.u32 %v1763, %v1766
        %v1768 = vrot.slane %v1767, 4
        %v1770 = vshll.u32 %v1713, 16
        %v1772 = vrot.slane %v1770, 5
        %v1773 = vsel %vm240, %v1768, %v1772
        %v1774 = vshrl.u32 %v1713, 16
        %v1776 = vrot.slane %v1774, 4
        %v1777 = vor.u32 %v1776, %v1772
        %v1778 = vrot.slane %v1777, 4
        %v1780 = vshll.u32 %v1714, 16
        %v1782 = vrot.slane %v1780, 5
        %v1783 = vsel %vm240, %v1778, %v1782
        %v1785 = vshrl.u32 %v1715, 16
        %v1787 = vrot.slane %v1785, 4
        %v1788 = vshll.u32 %v1715, 16
        %v1790 = vrot.slane %v1788, 5
        %v1791 = vor.u32 %v1787, %v1790
        %v1792 = vrot.slane %v1791, 4
        %v1794 = vshll.u32 %v1716, 16
        %v1796 = vrot.slane %v1794, 5
        %v1797 = vsel %vm240, %v1792, %v1796
        %v1798 = vshrl.u32 %v1716, 16
        %v1800 = vrot.slane %v1798, 4
        %v1801 = vor.u32 %v1800, %v1796
        %v1802 = vrot.slane %v1801, 4
        %v1804 = vshll.u32 %v1717, 16
        %v1806 = vrot.slane %v1804, 5
        %v1807 = vsel %vm240, %v1802, %v1806
        %v1809 = vshrl.u32 %v1718, 16
        %v1811 = vrot.slane %v1809, 4
        %v1812 = vshll.u32 %v1718, 16
        %v1814 = vrot.slane %v1812, 5
        %v1815 = vor.u32 %v1811, %v1814
        %v1816 = vrot.slane %v1815, 4
        %v1818 = vshll.u32 %v1719, 16
        %v1820 = vrot.slane %v1818, 5
        %v1821 = vsel %vm240, %v1816, %v1820
        %v1822 = vshrl.u32 %v1719, 16
        %v1824 = vrot.slane %v1822, 4
        %v1825 = vor.u32 %v1824, %v1820
        %v1826 = vrot.slane %v1825, 4
        %v1828 = vshll.u32 %v1720, 16
        %v1830 = vrot.slane %v1828, 5
        %v1831 = vsel %vm240, %v1826, %v1830
        %v1833 = vshrl.u32 %v1721, 16
        %v1835 = vrot.slane %v1833, 4
        %v1836 = vshll.u32 %v1721, 16
        %v1838 = vrot.slane %v1836, 5
        %v1839 = vor.u32 %v1835, %v1838
        %v1840 = vrot.slane %v1839, 4
        %v1842 = vshll.u32 %v1722, 16
        %v1844 = vrot.slane %v1842, 5
        %v1845 = vsel %vm240, %v1840, %v1844
        %v1846 = vshrl.u32 %v1722, 16
        %v1848 = vrot.slane %v1846, 4
        %v1849 = vor.u32 %v1848, %v1844
        %v1850 = vrot.slane %v1849, 4
        %v1852 = vshll.u32 %v1723, 16
        %v1854 = vrot.slane %v1852, 5
        %v1855 = vsel %vm240, %v1850, %v1854
        %v1857 = vshrl.u32 %v1724, 16
        %v1859 = vrot.slane %v1857, 4
        %v1860 = vshll.u32 %v1724, 16
        %v1862 = vrot.slane %v1860, 5
        %v1863 = vor.u32 %v1859, %v1862
        %v1864 = vrot.slane %v1863, 4
        %v1866 = vshll.u32 %v1725, 16
        %v1868 = vrot.slane %v1866, 5
        %v1869 = vsel %vm240, %v1864, %v1868
        %v1870 = vshrl.u32 %v1725, 16
        %v1872 = vrot.slane %v1870, 4
        %v1873 = vor.u32 %v1872, %v1868
        %v1874 = vrot.slane %v1873, 4
        %v1876 = vshll.u32 %v1726, 16
        %v1878 = vrot.slane %v1876, 5
        %v1879 = vsel %vm240, %v1874, %v1878
        %v1881 = vshrl.u32 %v1727, 16
        %v1883 = vrot.slane %v1881, 4
        %v1884 = vshll.u32 %v1727, 16
        %v1886 = vrot.slane %v1884, 5
        %v1887 = vor.u32 %v1883, %v1886
        %v1888 = vrot.slane %v1887, 4
        %v1890 = vshll.u32 %v1728, 16
        %v1892 = vrot.slane %v1890, 5
        %v1893 = vsel %vm240, %v1888, %v1892
        %v1894 = vshrl.u32 %v1728, 16
        %v1896 = vrot.slane %v1894, 4
        %v1897 = vor.u32 %v1896, %v1892
        %v1898 = vrot.slane %v1897, 4
        %v1900 = vshll.u32 %v1729, 16
        %v1902 = vrot.slane %v1900, 5
        %v1903 = vsel %vm240, %v1898, %v1902
        %v1905 = vshrl.u32 %v1730, 16
        %v1907 = vrot.slane %v1905, 4
        %v1908 = vshll.u32 %v1730, 16
        %v1910 = vrot.slane %v1908, 5
        %v1911 = vor.u32 %v1907, %v1910
        %v1912 = vrot.slane %v1911, 4
        %v1914 = vshll.u32 %v1731, 16
        %v1916 = vrot.slane %v1914, 5
        %v1917 = vsel %vm240, %v1912, %v1916
        %v1918 = vshrl.u32 %v1731, 16
        %v1920 = vrot.slane %v1918, 4
        %v1921 = vor.u32 %v1920, %v1916
        %v1922 = vrot.slane %v1921, 4
        %v1924 = vshll.u32 %v1732, 16
        %v1926 = vrot.slane %v1924, 5
        %v1927 = vsel %vm240, %v1922, %v1926
        %v1929 = vshrl.u32 %v1733, 16
        %v1931 = vrot.slane %v1929, 4
        %v1932 = vshll.u32 %v1733, 16
        %v1934 = vrot.slane %v1932, 5
        %v1935 = vor.u32 %v1931, %v1934
        %v1936 = vrot.slane %v1935, 4
        %v1938 = vshll.u32 %v1734, 16
        %v1940 = vrot.slane %v1938, 5
        %v1941 = vsel %vm240, %v1936, %v1940
        %v1942 = vshrl.u32 %v1734, 16
        %v1944 = vrot.slane %v1942, 4
        %v1945 = vor.u32 %v1944, %v1940
        %v1946 = vrot.slane %v1945, 4
        %v1948 = vshll.u32 %v1735, 16
        %v1950 = vrot.slane %v1948, 5
        %v1951 = vsel %vm240, %v1946, %v1950
        %v1953 = vshrl.u32 %v1736, 16
        %v1955 = vrot.slane %v1953, 4
        %v1956 = vshll.u32 %v1736, 16
        %v1958 = vrot.slane %v1956, 5
        %v1959 = vor.u32 %v1955, %v1958
        %v1960 = vrot.slane %v1959, 4
        %v1962 = vshll.u32 %v1737, 16
        %v1964 = vrot.slane %v1962, 5
        %v1965 = vsel %vm240, %v1960, %v1964
        %v1966 = vshrl.u32 %v1737, 16
        %v1968 = vrot.slane %v1966, 4
        %v1969 = vor.u32 %v1968, %v1964
        %v1970 = vrot.slane %v1969, 4
        %v1972 = vshll.u32 %v1738, 16
        %v1974 = vrot.slane %v1972, 5
        %v1975 = vsel %vm240, %v1970, %v1974
        %v1977 = vshrl.u32 %v1739, 16
        %v1979 = vrot.slane %v1977, 4
        %v1980 = vshll.u32 %v1739, 16
        %v1982 = vrot.slane %v1980, 5
        %v1983 = vor.u32 %v1979, %v1982
        %v1984 = vrot.slane %v1983, 4
        %v1986 = vshll.u32 %v1740, 16
        %v1988 = vrot.slane %v1986, 5
        %v1989 = vsel %vm240, %v1984, %v1988
        %v1990 = vshrl.u32 %v1740, 16
        %v1992 = vrot.slane %v1990, 4
        %v1993 = vor.u32 %v1992, %v1988
        %v1994 = vrot.slane %v1993, 4
        %v1996 = vshll.u32 %v1741, 16
        %v1998 = vrot.slane %v1996, 5
        %v1999 = vsel %vm240, %v1994, %v1998
        %v2001 = vshrl.u32 %v1742, 16
        %v2003 = vrot.slane %v2001, 4
        %v2004 = vshll.u32 %v1742, 16
        %v2006 = vrot.slane %v2004, 5
        %v2007 = vor.u32 %v2003, %v2006
        %v2008 = vrot.slane %v2007, 4
        %v2010 = vshll.u32 %v1743, 16
        %v2012 = vrot.slane %v2010, 5
        %v2013 = vsel %vm240, %v2008, %v2012
        %v2014 = vshrl.u32 %v1743, 16
        %v2016 = vrot.slane %v2014, 4
        %v2017 = vor.u32 %v2016, %v2012
        %v2018 = vrot.slane %v2017, 4
        %v2020 = vshll.u32 %v1744, 16
        %v2022 = vrot.slane %v2020, 5
        %v2023 = vsel %vm240, %v2018, %v2022
        %v2025 = vshrl.u32 %v1745, 16
        %v2027 = vrot.slane %v2025, 4
        %v2028 = vshll.u32 %v1745, 16
        %v2030 = vrot.slane %v2028, 5
        %v2031 = vor.u32 %v2027, %v2030
        %v2032 = vrot.slane %v2031, 4
        %v2034 = vshll.u32 %v1746, 16
        %v2036 = vrot.slane %v2034, 5
        %v2037 = vsel %vm240, %v2032, %v2036
        %v2038 = vshrl.u32 %v1746, 16
        %v2040 = vrot.slane %v2038, 4
        %v2041 = vor.u32 %v2040, %v2036
        %v2042 = vrot.slane %v2041, 4
        %v2044 = vshll.u32 %v1747, 16
        %v2046 = vrot.slane %v2044, 5
        %v2047 = vsel %vm240, %v2042, %v2046
        %v2049 = vshrl.u32 %v1748, 16
        %v2051 = vrot.slane %v2049, 4
        %v2052 = vshll.u32 %v1748, 16
        %v2054 = vrot.slane %v2052, 5
        %v2055 = vor.u32 %v2051, %v2054
        %v2056 = vrot.slane %v2055, 4
        %v2058 = vshll.u32 %v1749, 16
        %v2060 = vrot.slane %v2058, 5
        %v2061 = vsel %vm240, %v2056, %v2060
        %v2062 = vshrl.u32 %v1749, 16
        %v2064 = vrot.slane %v2062, 4
        %v2065 = vor.u32 %v2064, %v2060
        %v2066 = vrot.slane %v2065, 4
        %v2068 = vshll.u32 %v1750, 16
        %v2070 = vrot.slane %v2068, 5
        %v2071 = vsel %vm240, %v2066, %v2070
        %v2073 = vshrl.u32 %v1751, 16
        %v2075 = vrot.slane %v2073, 4
        %v2076 = vshll.u32 %v1751, 16
        %v2078 = vrot.slane %v2076, 5
        %v2079 = vor.u32 %v2075, %v2078
        %v2080 = vrot.slane %v2079, 4
        %v2082 = vshll.u32 %v1752, 16
        %v2084 = vrot.slane %v2082, 5
        %v2085 = vsel %vm240, %v2080, %v2084
        %v2086 = vshrl.u32 %v1752, 16
        %v2088 = vrot.slane %v2086, 4
        %v2089 = vor.u32 %v2088, %v2084
        %v2090 = vrot.slane %v2089, 4
        %v2092 = vshll.u32 %v1753, 16
        %v2094 = vrot.slane %v2092, 5
        %v2095 = vsel %vm240, %v2090, %v2094
        %v2097 = vshrl.u32 %v1754, 16
        %v2099 = vrot.slane %v2097, 4
        %v2100 = vshll.u32 %v1754, 16
        %v2102 = vrot.slane %v2100, 5
        %v2103 = vor.u32 %v2099, %v2102
        %v2104 = vrot.slane %v2103, 4
        %v2106 = vshll.u32 %v1755, 16
        %v2108 = vrot.slane %v2106, 5
        %v2109 = vsel %vm240, %v2104, %v2108
        %v2110 = vshrl.u32 %v1755, 16
        %v2112 = vrot.slane %v2110, 4
        %v2113 = vor.u32 %v2112, %v2108
        %v2114 = vrot.slane %v2113, 4
        %v2116 = vshll.u32 %v1756, 16
        %v2118 = vrot.slane %v2116, 5
        %v2119 = vsel %vm240, %v2114, %v2118
        %v2121 = vshrl.u32 %v1757, 16
        %v2123 = vrot.slane %v2121, 4
        %v2124 = vshll.u32 %v1757, 16
        %v2126 = vrot.slane %v2124, 5
        %v2127 = vor.u32 %v2123, %v2126
        %v2128 = vrot.slane %v2127, 4
        %v2130 = vshll.u32 %v1758, 16
        %v2132 = vrot.slane %v2130, 5
        %v2133 = vsel %vm240, %v2128, %v2132
        %v2134 = vshrl.u32 %v1758, 16
        %v2136 = vrot.slane %v2134, 4
        %v2137 = vor.u32 %v2136, %v2132
        %v2138 = vrot.slane %v2137, 4
        %v2140 = vshll.u32 %v1759, 16
        %v2142 = vrot.slane %v2140, 5
        %v2143 = vsel %vm240, %v2138, %v2142
        %s2144 = scalar_lea.vmem %s1, 16
        %v2145 = vld [vmem:[%s2144] sm:$0xf]
        %v2146 = vunpack.c.l.b16 %v1773
        %v2147 = vunpack.c.l.b16 %v1783
        %v2148 = vunpack.c.l.b16 %v1797
        %v2149 = vunpack.c.l.b16 %v1807
        %v2150 = vunpack.c.l.b16 %v1821
        %v2151 = vunpack.c.l.b16 %v1831
        %v2152 = vunpack.c.l.b16 %v1845
        %v2153 = vunpack.c.l.b16 %v1855
        %v2154 = vunpack.c.l.b16 %v1869
        %v2155 = vunpack.c.l.b16 %v1879
        %v2156 = vunpack.c.l.b16 %v1893
        %v2157 = vunpack.c.l.b16 %v1903
        %v2158 = vunpack.c.l.b16 %v1917
        %v2159 = vunpack.c.l.b16 %v1927
        %v2160 = vunpack.c.l.b16 %v1941
        %v2161 = vunpack.c.l.b16 %v1951
        %v2162 = vunpack.c.l.b16 %v1965
        %v2163 = vunpack.c.l.b16 %v1975
        %v2164 = vunpack.c.l.b16 %v1989
        %v2165 = vunpack.c.l.b16 %v1999
        %v2166 = vunpack.c.l.b16 %v2013
        %v2167 = vunpack.c.l.b16 %v2023
        %v2168 = vunpack.c.l.b16 %v2037
        %v2169 = vunpack.c.l.b16 %v2047
        %v2170 = vunpack.c.l.b16 %v2061
        %v2171 = vunpack.c.l.b16 %v2071
        %v2172 = vunpack.c.l.b16 %v2085
        %v2173 = vunpack.c.l.b16 %v2095
        %v2174 = vunpack.c.l.b16 %v2109
        %v2175 = vunpack.c.l.b16 %v2119
        %v2176 = vunpack.c.l.b16 %v2133
        %v2177 = vunpack.c.l.b16 %v2143
        %v2178 = vpack.c.b16 %v2147, %v2146
        %v2179 = vpack.c.b16 %v2149, %v2148
        %v2180 = vpack.c.b16 %v2151, %v2150
        %v2181 = vpack.c.b16 %v2153, %v2152
        %v2182 = vpack.c.b16 %v2155, %v2154
        %v2183 = vpack.c.b16 %v2157, %v2156
        %v2184 = vpack.c.b16 %v2159, %v2158
        %v2185 = vpack.c.b16 %v2161, %v2160
        %v2186 = vpack.c.b16 %v2163, %v2162
        %v2187 = vpack.c.b16 %v2165, %v2164
        %v2188 = vpack.c.b16 %v2167, %v2166
        %v2189 = vpack.c.b16 %v2169, %v2168
        %v2190 = vpack.c.b16 %v2171, %v2170
        %v2191 = vpack.c.b16 %v2173, %v2172
        %v2192 = vpack.c.b16 %v2175, %v2174
        %v2193 = vpack.c.b16 %v2177, %v2176
        %v2195 = vsel %vm675, %v2178, 0
        %v2198 = vsel %vm675, %v2179, 0
        %v2201 = vsel %vm675, %v2180, 0
        %v2204 = vsel %vm675, %v2181, 0
        %v2207 = vsel %vm675, %v2182, 0
        %v2210 = vsel %vm675, %v2183, 0
        %v2213 = vsel %vm675, %v2184, 0
        %v2216 = vsel %vm675, %v2185, 0
        %v2219 = vsel %vm675, %v2186, 0
        %v2222 = vsel %vm675, %v2187, 0
        %v2225 = vsel %vm675, %v2188, 0
        %v2228 = vsel %vm675, %v2189, 0
        %v2231 = vsel %vm675, %v2190, 0
        %v2234 = vsel %vm675, %v2191, 0
        %v2237 = vsel %vm675, %v2192, 0
        %v2240 = vsel %vm675, %v2193, 0
        %v2243 = vsel %vm724, %v2145, 0
        %2245 = vmatpush.bf16.msra.mxu0 0
        %2246 = vmatpush.bf16.msra.mxu0 0
        %2247 = vmatpush.bf16.msra.mxu0 0
        %2248 = vmatpush.bf16.msra.mxu0 0
        %2249 = vmatpush.bf16.msra.mxu0 0
        %2250 = vmatpush.bf16.msra.mxu0 0
        %2251 = vmatpush.bf16.msra.mxu0 0
        %2252 = vmatpush.bf16.msra.mxu0 %v2243
        %2253 = vmatmul.bf16.gmra.mxu0 %v2195
        %v2254 = vpop.f32.mrf.mxu0
        %v2255 = vadd.f32 0.0, %v2254
        %v2256 = vpop.f32.mrf.mxu0
        %v2257 = vadd.f32 0.0, %v2256
        %2258 = vmatmul.bf16.gmra.mxu0 %v2198
        %v2259 = vpop.f32.mrf.mxu0
        %v2260 = vadd.f32 0.0, %v2259
        %v2261 = vpop.f32.mrf.mxu0
        %v2262 = vadd.f32 0.0, %v2261
        %2263 = vmatmul.bf16.gmra.mxu0 %v2201
        %v2264 = vpop.f32.mrf.mxu0
        %v2265 = vadd.f32 0.0, %v2264
        %v2266 = vpop.f32.mrf.mxu0
        %v2267 = vadd.f32 0.0, %v2266
        %2268 = vmatmul.bf16.gmra.mxu0 %v2204
        %v2269 = vpop.f32.mrf.mxu0
        %v2270 = vadd.f32 0.0, %v2269
        %v2271 = vpop.f32.mrf.mxu0
        %v2272 = vadd.f32 0.0, %v2271
        %2273 = vmatmul.bf16.gmra.mxu0 %v2207
        %v2274 = vpop.f32.mrf.mxu0
        %v2275 = vadd.f32 0.0, %v2274
        %v2276 = vpop.f32.mrf.mxu0
        %v2277 = vadd.f32 0.0, %v2276
        %2278 = vmatmul.bf16.gmra.mxu0 %v2210
        %v2279 = vpop.f32.mrf.mxu0
        %v2280 = vadd.f32 0.0, %v2279
        %v2281 = vpop.f32.mrf.mxu0
        %v2282 = vadd.f32 0.0, %v2281
        %2283 = vmatmul.bf16.gmra.mxu0 %v2213
        %v2284 = vpop.f32.mrf.mxu0
        %v2285 = vadd.f32 0.0, %v2284
        %v2286 = vpop.f32.mrf.mxu0
        %v2287 = vadd.f32 0.0, %v2286
        %2288 = vmatmul.bf16.gmra.mxu0 %v2216
        %v2289 = vpop.f32.mrf.mxu0
        %v2290 = vadd.f32 0.0, %v2289
        %v2291 = vpop.f32.mrf.mxu0
        %v2292 = vadd.f32 0.0, %v2291
        %2293 = vmatmul.bf16.gmra.mxu0 %v2219
        %v2294 = vpop.f32.mrf.mxu0
        %v2295 = vadd.f32 0.0, %v2294
        %v2296 = vpop.f32.mrf.mxu0
        %v2297 = vadd.f32 0.0, %v2296
        %2298 = vmatmul.bf16.gmra.mxu0 %v2222
        %v2299 = vpop.f32.mrf.mxu0
        %v2300 = vadd.f32 0.0, %v2299
        %v2301 = vpop.f32.mrf.mxu0
        %v2302 = vadd.f32 0.0, %v2301
        %2303 = vmatmul.bf16.gmra.mxu0 %v2225
        %v2304 = vpop.f32.mrf.mxu0
        %v2305 = vadd.f32 0.0, %v2304
        %v2306 = vpop.f32.mrf.mxu0
        %v2307 = vadd.f32 0.0, %v2306
        %2308 = vmatmul.bf16.gmra.mxu0 %v2228
        %v2309 = vpop.f32.mrf.mxu0
        %v2310 = vadd.f32 0.0, %v2309
        %v2311 = vpop.f32.mrf.mxu0
        %v2312 = vadd.f32 0.0, %v2311
        %2313 = vmatmul.bf16.gmra.mxu0 %v2231
        %v2314 = vpop.f32.mrf.mxu0
        %v2315 = vadd.f32 0.0, %v2314
        %v2316 = vpop.f32.mrf.mxu0
        %v2317 = vadd.f32 0.0, %v2316
        %2318 = vmatmul.bf16.gmra.mxu0 %v2234
        %v2319 = vpop.f32.mrf.mxu0
        %v2320 = vadd.f32 0.0, %v2319
        %v2321 = vpop.f32.mrf.mxu0
        %v2322 = vadd.f32 0.0, %v2321
        %2323 = vmatmul.bf16.gmra.mxu0 %v2237
        %v2324 = vpop.f32.mrf.mxu0
        %v2325 = vadd.f32 0.0, %v2324
        %v2326 = vpop.f32.mrf.mxu0
        %v2327 = vadd.f32 0.0, %v2326
        %2328 = vmatmul.bf16.gmra.mxu0 %v2240
        %v2329 = vpop.f32.mrf.mxu0
        %v2330 = vadd.f32 0.0, %v2329
        %v2331 = vpop.f32.mrf.mxu0
        %v2332 = vadd.f32 0.0, %v2331
        %2333 = vdwg.mxu0
        %v2334 = vadd.f32 %v1680, %v2255
        %v2335 = vadd.f32 %v1681, %v2257
        %v2336 = vadd.f32 %v1682, %v2260
        %v2337 = vadd.f32 %v1683, %v2262
        %v2338 = vadd.f32 %v1684, %v2265
        %v2339 = vadd.f32 %v1685, %v2267
        %v2340 = vadd.f32 %v1686, %v2270
        %v2341 = vadd.f32 %v1687, %v2272
        %v2342 = vadd.f32 %v1688, %v2275
        %v2343 = vadd.f32 %v1689, %v2277
        %v2344 = vadd.f32 %v1690, %v2280
        %v2345 = vadd.f32 %v1691, %v2282
        %v2346 = vadd.f32 %v1692, %v2285
        %v2347 = vadd.f32 %v1693, %v2287
        %v2348 = vadd.f32 %v1694, %v2290
        %v2349 = vadd.f32 %v1695, %v2292
        %v2350 = vadd.f32 %v1696, %v2295
        %v2351 = vadd.f32 %v1697, %v2297
        %v2352 = vadd.f32 %v1698, %v2300
        %v2353 = vadd.f32 %v1699, %v2302
        %v2354 = vadd.f32 %v1700, %v2305
        %v2355 = vadd.f32 %v1701, %v2307
        %v2356 = vadd.f32 %v1702, %v2310
        %v2357 = vadd.f32 %v1703, %v2312
        %v2358 = vadd.f32 %v1704, %v2315
        %v2359 = vadd.f32 %v1705, %v2317
        %v2360 = vadd.f32 %v1706, %v2320
        %v2361 = vadd.f32 %v1707, %v2322
        %v2362 = vadd.f32 %v1708, %v2325
        %v2363 = vadd.f32 %v1709, %v2327
        %v2364 = vadd.f32 %v1710, %v2330
        %v2365 = vadd.f32 %v1711, %v2332
        %v2366 = vld [vmem:[%s1425] sm:$0xe]
        %v2367 = vld [vmem:[%s1425 + $0xc] sm:$0xe]
        %v2368 = vld [vmem:[%s1425 + $0x18] sm:$0xe]
        %v2369 = vld [vmem:[%s1425 + $0x24] sm:$0xe]
        %v2370 = vld [vmem:[%s1425 + $0x30] sm:$0xe]
        %v2371 = vld [vmem:[%s1425 + $0x3c] sm:$0xe]
        %v2372 = vld [vmem:[%s1425 + $0x48] sm:$0xe]
        %v2373 = vld [vmem:[%s1425 + $0x54] sm:$0xe]
        %v2374 = vld [vmem:[%s1425 + $0x60] sm:$0xe]
        %v2375 = vld [vmem:[%s1425 + $0x6c] sm:$0xe]
        %v2376 = vld [vmem:[%s1425 + $0x78] sm:$0xe]
        %v2377 = vld [vmem:[%s1425 + $0x84] sm:$0xe]
        %v2378 = vld [vmem:[%s1425 + $0x90] sm:$0xe]
        %v2379 = vld [vmem:[%s1425 + $0x9c] sm:$0xe]
        %v2380 = vld [vmem:[%s1425 + $0xa8] sm:$0xe]
        %v2381 = vld [vmem:[%s1425 + $0xb4] sm:$0xe]
        %v2430 = vrot.slane %v2366, 5
        %v2431 = vrot.slane %v2430, 4
        %v2432 = vrot.slane %v1713, 5
        %v2433 = vsel %vm1087, %v2431, %v2432
        %v2434 = vrot.slane %v2432, 4
        %v2435 = vrot.slane %v1714, 5
        %v2436 = vsel %vm1087, %v2434, %v2435
        %v2437 = vrot.slane %v2367, 5
        %v2438 = vrot.slane %v2437, 4
        %v2439 = vrot.slane %v1716, 5
        %v2440 = vsel %vm1087, %v2438, %v2439
        %v2441 = vrot.slane %v2439, 4
        %v2442 = vrot.slane %v1717, 5
        %v2443 = vsel %vm1087, %v2441, %v2442
        %v2444 = vrot.slane %v2368, 5
        %v2445 = vrot.slane %v2444, 4
        %v2446 = vrot.slane %v1719, 5
        %v2447 = vsel %vm1087, %v2445, %v2446
        %v2448 = vrot.slane %v2446, 4
        %v2449 = vrot.slane %v1720, 5
        %v2450 = vsel %vm1087, %v2448, %v2449
        %v2451 = vrot.slane %v2369, 5
        %v2452 = vrot.slane %v2451, 4
        %v2453 = vrot.slane %v1722, 5
        %v2454 = vsel %vm1087, %v2452, %v2453
        %v2455 = vrot.slane %v2453, 4
        %v2456 = vrot.slane %v1723, 5
        %v2457 = vsel %vm1087, %v2455, %v2456
        %v2458 = vrot.slane %v2370, 5
        %v2459 = vrot.slane %v2458, 4
        %v2460 = vrot.slane %v1725, 5
        %v2461 = vsel %vm1087, %v2459, %v2460
        %v2462 = vrot.slane %v2460, 4
        %v2463 = vrot.slane %v1726, 5
        %v2464 = vsel %vm1087, %v2462, %v2463
        %v2465 = vrot.slane %v2371, 5
        %v2466 = vrot.slane %v2465, 4
        %v2467 = vrot.slane %v1728, 5
        %v2468 = vsel %vm1087, %v2466, %v2467
        %v2469 = vrot.slane %v2467, 4
        %v2470 = vrot.slane %v1729, 5
        %v2471 = vsel %vm1087, %v2469, %v2470
        %v2472 = vrot.slane %v2372, 5
        %v2473 = vrot.slane %v2472, 4
        %v2474 = vrot.slane %v1731, 5
        %v2475 = vsel %vm1087, %v2473, %v2474
        %v2476 = vrot.slane %v2474, 4
        %v2477 = vrot.slane %v1732, 5
        %v2478 = vsel %vm1087, %v2476, %v2477
        %v2479 = vrot.slane %v2373, 5
        %v2480 = vrot.slane %v2479, 4
        %v2481 = vrot.slane %v1734, 5
        %v2482 = vsel %vm1087, %v2480, %v2481
        %v2483 = vrot.slane %v2481, 4
        %v2484 = vrot.slane %v1735, 5
        %v2485 = vsel %vm1087, %v2483, %v2484
        %v2486 = vrot.slane %v2374, 5
        %v2487 = vrot.slane %v2486, 4
        %v2488 = vrot.slane %v1737, 5
        %v2489 = vsel %vm1087, %v2487, %v2488
        %v2490 = vrot.slane %v2488, 4
        %v2491 = vrot.slane %v1738, 5
        %v2492 = vsel %vm1087, %v2490, %v2491
        %v2493 = vrot.slane %v2375, 5
        %v2494 = vrot.slane %v2493, 4
        %v2495 = vrot.slane %v1740, 5
        %v2496 = vsel %vm1087, %v2494, %v2495
        %v2497 = vrot.slane %v2495, 4
        %v2498 = vrot.slane %v1741, 5
        %v2499 = vsel %vm1087, %v2497, %v2498
        %v2500 = vrot.slane %v2376, 5
        %v2501 = vrot.slane %v2500, 4
        %v2502 = vrot.slane %v1743, 5
        %v2503 = vsel %vm1087, %v2501, %v2502
        %v2504 = vrot.slane %v2502, 4
        %v2505 = vrot.slane %v1744, 5
        %v2506 = vsel %vm1087, %v2504, %v2505
        %v2507 = vrot.slane %v2377, 5
        %v2508 = vrot.slane %v2507, 4
        %v2509 = vrot.slane %v1746, 5
        %v2510 = vsel %vm1087, %v2508, %v2509
        %v2511 = vrot.slane %v2509, 4
        %v2512 = vrot.slane %v1747, 5
        %v2513 = vsel %vm1087, %v2511, %v2512
        %v2514 = vrot.slane %v2378, 5
        %v2515 = vrot.slane %v2514, 4
        %v2516 = vrot.slane %v1749, 5
        %v2517 = vsel %vm1087, %v2515, %v2516
        %v2518 = vrot.slane %v2516, 4
        %v2519 = vrot.slane %v1750, 5
        %v2520 = vsel %vm1087, %v2518, %v2519
        %v2521 = vrot.slane %v2379, 5
        %v2522 = vrot.slane %v2521, 4
        %v2523 = vrot.slane %v1752, 5
        %v2524 = vsel %vm1087, %v2522, %v2523
        %v2525 = vrot.slane %v2523, 4
        %v2526 = vrot.slane %v1753, 5
        %v2527 = vsel %vm1087, %v2525, %v2526
        %v2528 = vrot.slane %v2380, 5
        %v2529 = vrot.slane %v2528, 4
        %v2530 = vrot.slane %v1755, 5
        %v2531 = vsel %vm1087, %v2529, %v2530
        %v2532 = vrot.slane %v2530, 4
        %v2533 = vrot.slane %v1756, 5
        %v2534 = vsel %vm1087, %v2532, %v2533
        %v2535 = vrot.slane %v2381, 5
        %v2536 = vrot.slane %v2535, 4
        %v2537 = vrot.slane %v1758, 5
        %v2538 = vsel %vm1087, %v2536, %v2537
        %v2539 = vrot.slane %v2537, 4
        %v2540 = vrot.slane %v1759, 5
        %v2541 = vsel %vm1087, %v2539, %v2540
        %s2542 = scalar_lea.vmem %s1, 20
        %v2543 = vld [vmem:[%s2542] sm:$0xf]
        %v2544 = vunpack.c.l.b16 %v2433
        %v2545 = vunpack.c.l.b16 %v2436
        %v2546 = vunpack.c.l.b16 %v2440
        %v2547 = vunpack.c.l.b16 %v2443
        %v2548 = vunpack.c.l.b16 %v2447
        %v2549 = vunpack.c.l.b16 %v2450
        %v2550 = vunpack.c.l.b16 %v2454
        %v2551 = vunpack.c.l.b16 %v2457
        %v2552 = vunpack.c.l.b16 %v2461
        %v2553 = vunpack.c.l.b16 %v2464
        %v2554 = vunpack.c.l.b16 %v2468
        %v2555 = vunpack.c.l.b16 %v2471
        %v2556 = vunpack.c.l.b16 %v2475
        %v2557 = vunpack.c.l.b16 %v2478
        %v2558 = vunpack.c.l.b16 %v2482
        %v2559 = vunpack.c.l.b16 %v2485
        %v2560 = vunpack.c.l.b16 %v2489
        %v2561 = vunpack.c.l.b16 %v2492
        %v2562 = vunpack.c.l.b16 %v2496
        %v2563 = vunpack.c.l.b16 %v2499
        %v2564 = vunpack.c.l.b16 %v2503
        %v2565 = vunpack.c.l.b16 %v2506
        %v2566 = vunpack.c.l.b16 %v2510
        %v2567 = vunpack.c.l.b16 %v2513
        %v2568 = vunpack.c.l.b16 %v2517
        %v2569 = vunpack.c.l.b16 %v2520
        %v2570 = vunpack.c.l.b16 %v2524
        %v2571 = vunpack.c.l.b16 %v2527
        %v2572 = vunpack.c.l.b16 %v2531
        %v2573 = vunpack.c.l.b16 %v2534
        %v2574 = vunpack.c.l.b16 %v2538
        %v2575 = vunpack.c.l.b16 %v2541
        %v2576 = vpack.c.b16 %v2545, %v2544
        %v2577 = vpack.c.b16 %v2547, %v2546
        %v2578 = vpack.c.b16 %v2549, %v2548
        %v2579 = vpack.c.b16 %v2551, %v2550
        %v2580 = vpack.c.b16 %v2553, %v2552
        %v2581 = vpack.c.b16 %v2555, %v2554
        %v2582 = vpack.c.b16 %v2557, %v2556
        %v2583 = vpack.c.b16 %v2559, %v2558
        %v2584 = vpack.c.b16 %v2561, %v2560
        %v2585 = vpack.c.b16 %v2563, %v2562
        %v2586 = vpack.c.b16 %v2565, %v2564
        %v2587 = vpack.c.b16 %v2567, %v2566
        %v2588 = vpack.c.b16 %v2569, %v2568
        %v2589 = vpack.c.b16 %v2571, %v2570
        %v2590 = vpack.c.b16 %v2573, %v2572
        %v2591 = vpack.c.b16 %v2575, %v2574
        %v2593 = vsel %vm675, %v2576, 0
        %v2596 = vsel %vm675, %v2577, 0
        %v2599 = vsel %vm675, %v2578, 0
        %v2602 = vsel %vm675, %v2579, 0
        %v2605 = vsel %vm675, %v2580, 0
        %v2608 = vsel %vm675, %v2581, 0
        %v2611 = vsel %vm675, %v2582, 0
        %v2614 = vsel %vm675, %v2583, 0
        %v2617 = vsel %vm675, %v2584, 0
        %v2620 = vsel %vm675, %v2585, 0
        %v2623 = vsel %vm675, %v2586, 0
        %v2626 = vsel %vm675, %v2587, 0
        %v2629 = vsel %vm675, %v2588, 0
        %v2632 = vsel %vm675, %v2589, 0
        %v2635 = vsel %vm675, %v2590, 0
        %v2638 = vsel %vm675, %v2591, 0
        %v2641 = vsel %vm724, %v2543, 0
        %2643 = vmatpush.bf16.msra.mxu0 0
        %2644 = vmatpush.bf16.msra.mxu0 0
        %2645 = vmatpush.bf16.msra.mxu0 0
        %2646 = vmatpush.bf16.msra.mxu0 0
        %2647 = vmatpush.bf16.msra.mxu0 0
        %2648 = vmatpush.bf16.msra.mxu0 0
        %2649 = vmatpush.bf16.msra.mxu0 0
        %2650 = vmatpush.bf16.msra.mxu0 %v2641
        %2651 = vmatmul.bf16.gmra.mxu0 %v2593
        %v2652 = vpop.f32.mrf.mxu0
        %v2653 = vadd.f32 0.0, %v2652
        %v2654 = vpop.f32.mrf.mxu0
        %v2655 = vadd.f32 0.0, %v2654
        %2656 = vmatmul.bf16.gmra.mxu0 %v2596
        %v2657 = vpop.f32.mrf.mxu0
        %v2658 = vadd.f32 0.0, %v2657
        %v2659 = vpop.f32.mrf.mxu0
        %v2660 = vadd.f32 0.0, %v2659
        %2661 = vmatmul.bf16.gmra.mxu0 %v2599
        %v2662 = vpop.f32.mrf.mxu0
        %v2663 = vadd.f32 0.0, %v2662
        %v2664 = vpop.f32.mrf.mxu0
        %v2665 = vadd.f32 0.0, %v2664
        %2666 = vmatmul.bf16.gmra.mxu0 %v2602
        %v2667 = vpop.f32.mrf.mxu0
        %v2668 = vadd.f32 0.0, %v2667
        %v2669 = vpop.f32.mrf.mxu0
        %v2670 = vadd.f32 0.0, %v2669
        %2671 = vmatmul.bf16.gmra.mxu0 %v2605
        %v2672 = vpop.f32.mrf.mxu0
        %v2673 = vadd.f32 0.0, %v2672
        %v2674 = vpop.f32.mrf.mxu0
        %v2675 = vadd.f32 0.0, %v2674
        %2676 = vmatmul.bf16.gmra.mxu0 %v2608
        %v2677 = vpop.f32.mrf.mxu0
        %v2678 = vadd.f32 0.0, %v2677
        %v2679 = vpop.f32.mrf.mxu0
        %v2680 = vadd.f32 0.0, %v2679
        %2681 = vmatmul.bf16.gmra.mxu0 %v2611
        %v2682 = vpop.f32.mrf.mxu0
        %v2683 = vadd.f32 0.0, %v2682
        %v2684 = vpop.f32.mrf.mxu0
        %v2685 = vadd.f32 0.0, %v2684
        %2686 = vmatmul.bf16.gmra.mxu0 %v2614
        %v2687 = vpop.f32.mrf.mxu0
        %v2688 = vadd.f32 0.0, %v2687
        %v2689 = vpop.f32.mrf.mxu0
        %v2690 = vadd.f32 0.0, %v2689
        %2691 = vmatmul.bf16.gmra.mxu0 %v2617
        %v2692 = vpop.f32.mrf.mxu0
        %v2693 = vadd.f32 0.0, %v2692
        %v2694 = vpop.f32.mrf.mxu0
        %v2695 = vadd.f32 0.0, %v2694
        %2696 = vmatmul.bf16.gmra.mxu0 %v2620
        %v2697 = vpop.f32.mrf.mxu0
        %v2698 = vadd.f32 0.0, %v2697
        %v2699 = vpop.f32.mrf.mxu0
        %v2700 = vadd.f32 0.0, %v2699
        %2701 = vmatmul.bf16.gmra.mxu0 %v2623
        %v2702 = vpop.f32.mrf.mxu0
        %v2703 = vadd.f32 0.0, %v2702
        %v2704 = vpop.f32.mrf.mxu0
        %v2705 = vadd.f32 0.0, %v2704
        %2706 = vmatmul.bf16.gmra.mxu0 %v2626
        %v2707 = vpop.f32.mrf.mxu0
        %v2708 = vadd.f32 0.0, %v2707
        %v2709 = vpop.f32.mrf.mxu0
        %v2710 = vadd.f32 0.0, %v2709
        %2711 = vmatmul.bf16.gmra.mxu0 %v2629
        %v2712 = vpop.f32.mrf.mxu0
        %v2713 = vadd.f32 0.0, %v2712
        %v2714 = vpop.f32.mrf.mxu0
        %v2715 = vadd.f32 0.0, %v2714
        %2716 = vmatmul.bf16.gmra.mxu0 %v2632
        %v2717 = vpop.f32.mrf.mxu0
        %v2718 = vadd.f32 0.0, %v2717
        %v2719 = vpop.f32.mrf.mxu0
        %v2720 = vadd.f32 0.0, %v2719
        %2721 = vmatmul.bf16.gmra.mxu0 %v2635
        %v2722 = vpop.f32.mrf.mxu0
        %v2723 = vadd.f32 0.0, %v2722
        %v2724 = vpop.f32.mrf.mxu0
        %v2725 = vadd.f32 0.0, %v2724
        %2726 = vmatmul.bf16.gmra.mxu0 %v2638
        %v2727 = vpop.f32.mrf.mxu0
        %v2728 = vadd.f32 0.0, %v2727
        %v2729 = vpop.f32.mrf.mxu0
        %v2730 = vadd.f32 0.0, %v2729
        %2731 = vdwg.mxu0
        %v2732 = vadd.f32 %v2334, %v2653
        %v2733 = vadd.f32 %v2335, %v2655
        %v2734 = vadd.f32 %v2336, %v2658
        %v2735 = vadd.f32 %v2337, %v2660
        %v2736 = vadd.f32 %v2338, %v2663
        %v2737 = vadd.f32 %v2339, %v2665
        %v2738 = vadd.f32 %v2340, %v2668
        %v2739 = vadd.f32 %v2341, %v2670
        %v2740 = vadd.f32 %v2342, %v2673
        %v2741 = vadd.f32 %v2343, %v2675
        %v2742 = vadd.f32 %v2344, %v2678
        %v2743 = vadd.f32 %v2345, %v2680
        %v2744 = vadd.f32 %v2346, %v2683
        %v2745 = vadd.f32 %v2347, %v2685
        %v2746 = vadd.f32 %v2348, %v2688
        %v2747 = vadd.f32 %v2349, %v2690
        %v2748 = vadd.f32 %v2350, %v2693
        %v2749 = vadd.f32 %v2351, %v2695
        %v2750 = vadd.f32 %v2352, %v2698
        %v2751 = vadd.f32 %v2353, %v2700
        %v2752 = vadd.f32 %v2354, %v2703
        %v2753 = vadd.f32 %v2355, %v2705
        %v2754 = vadd.f32 %v2356, %v2708
        %v2755 = vadd.f32 %v2357, %v2710
        %v2756 = vadd.f32 %v2358, %v2713
        %v2757 = vadd.f32 %v2359, %v2715
        %v2758 = vadd.f32 %v2360, %v2718
        %v2759 = vadd.f32 %v2361, %v2720
        %v2760 = vadd.f32 %v2362, %v2723
        %v2761 = vadd.f32 %v2363, %v2725
        %v2762 = vadd.f32 %v2364, %v2728
        %v2763 = vadd.f32 %v2365, %v2730
        %s2764 = sadd.s32 %s185, 2
        %s2765 = smul.u32 %s2764, 3
        %s2766 = smul.addr %s2765, 4
        %s2767 = scalar_lea.vmem %s182, %s2766
        %v2768 = vld [vmem:[%s2767] sm:$0xf]
        %v2769 = vld [vmem:[%s2767 + $0x4] sm:$0xf]
        %v2770 = vld [vmem:[%s2767 + $0xc] sm:$0xf]
        %v2771 = vld [vmem:[%s2767 + $0x10] sm:$0xf]
        %v2772 = vld [vmem:[%s2767 + $0x18] sm:$0xf]
        %v2773 = vld [vmem:[%s2767 + $0x1c] sm:$0xf]
        %v2774 = vld [vmem:[%s2767 + $0x24] sm:$0xf]
        %v2775 = vld [vmem:[%s2767 + $0x28] sm:$0xf]
        %v2776 = vld [vmem:[%s2767 + $0x30] sm:$0xf]
        %v2777 = vld [vmem:[%s2767 + $0x34] sm:$0xf]
        %v2778 = vld [vmem:[%s2767 + $0x3c] sm:$0xf]
        %v2779 = vld [vmem:[%s2767 + $0x40] sm:$0xf]
        %v2780 = vld [vmem:[%s2767 + $0x48] sm:$0xf]
        %v2781 = vld [vmem:[%s2767 + $0x4c] sm:$0xf]
        %v2782 = vld [vmem:[%s2767 + $0x54] sm:$0xf]
        %v2783 = vld [vmem:[%s2767 + $0x58] sm:$0xf]
        %v2784 = vld [vmem:[%s2767 + $0x60] sm:$0xf]
        %v2785 = vld [vmem:[%s2767 + $0x64] sm:$0xf]
        %v2786 = vld [vmem:[%s2767 + $0x6c] sm:$0xf]
        %v2787 = vld [vmem:[%s2767 + $0x70] sm:$0xf]
        %v2788 = vld [vmem:[%s2767 + $0x78] sm:$0xf]
        %v2789 = vld [vmem:[%s2767 + $0x7c] sm:$0xf]
        %v2790 = vld [vmem:[%s2767 + $0x84] sm:$0xf]
        %v2791 = vld [vmem:[%s2767 + $0x88] sm:$0xf]
        %v2792 = vld [vmem:[%s2767 + $0x90] sm:$0xf]
        %v2793 = vld [vmem:[%s2767 + $0x94] sm:$0xf]
        %v2794 = vld [vmem:[%s2767 + $0x9c] sm:$0xf]
        %v2795 = vld [vmem:[%s2767 + $0xa0] sm:$0xf]
        %v2796 = vld [vmem:[%s2767 + $0xa8] sm:$0xf]
        %v2797 = vld [vmem:[%s2767 + $0xac] sm:$0xf]
        %v2798 = vld [vmem:[%s2767 + $0xb4] sm:$0xf]
        %v2799 = vld [vmem:[%s2767 + $0xb8] sm:$0xf]
        %s2800 = scalar_lea.vmem %s1, 24
        %v2801 = vld [vmem:[%s2800] sm:$0xf]
        %v2834 = vunpack.c.l.b16 %v2768
        %v2835 = vunpack.c.l.b16 %v2769
        %v2836 = vunpack.c.l.b16 %v2770
        %v2837 = vunpack.c.l.b16 %v2771
        %v2838 = vunpack.c.l.b16 %v2772
        %v2839 = vunpack.c.l.b16 %v2773
        %v2840 = vunpack.c.l.b16 %v2774
        %v2841 = vunpack.c.l.b16 %v2775
        %v2842 = vunpack.c.l.b16 %v2776
        %v2843 = vunpack.c.l.b16 %v2777
        %v2844 = vunpack.c.l.b16 %v2778
        %v2845 = vunpack.c.l.b16 %v2779
        %v2846 = vunpack.c.l.b16 %v2780
        %v2847 = vunpack.c.l.b16 %v2781
        %v2848 = vunpack.c.l.b16 %v2782
        %v2849 = vunpack.c.l.b16 %v2783
        %v2850 = vunpack.c.l.b16 %v2784
        %v2851 = vunpack.c.l.b16 %v2785
        %v2852 = vunpack.c.l.b16 %v2786
        %v2853 = vunpack.c.l.b16 %v2787
        %v2854 = vunpack.c.l.b16 %v2788
        %v2855 = vunpack.c.l.b16 %v2789
        %v2856 = vunpack.c.l.b16 %v2790
        %v2857 = vunpack.c.l.b16 %v2791
        %v2858 = vunpack.c.l.b16 %v2792
        %v2859 = vunpack.c.l.b16 %v2793
        %v2860 = vunpack.c.l.b16 %v2794
        %v2861 = vunpack.c.l.b16 %v2795
        %v2862 = vunpack.c.l.b16 %v2796
        %v2863 = vunpack.c.l.b16 %v2797
        %v2864 = vunpack.c.l.b16 %v2798
        %v2865 = vunpack.c.l.b16 %v2799
        %v2866 = vpack.c.b16 %v2835, %v2834
        %v2867 = vpack.c.b16 %v2837, %v2836
        %v2868 = vpack.c.b16 %v2839, %v2838
        %v2869 = vpack.c.b16 %v2841, %v2840
        %v2870 = vpack.c.b16 %v2843, %v2842
        %v2871 = vpack.c.b16 %v2845, %v2844
        %v2872 = vpack.c.b16 %v2847, %v2846
        %v2873 = vpack.c.b16 %v2849, %v2848
        %v2874 = vpack.c.b16 %v2851, %v2850
        %v2875 = vpack.c.b16 %v2853, %v2852
        %v2876 = vpack.c.b16 %v2855, %v2854
        %v2877 = vpack.c.b16 %v2857, %v2856
        %v2878 = vpack.c.b16 %v2859, %v2858
        %v2879 = vpack.c.b16 %v2861, %v2860
        %v2880 = vpack.c.b16 %v2863, %v2862
        %v2881 = vpack.c.b16 %v2865, %v2864
        %v2883 = vsel %vm675, %v2866, 0
        %v2886 = vsel %vm675, %v2867, 0
        %v2889 = vsel %vm675, %v2868, 0
        %v2892 = vsel %vm675, %v2869, 0
        %v2895 = vsel %vm675, %v2870, 0
        %v2898 = vsel %vm675, %v2871, 0
        %v2901 = vsel %vm675, %v2872, 0
        %v2904 = vsel %vm675, %v2873, 0
        %v2907 = vsel %vm675, %v2874, 0
        %v2910 = vsel %vm675, %v2875, 0
        %v2913 = vsel %vm675, %v2876, 0
        %v2916 = vsel %vm675, %v2877, 0
        %v2919 = vsel %vm675, %v2878, 0
        %v2922 = vsel %vm675, %v2879, 0
        %v2925 = vsel %vm675, %v2880, 0
        %v2928 = vsel %vm675, %v2881, 0
        %v2931 = vsel %vm724, %v2801, 0
        %2933 = vmatpush.bf16.msra.mxu0 0
        %2934 = vmatpush.bf16.msra.mxu0 0
        %2935 = vmatpush.bf16.msra.mxu0 0
        %2936 = vmatpush.bf16.msra.mxu0 0
        %2937 = vmatpush.bf16.msra.mxu0 0
        %2938 = vmatpush.bf16.msra.mxu0 0
        %2939 = vmatpush.bf16.msra.mxu0 0
        %2940 = vmatpush.bf16.msra.mxu0 %v2931
        %2941 = vmatmul.bf16.gmra.mxu0 %v2883
        %v2942 = vpop.f32.mrf.mxu0
        %v2943 = vadd.f32 0.0, %v2942
        %v2944 = vpop.f32.mrf.mxu0
        %v2945 = vadd.f32 0.0, %v2944
        %2946 = vmatmul.bf16.gmra.mxu0 %v2886
        %v2947 = vpop.f32.mrf.mxu0
        %v2948 = vadd.f32 0.0, %v2947
        %v2949 = vpop.f32.mrf.mxu0
        %v2950 = vadd.f32 0.0, %v2949
        %2951 = vmatmul.bf16.gmra.mxu0 %v2889
        %v2952 = vpop.f32.mrf.mxu0
        %v2953 = vadd.f32 0.0, %v2952
        %v2954 = vpop.f32.mrf.mxu0
        %v2955 = vadd.f32 0.0, %v2954
        %2956 = vmatmul.bf16.gmra.mxu0 %v2892
        %v2957 = vpop.f32.mrf.mxu0
        %v2958 = vadd.f32 0.0, %v2957
        %v2959 = vpop.f32.mrf.mxu0
        %v2960 = vadd.f32 0.0, %v2959
        %2961 = vmatmul.bf16.gmra.mxu0 %v2895
        %v2962 = vpop.f32.mrf.mxu0
        %v2963 = vadd.f32 0.0, %v2962
        %v2964 = vpop.f32.mrf.mxu0
        %v2965 = vadd.f32 0.0, %v2964
        %2966 = vmatmul.bf16.gmra.mxu0 %v2898
        %v2967 = vpop.f32.mrf.mxu0
        %v2968 = vadd.f32 0.0, %v2967
        %v2969 = vpop.f32.mrf.mxu0
        %v2970 = vadd.f32 0.0, %v2969
        %2971 = vmatmul.bf16.gmra.mxu0 %v2901
        %v2972 = vpop.f32.mrf.mxu0
        %v2973 = vadd.f32 0.0, %v2972
        %v2974 = vpop.f32.mrf.mxu0
        %v2975 = vadd.f32 0.0, %v2974
        %2976 = vmatmul.bf16.gmra.mxu0 %v2904
        %v2977 = vpop.f32.mrf.mxu0
        %v2978 = vadd.f32 0.0, %v2977
        %v2979 = vpop.f32.mrf.mxu0
        %v2980 = vadd.f32 0.0, %v2979
        %2981 = vmatmul.bf16.gmra.mxu0 %v2907
        %v2982 = vpop.f32.mrf.mxu0
        %v2983 = vadd.f32 0.0, %v2982
        %v2984 = vpop.f32.mrf.mxu0
        %v2985 = vadd.f32 0.0, %v2984
        %2986 = vmatmul.bf16.gmra.mxu0 %v2910
        %v2987 = vpop.f32.mrf.mxu0
        %v2988 = vadd.f32 0.0, %v2987
        %v2989 = vpop.f32.mrf.mxu0
        %v2990 = vadd.f32 0.0, %v2989
        %2991 = vmatmul.bf16.gmra.mxu0 %v2913
        %v2992 = vpop.f32.mrf.mxu0
        %v2993 = vadd.f32 0.0, %v2992
        %v2994 = vpop.f32.mrf.mxu0
        %v2995 = vadd.f32 0.0, %v2994
        %2996 = vmatmul.bf16.gmra.mxu0 %v2916
        %v2997 = vpop.f32.mrf.mxu0
        %v2998 = vadd.f32 0.0, %v2997
        %v2999 = vpop.f32.mrf.mxu0
        %v3000 = vadd.f32 0.0, %v2999
        %3001 = vmatmul.bf16.gmra.mxu0 %v2919
        %v3002 = vpop.f32.mrf.mxu0
        %v3003 = vadd.f32 0.0, %v3002
        %v3004 = vpop.f32.mrf.mxu0
        %v3005 = vadd.f32 0.0, %v3004
        %3006 = vmatmul.bf16.gmra.mxu0 %v2922
        %v3007 = vpop.f32.mrf.mxu0
        %v3008 = vadd.f32 0.0, %v3007
        %v3009 = vpop.f32.mrf.mxu0
        %v3010 = vadd.f32 0.0, %v3009
        %3011 = vmatmul.bf16.gmra.mxu0 %v2925
        %v3012 = vpop.f32.mrf.mxu0
        %v3013 = vadd.f32 0.0, %v3012
        %v3014 = vpop.f32.mrf.mxu0
        %v3015 = vadd.f32 0.0, %v3014
        %3016 = vmatmul.bf16.gmra.mxu0 %v2928
        %v3017 = vpop.f32.mrf.mxu0
        %v3018 = vadd.f32 0.0, %v3017
        %v3019 = vpop.f32.mrf.mxu0
        %v3020 = vadd.f32 0.0, %v3019
        %3021 = vdwg.mxu0
        %v3022 = vadd.f32 %v2732, %v2943
        %v3023 = vadd.f32 %v2733, %v2945
        %v3024 = vadd.f32 %v2734, %v2948
        %v3025 = vadd.f32 %v2735, %v2950
        %v3026 = vadd.f32 %v2736, %v2953
        %v3027 = vadd.f32 %v2737, %v2955
        %v3028 = vadd.f32 %v2738, %v2958
        %v3029 = vadd.f32 %v2739, %v2960
        %v3030 = vadd.f32 %v2740, %v2963
        %v3031 = vadd.f32 %v2741, %v2965
        %v3032 = vadd.f32 %v2742, %v2968
        %v3033 = vadd.f32 %v2743, %v2970
        %v3034 = vadd.f32 %v2744, %v2973
        %v3035 = vadd.f32 %v2745, %v2975
        %v3036 = vadd.f32 %v2746, %v2978
        %v3037 = vadd.f32 %v2747, %v2980
        %v3038 = vadd.f32 %v2748, %v2983
        %v3039 = vadd.f32 %v2749, %v2985
        %v3040 = vadd.f32 %v2750, %v2988
        %v3041 = vadd.f32 %v2751, %v2990
        %v3042 = vadd.f32 %v2752, %v2993
        %v3043 = vadd.f32 %v2753, %v2995
        %v3044 = vadd.f32 %v2754, %v2998
        %v3045 = vadd.f32 %v2755, %v3000
        %v3046 = vadd.f32 %v2756, %v3003
        %v3047 = vadd.f32 %v2757, %v3005
        %v3048 = vadd.f32 %v2758, %v3008
        %v3049 = vadd.f32 %v2759, %v3010
        %v3050 = vadd.f32 %v2760, %v3013
        %v3051 = vadd.f32 %v2761, %v3015
        %v3052 = vadd.f32 %v2762, %v3018
        %v3053 = vadd.f32 %v2763, %v3020
        %v3054 = vld [vmem:[%s2767] sm:$0xf]
        %v3055 = vld [vmem:[%s2767 + $0x4] sm:$0xf]
        %v3056 = vld [vmem:[%s2767 + $0x8] sm:$0x1]
        %v3057 = vld [vmem:[%s2767 + $0xc] sm:$0xf]
        %v3058 = vld [vmem:[%s2767 + $0x10] sm:$0xf]
        %v3059 = vld [vmem:[%s2767 + $0x14] sm:$0x1]
        %v3060 = vld [vmem:[%s2767 + $0x18] sm:$0xf]
        %v3061 = vld [vmem:[%s2767 + $0x1c] sm:$0xf]
        %v3062 = vld [vmem:[%s2767 + $0x20] sm:$0x1]
        %v3063 = vld [vmem:[%s2767 + $0x24] sm:$0xf]
        %v3064 = vld [vmem:[%s2767 + $0x28] sm:$0xf]
        %v3065 = vld [vmem:[%s2767 + $0x2c] sm:$0x1]
        %v3066 = vld [vmem:[%s2767 + $0x30] sm:$0xf]
        %v3067 = vld [vmem:[%s2767 + $0x34] sm:$0xf]
        %v3068 = vld [vmem:[%s2767 + $0x38] sm:$0x1]
        %v3069 = vld [vmem:[%s2767 + $0x3c] sm:$0xf]
        %v3070 = vld [vmem:[%s2767 + $0x40] sm:$0xf]
        %v3071 = vld [vmem:[%s2767 + $0x44] sm:$0x1]
        %v3072 = vld [vmem:[%s2767 + $0x48] sm:$0xf]
        %v3073 = vld [vmem:[%s2767 + $0x4c] sm:$0xf]
        %v3074 = vld [vmem:[%s2767 + $0x50] sm:$0x1]
        %v3075 = vld [vmem:[%s2767 + $0x54] sm:$0xf]
        %v3076 = vld [vmem:[%s2767 + $0x58] sm:$0xf]
        %v3077 = vld [vmem:[%s2767 + $0x5c] sm:$0x1]
        %v3078 = vld [vmem:[%s2767 + $0x60] sm:$0xf]
        %v3079 = vld [vmem:[%s2767 + $0x64] sm:$0xf]
        %v3080 = vld [vmem:[%s2767 + $0x68] sm:$0x1]
        %v3081 = vld [vmem:[%s2767 + $0x6c] sm:$0xf]
        %v3082 = vld [vmem:[%s2767 + $0x70] sm:$0xf]
        %v3083 = vld [vmem:[%s2767 + $0x74] sm:$0x1]
        %v3084 = vld [vmem:[%s2767 + $0x78] sm:$0xf]
        %v3085 = vld [vmem:[%s2767 + $0x7c] sm:$0xf]
        %v3086 = vld [vmem:[%s2767 + $0x80] sm:$0x1]
        %v3087 = vld [vmem:[%s2767 + $0x84] sm:$0xf]
        %v3088 = vld [vmem:[%s2767 + $0x88] sm:$0xf]
        %v3089 = vld [vmem:[%s2767 + $0x8c] sm:$0x1]
        %v3090 = vld [vmem:[%s2767 + $0x90] sm:$0xf]
        %v3091 = vld [vmem:[%s2767 + $0x94] sm:$0xf]
        %v3092 = vld [vmem:[%s2767 + $0x98] sm:$0x1]
        %v3093 = vld [vmem:[%s2767 + $0x9c] sm:$0xf]
        %v3094 = vld [vmem:[%s2767 + $0xa0] sm:$0xf]
        %v3095 = vld [vmem:[%s2767 + $0xa4] sm:$0x1]
        %v3096 = vld [vmem:[%s2767 + $0xa8] sm:$0xf]
        %v3097 = vld [vmem:[%s2767 + $0xac] sm:$0xf]
        %v3098 = vld [vmem:[%s2767 + $0xb0] sm:$0x1]
        %v3099 = vld [vmem:[%s2767 + $0xb4] sm:$0xf]
        %v3100 = vld [vmem:[%s2767 + $0xb8] sm:$0xf]
        %v3101 = vld [vmem:[%s2767 + $0xbc] sm:$0x1]
        %v3103 = vshrl.u32 %v3054, 16
        %v3105 = vrot.slane %v3103, 4
        %v3106 = vshll.u32 %v3054, 16
        %v3108 = vrot.slane %v3106, 5
        %v3109 = vor.u32 %v3105, %v3108
        %v3110 = vrot.slane %v3109, 4
        %v3112 = vshll.u32 %v3055, 16
        %v3114 = vrot.slane %v3112, 5
        %v3115 = vsel %vm240, %v3110, %v3114
        %v3116 = vshrl.u32 %v3055, 16
        %v3118 = vrot.slane %v3116, 4
        %v3119 = vor.u32 %v3118, %v3114
        %v3120 = vrot.slane %v3119, 4
        %v3122 = vshll.u32 %v3056, 16
        %v3124 = vrot.slane %v3122, 5
        %v3125 = vsel %vm240, %v3120, %v3124
        %v3127 = vshrl.u32 %v3057, 16
        %v3129 = vrot.slane %v3127, 4
        %v3130 = vshll.u32 %v3057, 16
        %v3132 = vrot.slane %v3130, 5
        %v3133 = vor.u32 %v3129, %v3132
        %v3134 = vrot.slane %v3133, 4
        %v3136 = vshll.u32 %v3058, 16
        %v3138 = vrot.slane %v3136, 5
        %v3139 = vsel %vm240, %v3134, %v3138
        %v3140 = vshrl.u32 %v3058, 16
        %v3142 = vrot.slane %v3140, 4
        %v3143 = vor.u32 %v3142, %v3138
        %v3144 = vrot.slane %v3143, 4
        %v3146 = vshll.u32 %v3059, 16
        %v3148 = vrot.slane %v3146, 5
        %v3149 = vsel %vm240, %v3144, %v3148
        %v3151 = vshrl.u32 %v3060, 16
        %v3153 = vrot.slane %v3151, 4
        %v3154 = vshll.u32 %v3060, 16
        %v3156 = vrot.slane %v3154, 5
        %v3157 = vor.u32 %v3153, %v3156
        %v3158 = vrot.slane %v3157, 4
        %v3160 = vshll.u32 %v3061, 16
        %v3162 = vrot.slane %v3160, 5
        %v3163 = vsel %vm240, %v3158, %v3162
        %v3164 = vshrl.u32 %v3061, 16
        %v3166 = vrot.slane %v3164, 4
        %v3167 = vor.u32 %v3166, %v3162
        %v3168 = vrot.slane %v3167, 4
        %v3170 = vshll.u32 %v3062, 16
        %v3172 = vrot.slane %v3170, 5
        %v3173 = vsel %vm240, %v3168, %v3172
        %v3175 = vshrl.u32 %v3063, 16
        %v3177 = vrot.slane %v3175, 4
        %v3178 = vshll.u32 %v3063, 16
        %v3180 = vrot.slane %v3178, 5
        %v3181 = vor.u32 %v3177, %v3180
        %v3182 = vrot.slane %v3181, 4
        %v3184 = vshll.u32 %v3064, 16
        %v3186 = vrot.slane %v3184, 5
        %v3187 = vsel %vm240, %v3182, %v3186
        %v3188 = vshrl.u32 %v3064, 16
        %v3190 = vrot.slane %v3188, 4
        %v3191 = vor.u32 %v3190, %v3186
        %v3192 = vrot.slane %v3191, 4
        %v3194 = vshll.u32 %v3065, 16
        %v3196 = vrot.slane %v3194, 5
        %v3197 = vsel %vm240, %v3192, %v3196
        %v3199 = vshrl.u32 %v3066, 16
        %v3201 = vrot.slane %v3199, 4
        %v3202 = vshll.u32 %v3066, 16
        %v3204 = vrot.slane %v3202, 5
        %v3205 = vor.u32 %v3201, %v3204
        %v3206 = vrot.slane %v3205, 4
        %v3208 = vshll.u32 %v3067, 16
        %v3210 = vrot.slane %v3208, 5
        %v3211 = vsel %vm240, %v3206, %v3210
        %v3212 = vshrl.u32 %v3067, 16
        %v3214 = vrot.slane %v3212, 4
        %v3215 = vor.u32 %v3214, %v3210
        %v3216 = vrot.slane %v3215, 4
        %v3218 = vshll.u32 %v3068, 16
        %v3220 = vrot.slane %v3218, 5
        %v3221 = vsel %vm240, %v3216, %v3220
        %v3223 = vshrl.u32 %v3069, 16
        %v3225 = vrot.slane %v3223, 4
        %v3226 = vshll.u32 %v3069, 16
        %v3228 = vrot.slane %v3226, 5
        %v3229 = vor.u32 %v3225, %v3228
        %v3230 = vrot.slane %v3229, 4
        %v3232 = vshll.u32 %v3070, 16
        %v3234 = vrot.slane %v3232, 5
        %v3235 = vsel %vm240, %v3230, %v3234
        %v3236 = vshrl.u32 %v3070, 16
        %v3238 = vrot.slane %v3236, 4
        %v3239 = vor.u32 %v3238, %v3234
        %v3240 = vrot.slane %v3239, 4
        %v3242 = vshll.u32 %v3071, 16
        %v3244 = vrot.slane %v3242, 5
        %v3245 = vsel %vm240, %v3240, %v3244
        %v3247 = vshrl.u32 %v3072, 16
        %v3249 = vrot.slane %v3247, 4
        %v3250 = vshll.u32 %v3072, 16
        %v3252 = vrot.slane %v3250, 5
        %v3253 = vor.u32 %v3249, %v3252
        %v3254 = vrot.slane %v3253, 4
        %v3256 = vshll.u32 %v3073, 16
        %v3258 = vrot.slane %v3256, 5
        %v3259 = vsel %vm240, %v3254, %v3258
        %v3260 = vshrl.u32 %v3073, 16
        %v3262 = vrot.slane %v3260, 4
        %v3263 = vor.u32 %v3262, %v3258
        %v3264 = vrot.slane %v3263, 4
        %v3266 = vshll.u32 %v3074, 16
        %v3268 = vrot.slane %v3266, 5
        %v3269 = vsel %vm240, %v3264, %v3268
        %v3271 = vshrl.u32 %v3075, 16
        %v3273 = vrot.slane %v3271, 4
        %v3274 = vshll.u32 %v3075, 16
        %v3276 = vrot.slane %v3274, 5
        %v3277 = vor.u32 %v3273, %v3276
        %v3278 = vrot.slane %v3277, 4
        %v3280 = vshll.u32 %v3076, 16
        %v3282 = vrot.slane %v3280, 5
        %v3283 = vsel %vm240, %v3278, %v3282
        %v3284 = vshrl.u32 %v3076, 16
        %v3286 = vrot.slane %v3284, 4
        %v3287 = vor.u32 %v3286, %v3282
        %v3288 = vrot.slane %v3287, 4
        %v3290 = vshll.u32 %v3077, 16
        %v3292 = vrot.slane %v3290, 5
        %v3293 = vsel %vm240, %v3288, %v3292
        %v3295 = vshrl.u32 %v3078, 16
        %v3297 = vrot.slane %v3295, 4
        %v3298 = vshll.u32 %v3078, 16
        %v3300 = vrot.slane %v3298, 5
        %v3301 = vor.u32 %v3297, %v3300
        %v3302 = vrot.slane %v3301, 4
        %v3304 = vshll.u32 %v3079, 16
        %v3306 = vrot.slane %v3304, 5
        %v3307 = vsel %vm240, %v3302, %v3306
        %v3308 = vshrl.u32 %v3079, 16
        %v3310 = vrot.slane %v3308, 4
        %v3311 = vor.u32 %v3310, %v3306
        %v3312 = vrot.slane %v3311, 4
        %v3314 = vshll.u32 %v3080, 16
        %v3316 = vrot.slane %v3314, 5
        %v3317 = vsel %vm240, %v3312, %v3316
        %v3319 = vshrl.u32 %v3081, 16
        %v3321 = vrot.slane %v3319, 4
        %v3322 = vshll.u32 %v3081, 16
        %v3324 = vrot.slane %v3322, 5
        %v3325 = vor.u32 %v3321, %v3324
        %v3326 = vrot.slane %v3325, 4
        %v3328 = vshll.u32 %v3082, 16
        %v3330 = vrot.slane %v3328, 5
        %v3331 = vsel %vm240, %v3326, %v3330
        %v3332 = vshrl.u32 %v3082, 16
        %v3334 = vrot.slane %v3332, 4
        %v3335 = vor.u32 %v3334, %v3330
        %v3336 = vrot.slane %v3335, 4
        %v3338 = vshll.u32 %v3083, 16
        %v3340 = vrot.slane %v3338, 5
        %v3341 = vsel %vm240, %v3336, %v3340
        %v3343 = vshrl.u32 %v3084, 16
        %v3345 = vrot.slane %v3343, 4
        %v3346 = vshll.u32 %v3084, 16
        %v3348 = vrot.slane %v3346, 5
        %v3349 = vor.u32 %v3345, %v3348
        %v3350 = vrot.slane %v3349, 4
        %v3352 = vshll.u32 %v3085, 16
        %v3354 = vrot.slane %v3352, 5
        %v3355 = vsel %vm240, %v3350, %v3354
        %v3356 = vshrl.u32 %v3085, 16
        %v3358 = vrot.slane %v3356, 4
        %v3359 = vor.u32 %v3358, %v3354
        %v3360 = vrot.slane %v3359, 4
        %v3362 = vshll.u32 %v3086, 16
        %v3364 = vrot.slane %v3362, 5
        %v3365 = vsel %vm240, %v3360, %v3364
        %v3367 = vshrl.u32 %v3087, 16
        %v3369 = vrot.slane %v3367, 4
        %v3370 = vshll.u32 %v3087, 16
        %v3372 = vrot.slane %v3370, 5
        %v3373 = vor.u32 %v3369, %v3372
        %v3374 = vrot.slane %v3373, 4
        %v3376 = vshll.u32 %v3088, 16
        %v3378 = vrot.slane %v3376, 5
        %v3379 = vsel %vm240, %v3374, %v3378
        %v3380 = vshrl.u32 %v3088, 16
        %v3382 = vrot.slane %v3380, 4
        %v3383 = vor.u32 %v3382, %v3378
        %v3384 = vrot.slane %v3383, 4
        %v3386 = vshll.u32 %v3089, 16
        %v3388 = vrot.slane %v3386, 5
        %v3389 = vsel %vm240, %v3384, %v3388
        %v3391 = vshrl.u32 %v3090, 16
        %v3393 = vrot.slane %v3391, 4
        %v3394 = vshll.u32 %v3090, 16
        %v3396 = vrot.slane %v3394, 5
        %v3397 = vor.u32 %v3393, %v3396
        %v3398 = vrot.slane %v3397, 4
        %v3400 = vshll.u32 %v3091, 16
        %v3402 = vrot.slane %v3400, 5
        %v3403 = vsel %vm240, %v3398, %v3402
        %v3404 = vshrl.u32 %v3091, 16
        %v3406 = vrot.slane %v3404, 4
        %v3407 = vor.u32 %v3406, %v3402
        %v3408 = vrot.slane %v3407, 4
        %v3410 = vshll.u32 %v3092, 16
        %v3412 = vrot.slane %v3410, 5
        %v3413 = vsel %vm240, %v3408, %v3412
        %v3415 = vshrl.u32 %v3093, 16
        %v3417 = vrot.slane %v3415, 4
        %v3418 = vshll.u32 %v3093, 16
        %v3420 = vrot.slane %v3418, 5
        %v3421 = vor.u32 %v3417, %v3420
        %v3422 = vrot.slane %v3421, 4
        %v3424 = vshll.u32 %v3094, 16
        %v3426 = vrot.slane %v3424, 5
        %v3427 = vsel %vm240, %v3422, %v3426
        %v3428 = vshrl.u32 %v3094, 16
        %v3430 = vrot.slane %v3428, 4
        %v3431 = vor.u32 %v3430, %v3426
        %v3432 = vrot.slane %v3431, 4
        %v3434 = vshll.u32 %v3095, 16
        %v3436 = vrot.slane %v3434, 5
        %v3437 = vsel %vm240, %v3432, %v3436
        %v3439 = vshrl.u32 %v3096, 16
        %v3441 = vrot.slane %v3439, 4
        %v3442 = vshll.u32 %v3096, 16
        %v3444 = vrot.slane %v3442, 5
        %v3445 = vor.u32 %v3441, %v3444
        %v3446 = vrot.slane %v3445, 4
        %v3448 = vshll.u32 %v3097, 16
        %v3450 = vrot.slane %v3448, 5
        %v3451 = vsel %vm240, %v3446, %v3450
        %v3452 = vshrl.u32 %v3097, 16
        %v3454 = vrot.slane %v3452, 4
        %v3455 = vor.u32 %v3454, %v3450
        %v3456 = vrot.slane %v3455, 4
        %v3458 = vshll.u32 %v3098, 16
        %v3460 = vrot.slane %v3458, 5
        %v3461 = vsel %vm240, %v3456, %v3460
        %v3463 = vshrl.u32 %v3099, 16
        %v3465 = vrot.slane %v3463, 4
        %v3466 = vshll.u32 %v3099, 16
        %v3468 = vrot.slane %v3466, 5
        %v3469 = vor.u32 %v3465, %v3468
        %v3470 = vrot.slane %v3469, 4
        %v3472 = vshll.u32 %v3100, 16
        %v3474 = vrot.slane %v3472, 5
        %v3475 = vsel %vm240, %v3470, %v3474
        %v3476 = vshrl.u32 %v3100, 16
        %v3478 = vrot.slane %v3476, 4
        %v3479 = vor.u32 %v3478, %v3474
        %v3480 = vrot.slane %v3479, 4
        %v3482 = vshll.u32 %v3101, 16
        %v3484 = vrot.slane %v3482, 5
        %v3485 = vsel %vm240, %v3480, %v3484
        %s3486 = scalar_lea.vmem %s1, 28
        %v3487 = vld [vmem:[%s3486] sm:$0xf]
        %v3488 = vunpack.c.l.b16 %v3115
        %v3489 = vunpack.c.l.b16 %v3125
        %v3490 = vunpack.c.l.b16 %v3139
        %v3491 = vunpack.c.l.b16 %v3149
        %v3492 = vunpack.c.l.b16 %v3163
        %v3493 = vunpack.c.l.b16 %v3173
        %v3494 = vunpack.c.l.b16 %v3187
        %v3495 = vunpack.c.l.b16 %v3197
        %v3496 = vunpack.c.l.b16 %v3211
        %v3497 = vunpack.c.l.b16 %v3221
        %v3498 = vunpack.c.l.b16 %v3235
        %v3499 = vunpack.c.l.b16 %v3245
        %v3500 = vunpack.c.l.b16 %v3259
        %v3501 = vunpack.c.l.b16 %v3269
        %v3502 = vunpack.c.l.b16 %v3283
        %v3503 = vunpack.c.l.b16 %v3293
        %v3504 = vunpack.c.l.b16 %v3307
        %v3505 = vunpack.c.l.b16 %v3317
        %v3506 = vunpack.c.l.b16 %v3331
        %v3507 = vunpack.c.l.b16 %v3341
        %v3508 = vunpack.c.l.b16 %v3355
        %v3509 = vunpack.c.l.b16 %v3365
        %v3510 = vunpack.c.l.b16 %v3379
        %v3511 = vunpack.c.l.b16 %v3389
        %v3512 = vunpack.c.l.b16 %v3403
        %v3513 = vunpack.c.l.b16 %v3413
        %v3514 = vunpack.c.l.b16 %v3427
        %v3515 = vunpack.c.l.b16 %v3437
        %v3516 = vunpack.c.l.b16 %v3451
        %v3517 = vunpack.c.l.b16 %v3461
        %v3518 = vunpack.c.l.b16 %v3475
        %v3519 = vunpack.c.l.b16 %v3485
        %v3520 = vpack.c.b16 %v3489, %v3488
        %v3521 = vpack.c.b16 %v3491, %v3490
        %v3522 = vpack.c.b16 %v3493, %v3492
        %v3523 = vpack.c.b16 %v3495, %v3494
        %v3524 = vpack.c.b16 %v3497, %v3496
        %v3525 = vpack.c.b16 %v3499, %v3498
        %v3526 = vpack.c.b16 %v3501, %v3500
        %v3527 = vpack.c.b16 %v3503, %v3502
        %v3528 = vpack.c.b16 %v3505, %v3504
        %v3529 = vpack.c.b16 %v3507, %v3506
        %v3530 = vpack.c.b16 %v3509, %v3508
        %v3531 = vpack.c.b16 %v3511, %v3510
        %v3532 = vpack.c.b16 %v3513, %v3512
        %v3533 = vpack.c.b16 %v3515, %v3514
        %v3534 = vpack.c.b16 %v3517, %v3516
        %v3535 = vpack.c.b16 %v3519, %v3518
        %v3537 = vsel %vm675, %v3520, 0
        %v3540 = vsel %vm675, %v3521, 0
        %v3543 = vsel %vm675, %v3522, 0
        %v3546 = vsel %vm675, %v3523, 0
        %v3549 = vsel %vm675, %v3524, 0
        %v3552 = vsel %vm675, %v3525, 0
        %v3555 = vsel %vm675, %v3526, 0
        %v3558 = vsel %vm675, %v3527, 0
        %v3561 = vsel %vm675, %v3528, 0
        %v3564 = vsel %vm675, %v3529, 0
        %v3567 = vsel %vm675, %v3530, 0
        %v3570 = vsel %vm675, %v3531, 0
        %v3573 = vsel %vm675, %v3532, 0
        %v3576 = vsel %vm675, %v3533, 0
        %v3579 = vsel %vm675, %v3534, 0
        %v3582 = vsel %vm675, %v3535, 0
        %v3585 = vsel %vm724, %v3487, 0
        %3587 = vmatpush.bf16.msra.mxu0 0
        %3588 = vmatpush.bf16.msra.mxu0 0
        %3589 = vmatpush.bf16.msra.mxu0 0
        %3590 = vmatpush.bf16.msra.mxu0 0
        %3591 = vmatpush.bf16.msra.mxu0 0
        %3592 = vmatpush.bf16.msra.mxu0 0
        %3593 = vmatpush.bf16.msra.mxu0 0
        %3594 = vmatpush.bf16.msra.mxu0 %v3585
        %3595 = vmatmul.bf16.gmra.mxu0 %v3537
        %v3596 = vpop.f32.mrf.mxu0
        %v3597 = vadd.f32 0.0, %v3596
        %v3598 = vpop.f32.mrf.mxu0
        %v3599 = vadd.f32 0.0, %v3598
        %3600 = vmatmul.bf16.gmra.mxu0 %v3540
        %v3601 = vpop.f32.mrf.mxu0
        %v3602 = vadd.f32 0.0, %v3601
        %v3603 = vpop.f32.mrf.mxu0
        %v3604 = vadd.f32 0.0, %v3603
        %3605 = vmatmul.bf16.gmra.mxu0 %v3543
        %v3606 = vpop.f32.mrf.mxu0
        %v3607 = vadd.f32 0.0, %v3606
        %v3608 = vpop.f32.mrf.mxu0
        %v3609 = vadd.f32 0.0, %v3608
        %3610 = vmatmul.bf16.gmra.mxu0 %v3546
        %v3611 = vpop.f32.mrf.mxu0
        %v3612 = vadd.f32 0.0, %v3611
        %v3613 = vpop.f32.mrf.mxu0
        %v3614 = vadd.f32 0.0, %v3613
        %3615 = vmatmul.bf16.gmra.mxu0 %v3549
        %v3616 = vpop.f32.mrf.mxu0
        %v3617 = vadd.f32 0.0, %v3616
        %v3618 = vpop.f32.mrf.mxu0
        %v3619 = vadd.f32 0.0, %v3618
        %3620 = vmatmul.bf16.gmra.mxu0 %v3552
        %v3621 = vpop.f32.mrf.mxu0
        %v3622 = vadd.f32 0.0, %v3621
        %v3623 = vpop.f32.mrf.mxu0
        %v3624 = vadd.f32 0.0, %v3623
        %3625 = vmatmul.bf16.gmra.mxu0 %v3555
        %v3626 = vpop.f32.mrf.mxu0
        %v3627 = vadd.f32 0.0, %v3626
        %v3628 = vpop.f32.mrf.mxu0
        %v3629 = vadd.f32 0.0, %v3628
        %3630 = vmatmul.bf16.gmra.mxu0 %v3558
        %v3631 = vpop.f32.mrf.mxu0
        %v3632 = vadd.f32 0.0, %v3631
        %v3633 = vpop.f32.mrf.mxu0
        %v3634 = vadd.f32 0.0, %v3633
        %3635 = vmatmul.bf16.gmra.mxu0 %v3561
        %v3636 = vpop.f32.mrf.mxu0
        %v3637 = vadd.f32 0.0, %v3636
        %v3638 = vpop.f32.mrf.mxu0
        %v3639 = vadd.f32 0.0, %v3638
        %3640 = vmatmul.bf16.gmra.mxu0 %v3564
        %v3641 = vpop.f32.mrf.mxu0
        %v3642 = vadd.f32 0.0, %v3641
        %v3643 = vpop.f32.mrf.mxu0
        %v3644 = vadd.f32 0.0, %v3643
        %3645 = vmatmul.bf16.gmra.mxu0 %v3567
        %v3646 = vpop.f32.mrf.mxu0
        %v3647 = vadd.f32 0.0, %v3646
        %v3648 = vpop.f32.mrf.mxu0
        %v3649 = vadd.f32 0.0, %v3648
        %3650 = vmatmul.bf16.gmra.mxu0 %v3570
        %v3651 = vpop.f32.mrf.mxu0
        %v3652 = vadd.f32 0.0, %v3651
        %v3653 = vpop.f32.mrf.mxu0
        %v3654 = vadd.f32 0.0, %v3653
        %3655 = vmatmul.bf16.gmra.mxu0 %v3573
        %v3656 = vpop.f32.mrf.mxu0
        %v3657 = vadd.f32 0.0, %v3656
        %v3658 = vpop.f32.mrf.mxu0
        %v3659 = vadd.f32 0.0, %v3658
        %3660 = vmatmul.bf16.gmra.mxu0 %v3576
        %v3661 = vpop.f32.mrf.mxu0
        %v3662 = vadd.f32 0.0, %v3661
        %v3663 = vpop.f32.mrf.mxu0
        %v3664 = vadd.f32 0.0, %v3663
        %3665 = vmatmul.bf16.gmra.mxu0 %v3579
        %v3666 = vpop.f32.mrf.mxu0
        %v3667 = vadd.f32 0.0, %v3666
        %v3668 = vpop.f32.mrf.mxu0
        %v3669 = vadd.f32 0.0, %v3668
        %3670 = vmatmul.bf16.gmra.mxu0 %v3582
        %v3671 = vpop.f32.mrf.mxu0
        %v3672 = vadd.f32 0.0, %v3671
        %v3673 = vpop.f32.mrf.mxu0
        %v3674 = vadd.f32 0.0, %v3673
        %3675 = vdwg.mxu0
        %v3676 = vadd.f32 %v3022, %v3597
        %v3677 = vadd.f32 %v3023, %v3599
        %v3678 = vadd.f32 %v3024, %v3602
        %v3679 = vadd.f32 %v3025, %v3604
        %v3680 = vadd.f32 %v3026, %v3607
        %v3681 = vadd.f32 %v3027, %v3609
        %v3682 = vadd.f32 %v3028, %v3612
        %v3683 = vadd.f32 %v3029, %v3614
        %v3684 = vadd.f32 %v3030, %v3617
        %v3685 = vadd.f32 %v3031, %v3619
        %v3686 = vadd.f32 %v3032, %v3622
        %v3687 = vadd.f32 %v3033, %v3624
        %v3688 = vadd.f32 %v3034, %v3627
        %v3689 = vadd.f32 %v3035, %v3629
        %v3690 = vadd.f32 %v3036, %v3632
        %v3691 = vadd.f32 %v3037, %v3634
        %v3692 = vadd.f32 %v3038, %v3637
        %v3693 = vadd.f32 %v3039, %v3639
        %v3694 = vadd.f32 %v3040, %v3642
        %v3695 = vadd.f32 %v3041, %v3644
        %v3696 = vadd.f32 %v3042, %v3647
        %v3697 = vadd.f32 %v3043, %v3649
        %v3698 = vadd.f32 %v3044, %v3652
        %v3699 = vadd.f32 %v3045, %v3654
        %v3700 = vadd.f32 %v3046, %v3657
        %v3701 = vadd.f32 %v3047, %v3659
        %v3702 = vadd.f32 %v3048, %v3662
        %v3703 = vadd.f32 %v3049, %v3664
        %v3704 = vadd.f32 %v3050, %v3667
        %v3705 = vadd.f32 %v3051, %v3669
        %v3706 = vadd.f32 %v3052, %v3672
        %v3707 = vadd.f32 %v3053, %v3674
        %v3708 = vld [vmem:[%s2767] sm:$0xe]
        %v3709 = vld [vmem:[%s2767 + $0xc] sm:$0xe]
        %v3710 = vld [vmem:[%s2767 + $0x18] sm:$0xe]
        %v3711 = vld [vmem:[%s2767 + $0x24] sm:$0xe]
        %v3712 = vld [vmem:[%s2767 + $0x30] sm:$0xe]
        %v3713 = vld [vmem:[%s2767 + $0x3c] sm:$0xe]
        %v3714 = vld [vmem:[%s2767 + $0x48] sm:$0xe]
        %v3715 = vld [vmem:[%s2767 + $0x54] sm:$0xe]
        %v3716 = vld [vmem:[%s2767 + $0x60] sm:$0xe]
        %v3717 = vld [vmem:[%s2767 + $0x6c] sm:$0xe]
        %v3718 = vld [vmem:[%s2767 + $0x78] sm:$0xe]
        %v3719 = vld [vmem:[%s2767 + $0x84] sm:$0xe]
        %v3720 = vld [vmem:[%s2767 + $0x90] sm:$0xe]
        %v3721 = vld [vmem:[%s2767 + $0x9c] sm:$0xe]
        %v3722 = vld [vmem:[%s2767 + $0xa8] sm:$0xe]
        %v3723 = vld [vmem:[%s2767 + $0xb4] sm:$0xe]
        %v3772 = vrot.slane %v3708, 5
        %v3773 = vrot.slane %v3772, 4
        %v3774 = vrot.slane %v3055, 5
        %v3775 = vsel %vm1087, %v3773, %v3774
        %v3776 = vrot.slane %v3774, 4
        %v3777 = vrot.slane %v3056, 5
        %v3778 = vsel %vm1087, %v3776, %v3777
        %v3779 = vrot.slane %v3709, 5
        %v3780 = vrot.slane %v3779, 4
        %v3781 = vrot.slane %v3058, 5
        %v3782 = vsel %vm1087, %v3780, %v3781
        %v3783 = vrot.slane %v3781, 4
        %v3784 = vrot.slane %v3059, 5
        %v3785 = vsel %vm1087, %v3783, %v3784
        %v3786 = vrot.slane %v3710, 5
        %v3787 = vrot.slane %v3786, 4
        %v3788 = vrot.slane %v3061, 5
        %v3789 = vsel %vm1087, %v3787, %v3788
        %v3790 = vrot.slane %v3788, 4
        %v3791 = vrot.slane %v3062, 5
        %v3792 = vsel %vm1087, %v3790, %v3791
        %v3793 = vrot.slane %v3711, 5
        %v3794 = vrot.slane %v3793, 4
        %v3795 = vrot.slane %v3064, 5
        %v3796 = vsel %vm1087, %v3794, %v3795
        %v3797 = vrot.slane %v3795, 4
        %v3798 = vrot.slane %v3065, 5
        %v3799 = vsel %vm1087, %v3797, %v3798
        %v3800 = vrot.slane %v3712, 5
        %v3801 = vrot.slane %v3800, 4
        %v3802 = vrot.slane %v3067, 5
        %v3803 = vsel %vm1087, %v3801, %v3802
        %v3804 = vrot.slane %v3802, 4
        %v3805 = vrot.slane %v3068, 5
        %v3806 = vsel %vm1087, %v3804, %v3805
        %v3807 = vrot.slane %v3713, 5
        %v3808 = vrot.slane %v3807, 4
        %v3809 = vrot.slane %v3070, 5
        %v3810 = vsel %vm1087, %v3808, %v3809
        %v3811 = vrot.slane %v3809, 4
        %v3812 = vrot.slane %v3071, 5
        %v3813 = vsel %vm1087, %v3811, %v3812
        %v3814 = vrot.slane %v3714, 5
        %v3815 = vrot.slane %v3814, 4
        %v3816 = vrot.slane %v3073, 5
        %v3817 = vsel %vm1087, %v3815, %v3816
        %v3818 = vrot.slane %v3816, 4
        %v3819 = vrot.slane %v3074, 5
        %v3820 = vsel %vm1087, %v3818, %v3819
        %v3821 = vrot.slane %v3715, 5
        %v3822 = vrot.slane %v3821, 4
        %v3823 = vrot.slane %v3076, 5
        %v3824 = vsel %vm1087, %v3822, %v3823
        %v3825 = vrot.slane %v3823, 4
        %v3826 = vrot.slane %v3077, 5
        %v3827 = vsel %vm1087, %v3825, %v3826
        %v3828 = vrot.slane %v3716, 5
        %v3829 = vrot.slane %v3828, 4
        %v3830 = vrot.slane %v3079, 5
        %v3831 = vsel %vm1087, %v3829, %v3830
        %v3832 = vrot.slane %v3830, 4
        %v3833 = vrot.slane %v3080, 5
        %v3834 = vsel %vm1087, %v3832, %v3833
        %v3835 = vrot.slane %v3717, 5
        %v3836 = vrot.slane %v3835, 4
        %v3837 = vrot.slane %v3082, 5
        %v3838 = vsel %vm1087, %v3836, %v3837
        %v3839 = vrot.slane %v3837, 4
        %v3840 = vrot.slane %v3083, 5
        %v3841 = vsel %vm1087, %v3839, %v3840
        %v3842 = vrot.slane %v3718, 5
        %v3843 = vrot.slane %v3842, 4
        %v3844 = vrot.slane %v3085, 5
        %v3845 = vsel %vm1087, %v3843, %v3844
        %v3846 = vrot.slane %v3844, 4
        %v3847 = vrot.slane %v3086, 5
        %v3848 = vsel %vm1087, %v3846, %v3847
        %v3849 = vrot.slane %v3719, 5
        %v3850 = vrot.slane %v3849, 4
        %v3851 = vrot.slane %v3088, 5
        %v3852 = vsel %vm1087, %v3850, %v3851
        %v3853 = vrot.slane %v3851, 4
        %v3854 = vrot.slane %v3089, 5
        %v3855 = vsel %vm1087, %v3853, %v3854
        %v3856 = vrot.slane %v3720, 5
        %v3857 = vrot.slane %v3856, 4
        %v3858 = vrot.slane %v3091, 5
        %v3859 = vsel %vm1087, %v3857, %v3858
        %v3860 = vrot.slane %v3858, 4
        %v3861 = vrot.slane %v3092, 5
        %v3862 = vsel %vm1087, %v3860, %v3861
        %v3863 = vrot.slane %v3721, 5
        %v3864 = vrot.slane %v3863, 4
        %v3865 = vrot.slane %v3094, 5
        %v3866 = vsel %vm1087, %v3864, %v3865
        %v3867 = vrot.slane %v3865, 4
        %v3868 = vrot.slane %v3095, 5
        %v3869 = vsel %vm1087, %v3867, %v3868
        %v3870 = vrot.slane %v3722, 5
        %v3871 = vrot.slane %v3870, 4
        %v3872 = vrot.slane %v3097, 5
        %v3873 = vsel %vm1087, %v3871, %v3872
        %v3874 = vrot.slane %v3872, 4
        %v3875 = vrot.slane %v3098, 5
        %v3876 = vsel %vm1087, %v3874, %v3875
        %v3877 = vrot.slane %v3723, 5
        %v3878 = vrot.slane %v3877, 4
        %v3879 = vrot.slane %v3100, 5
        %v3880 = vsel %vm1087, %v3878, %v3879
        %v3881 = vrot.slane %v3879, 4
        %v3882 = vrot.slane %v3101, 5
        %v3883 = vsel %vm1087, %v3881, %v3882
        %s3884 = scalar_lea.vmem %s1, 32
        %v3885 = vld [vmem:[%s3884] sm:$0xf]
        %v3886 = vunpack.c.l.b16 %v3775
        %v3887 = vunpack.c.l.b16 %v3778
        %v3888 = vunpack.c.l.b16 %v3782
        %v3889 = vunpack.c.l.b16 %v3785
        %v3890 = vunpack.c.l.b16 %v3789
        %v3891 = vunpack.c.l.b16 %v3792
        %v3892 = vunpack.c.l.b16 %v3796
        %v3893 = vunpack.c.l.b16 %v3799
        %v3894 = vunpack.c.l.b16 %v3803
        %v3895 = vunpack.c.l.b16 %v3806
        %v3896 = vunpack.c.l.b16 %v3810
        %v3897 = vunpack.c.l.b16 %v3813
        %v3898 = vunpack.c.l.b16 %v3817
        %v3899 = vunpack.c.l.b16 %v3820
        %v3900 = vunpack.c.l.b16 %v3824
        %v3901 = vunpack.c.l.b16 %v3827
        %v3902 = vunpack.c.l.b16 %v3831
        %v3903 = vunpack.c.l.b16 %v3834
        %v3904 = vunpack.c.l.b16 %v3838
        %v3905 = vunpack.c.l.b16 %v3841
        %v3906 = vunpack.c.l.b16 %v3845
        %v3907 = vunpack.c.l.b16 %v3848
        %v3908 = vunpack.c.l.b16 %v3852
        %v3909 = vunpack.c.l.b16 %v3855
        %v3910 = vunpack.c.l.b16 %v3859
        %v3911 = vunpack.c.l.b16 %v3862
        %v3912 = vunpack.c.l.b16 %v3866
        %v3913 = vunpack.c.l.b16 %v3869
        %v3914 = vunpack.c.l.b16 %v3873
        %v3915 = vunpack.c.l.b16 %v3876
        %v3916 = vunpack.c.l.b16 %v3880
        %v3917 = vunpack.c.l.b16 %v3883
        %v3918 = vpack.c.b16 %v3887, %v3886
        %v3919 = vpack.c.b16 %v3889, %v3888
        %v3920 = vpack.c.b16 %v3891, %v3890
        %v3921 = vpack.c.b16 %v3893, %v3892
        %v3922 = vpack.c.b16 %v3895, %v3894
        %v3923 = vpack.c.b16 %v3897, %v3896
        %v3924 = vpack.c.b16 %v3899, %v3898
        %v3925 = vpack.c.b16 %v3901, %v3900
        %v3926 = vpack.c.b16 %v3903, %v3902
        %v3927 = vpack.c.b16 %v3905, %v3904
        %v3928 = vpack.c.b16 %v3907, %v3906
        %v3929 = vpack.c.b16 %v3909, %v3908
        %v3930 = vpack.c.b16 %v3911, %v3910
        %v3931 = vpack.c.b16 %v3913, %v3912
        %v3932 = vpack.c.b16 %v3915, %v3914
        %v3933 = vpack.c.b16 %v3917, %v3916
        %v3935 = vsel %vm675, %v3918, 0
        %v3938 = vsel %vm675, %v3919, 0
        %v3941 = vsel %vm675, %v3920, 0
        %v3944 = vsel %vm675, %v3921, 0
        %v3947 = vsel %vm675, %v3922, 0
        %v3950 = vsel %vm675, %v3923, 0
        %v3953 = vsel %vm675, %v3924, 0
        %v3956 = vsel %vm675, %v3925, 0
        %v3959 = vsel %vm675, %v3926, 0
        %v3962 = vsel %vm675, %v3927, 0
        %v3965 = vsel %vm675, %v3928, 0
        %v3968 = vsel %vm675, %v3929, 0
        %v3971 = vsel %vm675, %v3930, 0
        %v3974 = vsel %vm675, %v3931, 0
        %v3977 = vsel %vm675, %v3932, 0
        %v3980 = vsel %vm675, %v3933, 0
        %v3983 = vsel %vm724, %v3885, 0
        %3985 = vmatpush.bf16.msra.mxu0 0
        %3986 = vmatpush.bf16.msra.mxu0 0
        %3987 = vmatpush.bf16.msra.mxu0 0
        %3988 = vmatpush.bf16.msra.mxu0 0
        %3989 = vmatpush.bf16.msra.mxu0 0
        %3990 = vmatpush.bf16.msra.mxu0 0
        %3991 = vmatpush.bf16.msra.mxu0 0
        %3992 = vmatpush.bf16.msra.mxu0 %v3983
        %3993 = vmatmul.bf16.gmra.mxu0 %v3935
        %v3994 = vpop.f32.mrf.mxu0
        %v3995 = vadd.f32 0.0, %v3994
        %v3996 = vpop.f32.mrf.mxu0
        %v3997 = vadd.f32 0.0, %v3996
        %3998 = vmatmul.bf16.gmra.mxu0 %v3938
        %v3999 = vpop.f32.mrf.mxu0
        %v4000 = vadd.f32 0.0, %v3999
        %v4001 = vpop.f32.mrf.mxu0
        %v4002 = vadd.f32 0.0, %v4001
        %4003 = vmatmul.bf16.gmra.mxu0 %v3941
        %v4004 = vpop.f32.mrf.mxu0
        %v4005 = vadd.f32 0.0, %v4004
        %v4006 = vpop.f32.mrf.mxu0
        %v4007 = vadd.f32 0.0, %v4006
        %4008 = vmatmul.bf16.gmra.mxu0 %v3944
        %v4009 = vpop.f32.mrf.mxu0
        %v4010 = vadd.f32 0.0, %v4009
        %v4011 = vpop.f32.mrf.mxu0
        %v4012 = vadd.f32 0.0, %v4011
        %4013 = vmatmul.bf16.gmra.mxu0 %v3947
        %v4014 = vpop.f32.mrf.mxu0
        %v4015 = vadd.f32 0.0, %v4014
        %v4016 = vpop.f32.mrf.mxu0
        %v4017 = vadd.f32 0.0, %v4016
        %4018 = vmatmul.bf16.gmra.mxu0 %v3950
        %v4019 = vpop.f32.mrf.mxu0
        %v4020 = vadd.f32 0.0, %v4019
        %v4021 = vpop.f32.mrf.mxu0
        %v4022 = vadd.f32 0.0, %v4021
        %4023 = vmatmul.bf16.gmra.mxu0 %v3953
        %v4024 = vpop.f32.mrf.mxu0
        %v4025 = vadd.f32 0.0, %v4024
        %v4026 = vpop.f32.mrf.mxu0
        %v4027 = vadd.f32 0.0, %v4026
        %4028 = vmatmul.bf16.gmra.mxu0 %v3956
        %v4029 = vpop.f32.mrf.mxu0
        %v4030 = vadd.f32 0.0, %v4029
        %v4031 = vpop.f32.mrf.mxu0
        %v4032 = vadd.f32 0.0, %v4031
        %4033 = vmatmul.bf16.gmra.mxu0 %v3959
        %v4034 = vpop.f32.mrf.mxu0
        %v4035 = vadd.f32 0.0, %v4034
        %v4036 = vpop.f32.mrf.mxu0
        %v4037 = vadd.f32 0.0, %v4036
        %4038 = vmatmul.bf16.gmra.mxu0 %v3962
        %v4039 = vpop.f32.mrf.mxu0
        %v4040 = vadd.f32 0.0, %v4039
        %v4041 = vpop.f32.mrf.mxu0
        %v4042 = vadd.f32 0.0, %v4041
        %4043 = vmatmul.bf16.gmra.mxu0 %v3965
        %v4044 = vpop.f32.mrf.mxu0
        %v4045 = vadd.f32 0.0, %v4044
        %v4046 = vpop.f32.mrf.mxu0
        %v4047 = vadd.f32 0.0, %v4046
        %4048 = vmatmul.bf16.gmra.mxu0 %v3968
        %v4049 = vpop.f32.mrf.mxu0
        %v4050 = vadd.f32 0.0, %v4049
        %v4051 = vpop.f32.mrf.mxu0
        %v4052 = vadd.f32 0.0, %v4051
        %4053 = vmatmul.bf16.gmra.mxu0 %v3971
        %v4054 = vpop.f32.mrf.mxu0
        %v4055 = vadd.f32 0.0, %v4054
        %v4056 = vpop.f32.mrf.mxu0
        %v4057 = vadd.f32 0.0, %v4056
        %4058 = vmatmul.bf16.gmra.mxu0 %v3974
        %v4059 = vpop.f32.mrf.mxu0
        %v4060 = vadd.f32 0.0, %v4059
        %v4061 = vpop.f32.mrf.mxu0
        %v4062 = vadd.f32 0.0, %v4061
        %4063 = vmatmul.bf16.gmra.mxu0 %v3977
        %v4064 = vpop.f32.mrf.mxu0
        %v4065 = vadd.f32 0.0, %v4064
        %v4066 = vpop.f32.mrf.mxu0
        %v4067 = vadd.f32 0.0, %v4066
        %4068 = vmatmul.bf16.gmra.mxu0 %v3980
        %v4069 = vpop.f32.mrf.mxu0
        %v4070 = vadd.f32 0.0, %v4069
        %v4071 = vpop.f32.mrf.mxu0
        %v4072 = vadd.f32 0.0, %v4071
        %4073 = vdwg.mxu0
        %v4074 = vadd.f32 %v3676, %v3995
        %v4075 = vadd.f32 %v3677, %v3997
        %v4076 = vadd.f32 %v3678, %v4000
        %v4077 = vadd.f32 %v3679, %v4002
        %v4078 = vadd.f32 %v3680, %v4005
        %v4079 = vadd.f32 %v3681, %v4007
        %v4080 = vadd.f32 %v3682, %v4010
        %v4081 = vadd.f32 %v3683, %v4012
        %v4082 = vadd.f32 %v3684, %v4015
        %v4083 = vadd.f32 %v3685, %v4017
        %v4084 = vadd.f32 %v3686, %v4020
        %v4085 = vadd.f32 %v3687, %v4022
        %v4086 = vadd.f32 %v3688, %v4025
        %v4087 = vadd.f32 %v3689, %v4027
        %v4088 = vadd.f32 %v3690, %v4030
        %v4089 = vadd.f32 %v3691, %v4032
        %v4090 = vadd.f32 %v3692, %v4035
        %v4091 = vadd.f32 %v3693, %v4037
        %v4092 = vadd.f32 %v3694, %v4040
        %v4093 = vadd.f32 %v3695, %v4042
        %v4094 = vadd.f32 %v3696, %v4045
        %v4095 = vadd.f32 %v3697, %v4047
        %v4096 = vadd.f32 %v3698, %v4050
        %v4097 = vadd.f32 %v3699, %v4052
        %v4098 = vadd.f32 %v3700, %v4055
        %v4099 = vadd.f32 %v3701, %v4057
        %v4100 = vadd.f32 %v3702, %v4060
        %v4101 = vadd.f32 %v3703, %v4062
        %v4102 = vadd.f32 %v3704, %v4065
        %v4103 = vadd.f32 %v3705, %v4067
        %v4104 = vadd.f32 %v3706, %v4070
        %v4105 = vadd.f32 %v3707, %v4072
        %v4106 = vld [vmem:[%s2] sm:$0x1]
        %v4108 = vperm.slane %v4106, 0
        %v4110 = vadd.f32 %v4074, %v4108
        %v4111 = vadd.f32 %v4075, %v4108
        %v4112 = vadd.f32 %v4076, %v4108
        %v4113 = vadd.f32 %v4077, %v4108
        %v4114 = vadd.f32 %v4078, %v4108
        %v4115 = vadd.f32 %v4079, %v4108
        %v4116 = vadd.f32 %v4080, %v4108
        %v4117 = vadd.f32 %v4081, %v4108
        %v4118 = vadd.f32 %v4082, %v4108
        %v4119 = vadd.f32 %v4083, %v4108
        %v4120 = vadd.f32 %v4084, %v4108
        %v4121 = vadd.f32 %v4085, %v4108
        %v4122 = vadd.f32 %v4086, %v4108
        %v4123 = vadd.f32 %v4087, %v4108
        %v4124 = vadd.f32 %v4088, %v4108
        %v4125 = vadd.f32 %v4089, %v4108
        %v4126 = vadd.f32 %v4090, %v4108
        %v4127 = vadd.f32 %v4091, %v4108
        %v4128 = vadd.f32 %v4092, %v4108
        %v4129 = vadd.f32 %v4093, %v4108
        %v4130 = vadd.f32 %v4094, %v4108
        %v4131 = vadd.f32 %v4095, %v4108
        %v4132 = vadd.f32 %v4096, %v4108
        %v4133 = vadd.f32 %v4097, %v4108
        %v4134 = vadd.f32 %v4098, %v4108
        %v4135 = vadd.f32 %v4099, %v4108
        %v4136 = vadd.f32 %v4100, %v4108
        %v4137 = vadd.f32 %v4101, %v4108
        %v4138 = vadd.f32 %v4102, %v4108
        %v4139 = vadd.f32 %v4103, %v4108
        %v4140 = vadd.f32 %v4104, %v4108
        %v4141 = vadd.f32 %v4105, %v4108
        %vm4142 = vcmp.gt.f32.partialorder %v4110, 0.0
        %vm4143 = vcmp.gt.f32.partialorder %v4111, 0.0
        %vm4144 = vcmp.gt.f32.partialorder %v4112, 0.0
        %vm4145 = vcmp.gt.f32.partialorder %v4113, 0.0
        %vm4146 = vcmp.gt.f32.partialorder %v4114, 0.0
        %vm4147 = vcmp.gt.f32.partialorder %v4115, 0.0
        %vm4148 = vcmp.gt.f32.partialorder %v4116, 0.0
        %vm4149 = vcmp.gt.f32.partialorder %v4117, 0.0
        %vm4150 = vcmp.gt.f32.partialorder %v4118, 0.0
        %vm4151 = vcmp.gt.f32.partialorder %v4119, 0.0
        %vm4152 = vcmp.gt.f32.partialorder %v4120, 0.0
        %vm4153 = vcmp.gt.f32.partialorder %v4121, 0.0
        %vm4154 = vcmp.gt.f32.partialorder %v4122, 0.0
        %vm4155 = vcmp.gt.f32.partialorder %v4123, 0.0
        %vm4156 = vcmp.gt.f32.partialorder %v4124, 0.0
        %vm4157 = vcmp.gt.f32.partialorder %v4125, 0.0
        %vm4158 = vcmp.gt.f32.partialorder %v4126, 0.0
        %vm4159 = vcmp.gt.f32.partialorder %v4127, 0.0
        %vm4160 = vcmp.gt.f32.partialorder %v4128, 0.0
        %vm4161 = vcmp.gt.f32.partialorder %v4129, 0.0
        %vm4162 = vcmp.gt.f32.partialorder %v4130, 0.0
        %vm4163 = vcmp.gt.f32.partialorder %v4131, 0.0
        %vm4164 = vcmp.gt.f32.partialorder %v4132, 0.0
        %vm4165 = vcmp.gt.f32.partialorder %v4133, 0.0
        %vm4166 = vcmp.gt.f32.partialorder %v4134, 0.0
        %vm4167 = vcmp.gt.f32.partialorder %v4135, 0.0
        %vm4168 = vcmp.gt.f32.partialorder %v4136, 0.0
        %vm4169 = vcmp.gt.f32.partialorder %v4137, 0.0
        %vm4170 = vcmp.gt.f32.partialorder %v4138, 0.0
        %vm4171 = vcmp.gt.f32.partialorder %v4139, 0.0
        %vm4172 = vcmp.gt.f32.partialorder %v4140, 0.0
        %vm4173 = vcmp.gt.f32.partialorder %v4141, 0.0
        %v4174 = vmul.f32 %v4110, 0.2
        %v4175 = vmul.f32 %v4111, 0.2
        %v4176 = vmul.f32 %v4112, 0.2
        %v4177 = vmul.f32 %v4113, 0.2
        %v4178 = vmul.f32 %v4114, 0.2
        %v4179 = vmul.f32 %v4115, 0.2
        %v4180 = vmul.f32 %v4116, 0.2
        %v4181 = vmul.f32 %v4117, 0.2
        %v4182 = vmul.f32 %v4118, 0.2
        %v4183 = vmul.f32 %v4119, 0.2
        %v4184 = vmul.f32 %v4120, 0.2
        %v4185 = vmul.f32 %v4121, 0.2
        %v4186 = vmul.f32 %v4122, 0.2
        %v4187 = vmul.f32 %v4123, 0.2
        %v4188 = vmul.f32 %v4124, 0.2
        %v4189 = vmul.f32 %v4125, 0.2
        %v4190 = vmul.f32 %v4126, 0.2
        %v4191 = vmul.f32 %v4127, 0.2
        %v4192 = vmul.f32 %v4128, 0.2
        %v4193 = vmul.f32 %v4129, 0.2
        %v4194 = vmul.f32 %v4130, 0.2
        %v4195 = vmul.f32 %v4131, 0.2
        %v4196 = vmul.f32 %v4132, 0.2
        %v4197 = vmul.f32 %v4133, 0.2
        %v4198 = vmul.f32 %v4134, 0.2
        %v4199 = vmul.f32 %v4135, 0.2
        %v4200 = vmul.f32 %v4136, 0.2
        %v4201 = vmul.f32 %v4137, 0.2
        %v4202 = vmul.f32 %v4138, 0.2
        %v4203 = vmul.f32 %v4139, 0.2
        %v4204 = vmul.f32 %v4140, 0.2
        %v4205 = vmul.f32 %v4141, 0.2
        %v4206 = vsel %vm4142, %v4110, %v4174
        %v4207 = vsel %vm4143, %v4111, %v4175
        %v4208 = vsel %vm4144, %v4112, %v4176
        %v4209 = vsel %vm4145, %v4113, %v4177
        %v4210 = vsel %vm4146, %v4114, %v4178
        %v4211 = vsel %vm4147, %v4115, %v4179
        %v4212 = vsel %vm4148, %v4116, %v4180
        %v4213 = vsel %vm4149, %v4117, %v4181
        %v4214 = vsel %vm4150, %v4118, %v4182
        %v4215 = vsel %vm4151, %v4119, %v4183
        %v4216 = vsel %vm4152, %v4120, %v4184
        %v4217 = vsel %vm4153, %v4121, %v4185
        %v4218 = vsel %vm4154, %v4122, %v4186
        %v4219 = vsel %vm4155, %v4123, %v4187
        %v4220 = vsel %vm4156, %v4124, %v4188
        %v4221 = vsel %vm4157, %v4125, %v4189
        %v4222 = vsel %vm4158, %v4126, %v4190
        %v4223 = vsel %vm4159, %v4127, %v4191
        %v4224 = vsel %vm4160, %v4128, %v4192
        %v4225 = vsel %vm4161, %v4129, %v4193
        %v4226 = vsel %vm4162, %v4130, %v4194
        %v4227 = vsel %vm4163, %v4131, %v4195
        %v4228 = vsel %vm4164, %v4132, %v4196
        %v4229 = vsel %vm4165, %v4133, %v4197
        %v4230 = vsel %vm4166, %v4134, %v4198
        %v4231 = vsel %vm4167, %v4135, %v4199
        %v4232 = vsel %vm4168, %v4136, %v4200
        %v4233 = vsel %vm4169, %v4137, %v4201
        %v4234 = vsel %vm4170, %v4138, %v4202
        %v4235 = vsel %vm4171, %v4139, %v4203
        %v4236 = vsel %vm4172, %v4140, %v4204
        %v4237 = vsel %vm4173, %v4141, %v4205
        %v4238 = vpack.c.bf16 %v4206, %v4206
        %v4239 = vpack.c.bf16 %v4207, %v4207
        %v4240 = vpack.c.bf16 %v4208, %v4208
        %v4241 = vpack.c.bf16 %v4209, %v4209
        %v4242 = vpack.c.bf16 %v4210, %v4210
        %v4243 = vpack.c.bf16 %v4211, %v4211
        %v4244 = vpack.c.bf16 %v4212, %v4212
        %v4245 = vpack.c.bf16 %v4213, %v4213
        %v4246 = vpack.c.bf16 %v4214, %v4214
        %v4247 = vpack.c.bf16 %v4215, %v4215
        %v4248 = vpack.c.bf16 %v4216, %v4216
        %v4249 = vpack.c.bf16 %v4217, %v4217
        %v4250 = vpack.c.bf16 %v4218, %v4218
        %v4251 = vpack.c.bf16 %v4219, %v4219
        %v4252 = vpack.c.bf16 %v4220, %v4220
        %v4253 = vpack.c.bf16 %v4221, %v4221
        %v4254 = vpack.c.bf16 %v4222, %v4222
        %v4255 = vpack.c.bf16 %v4223, %v4223
        %v4256 = vpack.c.bf16 %v4224, %v4224
        %v4257 = vpack.c.bf16 %v4225, %v4225
        %v4258 = vpack.c.bf16 %v4226, %v4226
        %v4259 = vpack.c.bf16 %v4227, %v4227
        %v4260 = vpack.c.bf16 %v4228, %v4228
        %v4261 = vpack.c.bf16 %v4229, %v4229
        %v4262 = vpack.c.bf16 %v4230, %v4230
        %v4263 = vpack.c.bf16 %v4231, %v4231
        %v4264 = vpack.c.bf16 %v4232, %v4232
        %v4265 = vpack.c.bf16 %v4233, %v4233
        %v4266 = vpack.c.bf16 %v4234, %v4234
        %v4267 = vpack.c.bf16 %v4235, %v4235
        %v4268 = vpack.c.bf16 %v4236, %v4236
        %v4269 = vpack.c.bf16 %v4237, %v4237
        %vm4270 = vcmask 519168
        %4271 = vst.msk [vmem:[%s177] sm:$0xf] %vm4270, %v4238
        %4272 = vst.msk [vmem:[%s177 + $0x4] sm:$0xf] %vm4270, %v4239
        %4273 = vst.msk [vmem:[%s177 + $0x8] sm:$0xf] %vm4270, %v4240
        %4274 = vst.msk [vmem:[%s177 + $0xc] sm:$0xf] %vm4270, %v4241
        %4275 = vst.msk [vmem:[%s177 + $0x10] sm:$0xf] %vm4270, %v4242
        %4276 = vst.msk [vmem:[%s177 + $0x14] sm:$0xf] %vm4270, %v4243
        %4277 = vst.msk [vmem:[%s177 + $0x18] sm:$0xf] %vm4270, %v4244
        %4278 = vst.msk [vmem:[%s177 + $0x1c] sm:$0xf] %vm4270, %v4245
        %4279 = vst.msk [vmem:[%s177 + $0x20] sm:$0xf] %vm4270, %v4246
        %4280 = vst.msk [vmem:[%s177 + $0x24] sm:$0xf] %vm4270, %v4247
        %4281 = vst.msk [vmem:[%s177 + $0x28] sm:$0xf] %vm4270, %v4248
        %4282 = vst.msk [vmem:[%s177 + $0x2c] sm:$0xf] %vm4270, %v4249
        %4283 = vst.msk [vmem:[%s177 + $0x30] sm:$0xf] %vm4270, %v4250
        %4284 = vst.msk [vmem:[%s177 + $0x34] sm:$0xf] %vm4270, %v4251
        %4285 = vst.msk [vmem:[%s177 + $0x38] sm:$0xf] %vm4270, %v4252
        %4286 = vst.msk [vmem:[%s177 + $0x3c] sm:$0xf] %vm4270, %v4253
        %4287 = vst.msk [vmem:[%s177 + $0x40] sm:$0xf] %vm4270, %v4254
        %4288 = vst.msk [vmem:[%s177 + $0x44] sm:$0xf] %vm4270, %v4255
        %4289 = vst.msk [vmem:[%s177 + $0x48] sm:$0xf] %vm4270, %v4256
        %4290 = vst.msk [vmem:[%s177 + $0x4c] sm:$0xf] %vm4270, %v4257
        %4291 = vst.msk [vmem:[%s177 + $0x50] sm:$0xf] %vm4270, %v4258
        %4292 = vst.msk [vmem:[%s177 + $0x54] sm:$0xf] %vm4270, %v4259
        %4293 = vst.msk [vmem:[%s177 + $0x58] sm:$0xf] %vm4270, %v4260
        %4294 = vst.msk [vmem:[%s177 + $0x5c] sm:$0xf] %vm4270, %v4261
        %4295 = vst.msk [vmem:[%s177 + $0x60] sm:$0xf] %vm4270, %v4262
        %4296 = vst.msk [vmem:[%s177 + $0x64] sm:$0xf] %vm4270, %v4263
        %4297 = vst.msk [vmem:[%s177 + $0x68] sm:$0xf] %vm4270, %v4264
        %4298 = vst.msk [vmem:[%s177 + $0x6c] sm:$0xf] %vm4270, %v4265
        %4299 = vst.msk [vmem:[%s177 + $0x70] sm:$0xf] %vm4270, %v4266
        %4300 = vst.msk [vmem:[%s177 + $0x74] sm:$0xf] %vm4270, %v4267
        %4301 = vst.msk [vmem:[%s177 + $0x78] sm:$0xf] %vm4270, %v4268
        %4302 = vst.msk [vmem:[%s177 + $0x7c] sm:$0xf] %vm4270, %v4269
        %s4303 = sand.u32 %s107, 1
        %s4304 = scalar_lea.sflag [#allocation3], %s4303
        %s4305 = sand.u32 %s107, 1
        %s4306 = smul.addr %s4305, 128
        %s4307 = scalar_lea.vmem [#allocation2], %s4306
        // Predicated region
        $region33: #{tpu_custom_call.1} parent=31 // pred_check
          %p4308 = pneg %p117
        $region34: #{tpu_custom_call.1} parent=31 // pred_check_branch
          %4310 = sbr.rel (%p4308) target = $region36
        $region35: #{tpu_custom_call.1} parent=31 // pred_region
          %s4311 = smul.u32 16, %s22
          %4313 = vsyncadd %s4304, 0
          %s4314 = smul.addr %s4311, 2
          %s4315 = smul.addr %s21, 32
          %s4316 = sadd.s32 %s4314, %s4315
          %s4317 = smul.addr %s4316, 4
          %s4318 = scalar_lea.hbm %s3, %s4317
          %s4319 = sshll.u32 %s4307, 4
          %s4320 = int_to_ptr.vmem [resolvable:$true] %s4319
          %s4321 = sshll.u32 %s4318, 4
          %s4322 = int_to_ptr.hbm [resolvable:$true] %s4321
          %4327 = dma.vmem_to_hbm [thread:$0]  %s4320, 2048, %s4322, %s4304, 64, 64, 4
        $region36: #{tpu_custom_call.1} parent=31 // pred_fallthru
          _
      $region32: #{tpu_custom_call.1} parent=5 // pred_fallthru
        _
      %p4328 = scmp.le.s32.totalorder 2, %s12
      // Predicated region
      $region37: #{tpu_custom_call.1} parent=5 // pred_check
        %p4329 = pneg %p4328
      $region38: #{tpu_custom_call.1} parent=5 // pred_check_branch
        %4331 = sbr.rel (%p4329) target = $region40
      $region39: #{tpu_custom_call.1} parent=5 // pred_region
        %s4332 = ssub.s32 %s12, 2
        // Predicated region
        $region41: #{tpu_custom_call.1} parent=39 // pred_check
          %p4333 = pneg %p123
        $region42: #{tpu_custom_call.1} parent=39 // pred_check_branch
          %4335 = sbr.rel (%p4333) target = $region44
        $region43: #{tpu_custom_call.1} parent=39 // pred_region
          %s4336 = sand.u32 %s108, 1
          %s4337 = scalar_lea.sflag [#allocation3], %s4336
          %s4338 = sand.u32 %s108, 1
          %s4339 = smul.addr %s4338, 128
          %s4340 = scalar_lea.vmem [#allocation2], %s4339
          %4342 = dma.done %s4337, 2048
        $region44: #{tpu_custom_call.1} parent=39 // pred_fallthru
          _
      $region40: #{tpu_custom_call.1} parent=5 // pred_fallthru
        _
    $region6: #{tpu_custom_call.1} parent=1 // loop_footer
      %s16 = sadd.s32 1, %s12
    $region7: #{tpu_custom_call.1} parent=1 // loop_footer_branch
      %11 = sbr.rel target = $region3
    $region8: #{tpu_custom_call.1} parent=1 // loop_exit
      _
    %4343 = vsyncpa [#allocation3], 1
    %s4344 = scalar_lea.sflag [#allocation3], 1
    %4345 = vsyncpa %s4344, 1

</llo_original>
